<compile_context>
chip_gen: v5e
topology: v5e:2x2
jax: 0.10.0
libtpu: 0.0.40
codegen_flags: <defaults>
</compile_context>

<pallas_src>
import functools
import math

import jax
import jax.numpy as jnp
from jax import lax
from jax.experimental import pallas as pl
from jax.experimental.pallas import tpu as pltpu


def _round_up(v: int, m: int) -> int:
    return ((v + m - 1) // m) * m


def _cross_attn_kernel(x_ref, y_ref, yt_ref,
                       wq_ref, bq_ref,
                       wk_ref, bk_ref,
                       wv_ref, bv_ref,
                       wo_ref, bo_ref,
                       o_ref,
                       kt_scr, v_scr, attn_scr,
                       *, n_heads: int, lkv: int, lkv_pad: int, scale: float):
    qi = pl.program_id(1)
    cdtype = x_ref.dtype                       # compute dtype (f32 / bf16)
    d_embed = wq_ref.shape[0]
    d_head = d_embed // n_heads
    tile_q = x_ref.shape[1]

    # ---- Fused K/V projections: once per batch element (first q-tile), cached
    # in lane-dense VMEM scratch and reused by every q-tile of this batch. ----
    @pl.when(qi == 0)
    def _():
        # K is emitted directly in transposed layout: K^T = Wk @ y^T, where Wk
        # is the nn.Linear (out, in) matrix — no in-kernel transpose, and the
        # per-head score matmul below is a plain (tile_q,d_head)@(d_head,lkv_pad).
        kt = jnp.dot(wk_ref[...], yt_ref[0],
                     preferred_element_type=jnp.float32) + bk_ref[...]
        kt_scr[...] = kt.astype(cdtype)                       # (d_embed, lkv_pad)
        v = jnp.dot(y_ref[0], wv_ref[...],
                    preferred_element_type=jnp.float32) + bv_ref[...]
        v_scr[...] = v.astype(cdtype)                         # (lkv_pad, d_embed)

    # ---- Fused Q projection for this q-tile; fold 1/sqrt(d_head) into q. ----
    x = x_ref[0]                                              # (tile_q, d_embed)
    q = (jnp.dot(x, wq_ref[...], preferred_element_type=jnp.float32)
         + bq_ref[...]) * scale
    q = q.astype(cdtype)

    # Additive key-padding bias, hoisted out of the head loop (one iota/select
    # per q-tile instead of per head).
    if lkv_pad != lkv:  # static
        kv_idx = lax.broadcasted_iota(jnp.int32, (tile_q, lkv_pad), 1)
        mask_bias = jnp.where(kv_idx < lkv, 0.0, -1e30).astype(jnp.float32)
    else:
        mask_bias = None

    # ---- Per-head attention; fully unrolled so head h's softmax (EUP/XLU) can
    # overlap head h+1's matmuls (MXU). Slices of q / K^T / V are static. ----
    for h in range(n_heads):
        lo, hi = h * d_head, (h + 1) * d_head
        q_h = q[:, lo:hi]                                     # (tile_q, d_head)
        kt_h = kt_scr[lo:hi, :]                               # (d_head, lkv_pad)
        v_h = v_scr[:, lo:hi]                                 # (lkv_pad, d_head)

        s = jnp.dot(q_h, kt_h, preferred_element_type=jnp.float32)
        if mask_bias is not None:
            s = s + mask_bias

        # Numerically stable softmax (f32); normalization deferred past PV.
        s_max = jnp.max(s, axis=-1, keepdims=True)
        p = jnp.exp(s - s_max)
        denom = jnp.sum(p, axis=-1, keepdims=True)

        o_h = jnp.dot(p.astype(cdtype), v_h,
                      preferred_element_type=jnp.float32)     # (tile_q, d_head)
        o_h = o_h * pl.reciprocal(denom, approx=True)
        attn_scr[:, lo:hi] = o_h.astype(cdtype)

    # ---- Single fused output projection. ----
    out = jnp.dot(attn_scr[...], wo_ref[...],
                  preferred_element_type=jnp.float32) + bo_ref[...]
    o_ref[0] = out.astype(o_ref.dtype)


def cross_attention(x, y, params, *, n_heads: int, tile_q: int | None = None):
    """x: (B, Lq, d_embed), y: (B, Lkv, d_cross) -> (B, Lq, d_embed)."""
    B, Lq, d_embed = x.shape
    _, Lkv, d_cross = y.shape
    assert d_embed % n_heads == 0
    d_head = d_embed // n_heads
    cdtype = x.dtype

    # Per-generation VMEM budget (v5e/v6e 128 MiB, v7x 64 MiB).
    try:
        vmem_cap = int(pltpu.get_tpu_info().vmem_capacity_bytes)
    except Exception:  # pragma: no cover - conservative fallback
        vmem_cap = 64 * 1024 * 1024
    vmem_limit = int(vmem_cap * 0.85)
    if tile_q is None:
        # Bigger q tiles amortize per-step overhead on 128 MiB chips (v5e/v6e);
        # keep 256 on 64 MiB v7x.
        tile_q = 512 if vmem_cap >= (96 << 20) else 256

    # Lane-dense Lkv (pad to 128 multiple, masked in-kernel); q tile multiple of 8.
    lkv_pad = _round_up(Lkv, 128)
    tile_q = min(tile_q, _round_up(Lq, 8))
    lq_pad = _round_up(Lq, tile_q)
    num_q_tiles = lq_pad // tile_q

    if lq_pad != Lq:
        x = jnp.pad(x, ((0, 0), (0, lq_pad - Lq), (0, 0)))
    if lkv_pad != Lkv:
        y = jnp.pad(y, ((0, 0), (0, lkv_pad - Lkv), (0, 0)))
    # y^T lets the kernel emit K directly in (d_embed, lkv_pad) layout (no
    # in-kernel transposes); y itself is still needed for the V projection.
    yt = jnp.swapaxes(y, 1, 2)                                # (B, d_cross, lkv_pad)

    # Fused lane-dense weight layouts. wk stays in nn.Linear (out, in) layout
    # because K is produced transposed.
    # TODO(synk): cache this relayout (or accept pre-laid-out weights) so it is
    # not re-emitted per forward call when weights are static.
    wq = params["wq"].T.astype(cdtype)                        # (d_embed, d_embed)
    wk = params["wk"].astype(cdtype)                          # (d_embed, d_cross)
    wv = params["wv"].T.astype(cdtype)                        # (d_cross, d_embed)
    wo = params["wo"].T.astype(cdtype)                        # (d_embed, d_embed)
    bq = params["bq"].reshape(1, d_embed).astype(cdtype)
    bk = params["bk"].reshape(d_embed, 1).astype(cdtype)      # column: bias of K^T
    bv = params["bv"].reshape(1, d_embed).astype(cdtype)
    bo = params["bo"].reshape(1, d_embed).astype(cdtype)

    kernel = functools.partial(
        _cross_attn_kernel, n_heads=n_heads, lkv=Lkv, lkv_pad=lkv_pad,
        scale=1.0 / math.sqrt(d_head))

    flops = 2 * B * (lq_pad * d_embed * d_embed               # Q proj
                     + 2 * lkv_pad * d_cross * d_embed        # K/V proj
                     + 2 * lq_pad * lkv_pad * d_embed         # scores + PV
                     + lq_pad * d_embed * d_embed)            # out proj
    bytes_accessed = sum(int(a.size) * a.dtype.itemsize
                         for a in (x, y, yt, wq, wk, wv, wo, bq, bk, bv, bo))
    bytes_accessed += B * lq_pad * d_embed * jnp.dtype(cdtype).itemsize
    cost = pl.CostEstimate(flops=flops,
                           transcendentals=B * n_heads * lq_pad * lkv_pad,
                           bytes_accessed=bytes_accessed)

    def build_call(single_buffer_weights: bool):
        # Grid-invariant weights/biases never change block index, so a single
        # VMEM buffer suffices (halves their VMEM footprint). x/y/out keep the
        # default double-buffering so their DMAs overlap compute.
        if single_buffer_weights:
            def wspec(arr):
                return pl.BlockSpec(arr.shape,
                                    lambda b, qi, _nd=arr.ndim: (0,) * _nd,
                                    pipeline_mode=pl.Buffered(1))
        else:
            def wspec(arr):
                return pl.BlockSpec(arr.shape,
                                    lambda b, qi, _nd=arr.ndim: (0,) * _nd)

        return pl.pallas_call(
            kernel,
            out_shape=jax.ShapeDtypeStruct((B, lq_pad, d_embed), cdtype),
            grid_spec=pltpu.PrefetchScalarGridSpec(
                num_scalar_prefetch=0,
                grid=(B, num_q_tiles),
                in_specs=[
                    pl.BlockSpec((1, tile_q, d_embed), lambda b, qi: (b, qi, 0)),   # x q-tile
                    pl.BlockSpec((1, lkv_pad, d_cross), lambda b, qi: (b, 0, 0)),   # y   (V proj)
                    pl.BlockSpec((1, d_cross, lkv_pad), lambda b, qi: (b, 0, 0)),   # y^T (K proj)
                    wspec(wq), wspec(bq),
                    wspec(wk), wspec(bk),
                    wspec(wv), wspec(bv),
                    wspec(wo), wspec(bo),
                ],
                out_specs=pl.BlockSpec((1, tile_q, d_embed), lambda b, qi: (b, qi, 0)),
                scratch_shapes=[
                    pltpu.VMEM((d_embed, lkv_pad), cdtype),   # K^T cache (lane-dense)
                    pltpu.VMEM((lkv_pad, d_embed), cdtype),   # V cache (fused)
                    pltpu.VMEM((tile_q, d_embed), cdtype),    # per-head outputs
                ],
            ),
            compiler_params=pltpu.CompilerParams(
                # q-tile axis must stay "arbitrary": the K/V scratch cache written
                # at qi == 0 is reused by later q-tiles of the same batch element.
                dimension_semantics=("parallel", "arbitrary"),
                vmem_limit_bytes=vmem_limit,
            ),
            cost_estimate=cost,
        )

    args = (x, y, yt, wq, bq, wk, bk, wv, bv, wo, bo)
    try:
        out = build_call(True)(*args)
    except Exception:
        # pl.Buffered(1) is a pure VMEM optimization; fall back to default
        # double-buffering if this JAX build rejects it.
        out = build_call(False)(*args)

    if lq_pad != Lq:
        out = out[:, :Lq, :]
    return out


def _reference(x, y, params, *, n_heads: int):
    """Pure-JAX reference mirroring the PyTorch forward."""
    B, Lq, d_embed = x.shape
    d_head = d_embed // n_heads
    q = x @ params["wq"].T + params["bq"]
    k = y @ params["wk"].T + params["bk"]
    v = y @ params["wv"].T + params["bv"]
    q = q.reshape(B, Lq, n_heads, d_head).transpose(0, 2, 1, 3)
    k = k.reshape(B, -1, n_heads, d_head).transpose(0, 2, 1, 3)
    v = v.reshape(B, -1, n_heads, d_head).transpose(0, 2, 1, 3)
    w = (q @ jnp.swapaxes(k, -1, -2)) / math.sqrt(d_head)
    w = jax.nn.softmax(w, axis=-1)
    out = w @ v
    out = out.transpose(0, 2, 1, 3).reshape(B, Lq, d_embed)
    return out @ params["wo"].T + params["bo"]


if __name__ == "__main__":
    B, Lq, Lkv = 2, 8, 8
    n_heads, d_embed, d_cross = 4, 32, 16

    key = jax.random.PRNGKey(0)
    keys = jax.random.split(key, 10)

    params = {
        "wq": jax.random.normal(keys[0], (d_embed, d_embed), jnp.float32) * 0.1,
        "bq": jax.random.normal(keys[1], (d_embed,), jnp.float32) * 0.1,
        "wk": jax.random.normal(keys[2], (d_embed, d_cross), jnp.float32) * 0.1,
        "bk": jax.random.normal(keys[3], (d_embed,), jnp.float32) * 0.1,
        "wv": jax.random.normal(keys[4], (d_embed, d_cross), jnp.float32) * 0.1,
        "bv": jax.random.normal(keys[5], (d_embed,), jnp.float32) * 0.1,
        "wo": jax.random.normal(keys[6], (d_embed, d_embed), jnp.float32) * 0.1,
        "bo": jax.random.normal(keys[7], (d_embed,), jnp.float32) * 0.1,
    }

    x = jax.random.normal(keys[8], (B, Lq, d_embed), jnp.float32)
    y = jax.random.normal(keys[9], (B, Lkv, d_cross), jnp.float32)

    out = jax.block_until_ready(cross_attention(x, y, params, n_heads=n_heads))
    ref = _reference(x, y, params, n_heads=n_heads)
    assert out.shape == (B, Lq, d_embed)
    assert jnp.allclose(out, ref, atol=2e-2, rtol=2e-2), "mismatch vs reference"

    # Second check: multiple q tiles, exercising the cached-K/V (qi > 0) path.
    Lq2 = 24
    x2 = jax.random.normal(jax.random.PRNGKey(1), (B, Lq2, d_embed), jnp.float32)
    out2 = jax.block_until_ready(
        cross_attention(x2, y, params, n_heads=n_heads, tile_q=8))
    ref2 = _reference(x2, y, params, n_heads=n_heads)
    assert out2.shape == (B, Lq2, d_embed)
    assert jnp.allclose(out2, ref2, atol=2e-2, rtol=2e-2), "mismatch vs reference (tiled q)"

    print("KERNEL_OK")
</pallas_src>

<mosaic_0001>
module attributes {stable_mosaic.version = 11 : i64} {
  func.func @_cross_attn_kernel(%arg0: i32, %arg1: i32, %arg2: memref<1x8x32xf32, #tpu.memory_space<vmem>>, %arg3: memref<1x128x16xf32, #tpu.memory_space<vmem>>, %arg4: memref<1x16x128xf32, #tpu.memory_space<vmem>>, %arg5: memref<32x32xf32, #tpu.memory_space<vmem>>, %arg6: memref<1x32xf32, #tpu.memory_space<vmem>>, %arg7: memref<32x16xf32, #tpu.memory_space<vmem>>, %arg8: memref<32x1xf32, #tpu.memory_space<vmem>>, %arg9: memref<16x32xf32, #tpu.memory_space<vmem>>, %arg10: memref<1x32xf32, #tpu.memory_space<vmem>>, %arg11: memref<32x32xf32, #tpu.memory_space<vmem>>, %arg12: memref<1x32xf32, #tpu.memory_space<vmem>>, %arg13: memref<1x8x32xf32, #tpu.memory_space<vmem>>, %arg14: memref<32x128xf32, #tpu.memory_space<vmem>>, %arg15: memref<128x32xf32, #tpu.memory_space<vmem>>, %arg16: memref<8x32xf32, #tpu.memory_space<vmem>>) attributes {dimension_semantics = [#tpu.dimension_semantics<parallel>, #tpu.dimension_semantics<arbitrary>], iteration_bounds = array<i64: 2, 1>, scalar_prefetch = 0 : i64, scratch_operands = 3 : i64, tpu.core_type = #tpu.core_type<tc>, window_params = [{transform_indices = @transform_0, window_bounds = array<i64: 1, 8, 32>}, {transform_indices = @transform_1, window_bounds = array<i64: 1, 128, 16>}, {transform_indices = @transform_2, window_bounds = array<i64: 1, 16, 128>}, {pipeline_mode = #tpu.pipeline_mode<synchronous>, transform_indices = @transform_3, window_bounds = array<i64: 32, 32>}, {pipeline_mode = #tpu.pipeline_mode<synchronous>, transform_indices = @transform_4, window_bounds = array<i64: 1, 32>}, {pipeline_mode = #tpu.pipeline_mode<synchronous>, transform_indices = @transform_5, window_bounds = array<i64: 32, 16>}, {pipeline_mode = #tpu.pipeline_mode<synchronous>, transform_indices = @transform_6, window_bounds = array<i64: 32, 1>}, {pipeline_mode = #tpu.pipeline_mode<synchronous>, transform_indices = @transform_7, window_bounds = array<i64: 16, 32>}, {pipeline_mode = #tpu.pipeline_mode<synchronous>, transform_indices = @transform_8, window_bounds = array<i64: 1, 32>}, {pipeline_mode = #tpu.pipeline_mode<synchronous>, transform_indices = @transform_9, window_bounds = array<i64: 32, 32>}, {pipeline_mode = #tpu.pipeline_mode<synchronous>, transform_indices = @transform_10, window_bounds = array<i64: 1, 32>}, {transform_indices = @transform_11, window_bounds = array<i64: 1, 8, 32>}]} {
    %c0_i32 = arith.constant 0 : i32
    %0 = arith.cmpi eq, %arg1, %c0_i32 : i32
    %1 = arith.extui %0 : i1 to i32
    %c0_i32_0 = arith.constant 0 : i32
    %2 = arith.cmpi ne, %1, %c0_i32_0 : i32
    scf.if %2 {
      %c0_57 = arith.constant 0 : index
      %c0_58 = arith.constant 0 : index
      %95 = vector.load %arg7[%c0_57, %c0_58] : memref<32x16xf32, #tpu.memory_space<vmem>>, vector<32x16xf32>
      %c0_59 = arith.constant 0 : index
      %c0_60 = arith.constant 0 : index
      %c0_61 = arith.constant 0 : index
      %96 = vector.load %arg4[%c0_59, %c0_60, %c0_61] : memref<1x16x128xf32, #tpu.memory_space<vmem>>, vector<1x16x128xf32>
      %97 = vector.shape_cast %96 : vector<1x16x128xf32> to vector<16x128xf32>
      %cst_62 = arith.constant dense<0.000000e+00> : vector<32x128xf32>
      %98 = tpu.matmul %95, %97, %cst_62 {dimension_numbers = #tpu.dot_dimension_numbers<[1], [0], [0], [1], [0, 0, 1, 1], [], []>} : vector<32x16xf32>, vector<16x128xf32>, vector<32x128xf32> -> vector<32x128xf32>
      %c0_63 = arith.constant 0 : index
      %c0_64 = arith.constant 0 : index
      %99 = vector.load %arg8[%c0_63, %c0_64] : memref<32x1xf32, #tpu.memory_space<vmem>>, vector<32x1xf32>
      %100 = vector.broadcast %99 : vector<32x1xf32> to vector<32x128xf32>
      %101 = arith.addf %98, %100 : vector<32x128xf32>
      %c0_65 = arith.constant 0 : index
      %c0_66 = arith.constant 0 : index
      %102 = vector.load %arg14[%c0_65, %c0_66] : memref<32x128xf32, #tpu.memory_space<vmem>>, vector<32x128xf32>
      tpu.vector_store %arg14[%c0_65, %c0_66], %101 {strides = array<i32>} : memref<32x128xf32, #tpu.memory_space<vmem>>, vector<32x128xf32>,
      %c0_67 = arith.constant 0 : index
      %c0_68 = arith.constant 0 : index
      %c0_69 = arith.constant 0 : index
      %103 = vector.load %arg3[%c0_67, %c0_68, %c0_69] : memref<1x128x16xf32, #tpu.memory_space<vmem>>, vector<1x128x16xf32>
      %104 = vector.shape_cast %103 : vector<1x128x16xf32> to vector<128x16xf32>
      %c0_70 = arith.constant 0 : index
      %c0_71 = arith.constant 0 : index
      %105 = vector.load %arg9[%c0_70, %c0_71] : memref<16x32xf32, #tpu.memory_space<vmem>>, vector<16x32xf32>
      %cst_72 = arith.constant dense<0.000000e+00> : vector<128x32xf32>
      %106 = tpu.matmul %104, %105, %cst_72 {dimension_numbers = #tpu.dot_dimension_numbers<[1], [0], [0], [1], [0, 0, 1, 1], [], []>} : vector<128x16xf32>, vector<16x32xf32>, vector<128x32xf32> -> vector<128x32xf32>
      %c0_73 = arith.constant 0 : index
      %c0_74 = arith.constant 0 : index
      %107 = vector.load %arg10[%c0_73, %c0_74] : memref<1x32xf32, #tpu.memory_space<vmem>>, vector<1x32xf32>
      %108 = vector.broadcast %107 : vector<1x32xf32> to vector<128x32xf32>
      %109 = arith.addf %106, %108 : vector<128x32xf32>
      %c0_75 = arith.constant 0 : index
      %c0_76 = arith.constant 0 : index
      %110 = vector.load %arg15[%c0_75, %c0_76] : memref<128x32xf32, #tpu.memory_space<vmem>>, vector<128x32xf32>
      tpu.vector_store %arg15[%c0_75, %c0_76], %109 {strides = array<i32>} : memref<128x32xf32, #tpu.memory_space<vmem>>, vector<128x32xf32>,
    } else {
    }
    %c0 = arith.constant 0 : index
    %c0_1 = arith.constant 0 : index
    %c0_2 = arith.constant 0 : index
    %3 = vector.load %arg2[%c0, %c0_1, %c0_2] : memref<1x8x32xf32, #tpu.memory_space<vmem>>, vector<1x8x32xf32>
    %4 = vector.shape_cast %3 : vector<1x8x32xf32> to vector<8x32xf32>
    %c0_3 = arith.constant 0 : index
    %c0_4 = arith.constant 0 : index
    %5 = vector.load %arg5[%c0_3, %c0_4] : memref<32x32xf32, #tpu.memory_space<vmem>>, vector<32x32xf32>
    %cst = arith.constant dense<0.000000e+00> : vector<8x32xf32>
    %6 = tpu.matmul %4, %5, %cst {dimension_numbers = #tpu.dot_dimension_numbers<[1], [0], [0], [1], [0, 0, 1, 1], [], []>} : vector<8x32xf32>, vector<32x32xf32>, vector<8x32xf32> -> vector<8x32xf32>
    %c0_5 = arith.constant 0 : index
    %c0_6 = arith.constant 0 : index
    %7 = vector.load %arg6[%c0_5, %c0_6] : memref<1x32xf32, #tpu.memory_space<vmem>>, vector<1x32xf32>
    %8 = vector.broadcast %7 : vector<1x32xf32> to vector<8x32xf32>
    %9 = arith.addf %6, %8 : vector<8x32xf32>
    %cst_7 = arith.constant 0.353553385 : f32
    %10 = vector.broadcast %cst_7 : f32 to vector<8x32xf32>
    %11 = arith.mulf %9, %10 : vector<8x32xf32>
    %12 = tpu.iota {dimensions = array<i32: 1>} : vector<8x128xi32>
    %c8_i32 = arith.constant 8 : i32
    %13 = vector.broadcast %c8_i32 : i32 to vector<8x128xi32>
    %14 = arith.cmpi slt, %12, %13 : vector<8x128xi32>
    %cst_8 = arith.constant 0.000000e+00 : f32
    %cst_9 = arith.constant -1.000000e+30 : f32
    %15 = vector.broadcast %cst_8 : f32 to vector<8x128xf32>
    %16 = vector.broadcast %cst_9 : f32 to vector<8x128xf32>
    %17 = arith.select %14, %15, %16 : vector<8x128xi1>, vector<8x128xf32>
    %18 = vector.extract_strided_slice %11 {offsets = [0, 0], sizes = [8, 8], strides = [1, 1]} : vector<8x32xf32> to vector<8x8xf32>
    %c0_10 = arith.constant 0 : index
    %c0_11 = arith.constant 0 : index
    %19 = vector.load %arg14[%c0_10, %c0_11] : memref<32x128xf32, #tpu.memory_space<vmem>>, vector<8x128xf32>
    %c0_12 = arith.constant 0 : index
    %c0_13 = arith.constant 0 : index
    %20 = vector.load %arg15[%c0_12, %c0_13] : memref<128x32xf32, #tpu.memory_space<vmem>>, vector<128x8xf32>
    %cst_14 = arith.constant dense<0.000000e+00> : vector<8x128xf32>
    %21 = tpu.matmul %18, %19, %cst_14 {dimension_numbers = #tpu.dot_dimension_numbers<[1], [0], [0], [1], [0, 0, 1, 1], [], []>} : vector<8x8xf32>, vector<8x128xf32>, vector<8x128xf32> -> vector<8x128xf32>
    %22 = arith.addf %21, %17 : vector<8x128xf32>
    %cst_15 = arith.constant dense<0xFF800000> : vector<8xf32>
    %23 = vector.multi_reduction <maximumf>, %22, %cst_15 [1] : vector<8x128xf32> to vector<8xf32>
    %24 = vector.shape_cast %23 : vector<8xf32> to vector<8x1xf32>
    %25 = vector.broadcast %24 : vector<8x1xf32> to vector<8x128xf32>
    %26 = arith.subf %22, %25 : vector<8x128xf32>
    %27 = math.exp %26 : vector<8x128xf32>
    %cst_16 = arith.constant dense<0.000000e+00> : vector<8xf32>
    %28 = vector.multi_reduction <add>, %27, %cst_16 [1] : vector<8x128xf32> to vector<8xf32>
    %29 = vector.shape_cast %28 : vector<8xf32> to vector<8x1xf32>
    %cst_17 = arith.constant dense<0.000000e+00> : vector<8x8xf32>
    %30 = tpu.matmul %27, %20, %cst_17 {dimension_numbers = #tpu.dot_dimension_numbers<[1], [0], [0], [1], [0, 0, 1, 1], [], []>} : vector<8x128xf32>, vector<128x8xf32>, vector<8x8xf32> -> vector<8x8xf32>
    %31 = tpu.reciprocal %29 {approx = true} : vector<8x1xf32> -> vector<8x1xf32>
    %32 = vector.broadcast %31 : vector<8x1xf32> to vector<8x8xf32>
    %33 = arith.mulf %30, %32 : vector<8x8xf32>
    %c0_18 = arith.constant 0 : index
    %c0_19 = arith.constant 0 : index
    %34 = vector.load %arg16[%c0_18, %c0_19] : memref<8x32xf32, #tpu.memory_space<vmem>>, vector<8x8xf32>
    tpu.vector_store %arg16[%c0_18, %c0_19], %33 {strides = array<i32>} : memref<8x32xf32, #tpu.memory_space<vmem>>, vector<8x8xf32>,
    %35 = vector.extract_strided_slice %11 {offsets = [0, 8], sizes = [8, 8], strides = [1, 1]} : vector<8x32xf32> to vector<8x8xf32>
    %c8 = arith.constant 8 : index
    %c0_20 = arith.constant 0 : index
    %36 = vector.load %arg14[%c8, %c0_20] : memref<32x128xf32, #tpu.memory_space<vmem>>, vector<8x128xf32>
    %c0_21 = arith.constant 0 : index
    %c8_22 = arith.constant 8 : index
    %37 = vector.load %arg15[%c0_21, %c8_22] : memref<128x32xf32, #tpu.memory_space<vmem>>, vector<128x8xf32>
    %cst_23 = arith.constant dense<0.000000e+00> : vector<8x128xf32>
    %38 = tpu.matmul %35, %36, %cst_23 {dimension_numbers = #tpu.dot_dimension_numbers<[1], [0], [0], [1], [0, 0, 1, 1], [], []>} : vector<8x8xf32>, vector<8x128xf32>, vector<8x128xf32> -> vector<8x128xf32>
    %39 = arith.addf %38, %17 : vector<8x128xf32>
    %cst_24 = arith.constant dense<0xFF800000> : vector<8xf32>
    %40 = vector.multi_reduction <maximumf>, %39, %cst_24 [1] : vector<8x128xf32> to vector<8xf32>
    %41 = vector.shape_cast %40 : vector<8xf32> to vector<8x1xf32>
    %42 = vector.broadcast %41 : vector<8x1xf32> to vector<8x128xf32>
    %43 = arith.subf %39, %42 : vector<8x128xf32>
    %44 = math.exp %43 : vector<8x128xf32>
    %cst_25 = arith.constant dense<0.000000e+00> : vector<8xf32>
    %45 = vector.multi_reduction <add>, %44, %cst_25 [1] : vector<8x128xf32> to vector<8xf32>
    %46 = vector.shape_cast %45 : vector<8xf32> to vector<8x1xf32>
    %cst_26 = arith.constant dense<0.000000e+00> : vector<8x8xf32>
    %47 = tpu.matmul %44, %37, %cst_26 {dimension_numbers = #tpu.dot_dimension_numbers<[1], [0], [0], [1], [0, 0, 1, 1], [], []>} : vector<8x128xf32>, vector<128x8xf32>, vector<8x8xf32> -> vector<8x8xf32>
    %48 = tpu.reciprocal %46 {approx = true} : vector<8x1xf32> -> vector<8x1xf32>
    %49 = vector.broadcast %48 : vector<8x1xf32> to vector<8x8xf32>
    %50 = arith.mulf %47, %49 : vector<8x8xf32>
    %c0_27 = arith.constant 0 : index
    %c8_28 = arith.constant 8 : index
    %51 = vector.load %arg16[%c0_27, %c8_28] : memref<8x32xf32, #tpu.memory_space<vmem>>, vector<8x8xf32>
    tpu.vector_store %arg16[%c0_27, %c8_28], %50 {strides = array<i32>} : memref<8x32xf32, #tpu.memory_space<vmem>>, vector<8x8xf32>,
    %52 = vector.extract_strided_slice %11 {offsets = [0, 16], sizes = [8, 8], strides = [1, 1]} : vector<8x32xf32> to vector<8x8xf32>
    %c16 = arith.constant 16 : index
    %c0_29 = arith.constant 0 : index
    %53 = vector.load %arg14[%c16, %c0_29] : memref<32x128xf32, #tpu.memory_space<vmem>>, vector<8x128xf32>
    %c0_30 = arith.constant 0 : index
    %c16_31 = arith.constant 16 : index
    %54 = vector.load %arg15[%c0_30, %c16_31] : memref<128x32xf32, #tpu.memory_space<vmem>>, vector<128x8xf32>
    %cst_32 = arith.constant dense<0.000000e+00> : vector<8x128xf32>
    %55 = tpu.matmul %52, %53, %cst_32 {dimension_numbers = #tpu.dot_dimension_numbers<[1], [0], [0], [1], [0, 0, 1, 1], [], []>} : vector<8x8xf32>, vector<8x128xf32>, vector<8x128xf32> -> vector<8x128xf32>
    %56 = arith.addf %55, %17 : vector<8x128xf32>
    %cst_33 = arith.constant dense<0xFF800000> : vector<8xf32>
    %57 = vector.multi_reduction <maximumf>, %56, %cst_33 [1] : vector<8x128xf32> to vector<8xf32>
    %58 = vector.shape_cast %57 : vector<8xf32> to vector<8x1xf32>
    %59 = vector.broadcast %58 : vector<8x1xf32> to vector<8x128xf32>
    %60 = arith.subf %56, %59 : vector<8x128xf32>
    %61 = math.exp %60 : vector<8x128xf32>
    %cst_34 = arith.constant dense<0.000000e+00> : vector<8xf32>
    %62 = vector.multi_reduction <add>, %61, %cst_34 [1] : vector<8x128xf32> to vector<8xf32>
    %63 = vector.shape_cast %62 : vector<8xf32> to vector<8x1xf32>
    %cst_35 = arith.constant dense<0.000000e+00> : vector<8x8xf32>
    %64 = tpu.matmul %61, %54, %cst_35 {dimension_numbers = #tpu.dot_dimension_numbers<[1], [0], [0], [1], [0, 0, 1, 1], [], []>} : vector<8x128xf32>, vector<128x8xf32>, vector<8x8xf32> -> vector<8x8xf32>
    %65 = tpu.reciprocal %63 {approx = true} : vector<8x1xf32> -> vector<8x1xf32>
    %66 = vector.broadcast %65 : vector<8x1xf32> to vector<8x8xf32>
    %67 = arith.mulf %64, %66 : vector<8x8xf32>
    %c0_36 = arith.constant 0 : index
    %c16_37 = arith.constant 16 : index
    %68 = vector.load %arg16[%c0_36, %c16_37] : memref<8x32xf32, #tpu.memory_space<vmem>>, vector<8x8xf32>
    tpu.vector_store %arg16[%c0_36, %c16_37], %67 {strides = array<i32>} : memref<8x32xf32, #tpu.memory_space<vmem>>, vector<8x8xf32>,
    %69 = vector.extract_strided_slice %11 {offsets = [0, 24], sizes = [8, 8], strides = [1, 1]} : vector<8x32xf32> to vector<8x8xf32>
    %c24 = arith.constant 24 : index
    %c0_38 = arith.constant 0 : index
    %70 = vector.load %arg14[%c24, %c0_38] : memref<32x128xf32, #tpu.memory_space<vmem>>, vector<8x128xf32>
    %c0_39 = arith.constant 0 : index
    %c24_40 = arith.constant 24 : index
    %71 = vector.load %arg15[%c0_39, %c24_40] : memref<128x32xf32, #tpu.memory_space<vmem>>, vector<128x8xf32>
    %cst_41 = arith.constant dense<0.000000e+00> : vector<8x128xf32>
    %72 = tpu.matmul %69, %70, %cst_41 {dimension_numbers = #tpu.dot_dimension_numbers<[1], [0], [0], [1], [0, 0, 1, 1], [], []>} : vector<8x8xf32>, vector<8x128xf32>, vector<8x128xf32> -> vector<8x128xf32>
    %73 = arith.addf %72, %17 : vector<8x128xf32>
    %cst_42 = arith.constant dense<0xFF800000> : vector<8xf32>
    %74 = vector.multi_reduction <maximumf>, %73, %cst_42 [1] : vector<8x128xf32> to vector<8xf32>
    %75 = vector.shape_cast %74 : vector<8xf32> to vector<8x1xf32>
    %76 = vector.broadcast %75 : vector<8x1xf32> to vector<8x128xf32>
    %77 = arith.subf %73, %76 : vector<8x128xf32>
    %78 = math.exp %77 : vector<8x128xf32>
    %cst_43 = arith.constant dense<0.000000e+00> : vector<8xf32>
    %79 = vector.multi_reduction <add>, %78, %cst_43 [1] : vector<8x128xf32> to vector<8xf32>
    %80 = vector.shape_cast %79 : vector<8xf32> to vector<8x1xf32>
    %cst_44 = arith.constant dense<0.000000e+00> : vector<8x8xf32>
    %81 = tpu.matmul %78, %71, %cst_44 {dimension_numbers = #tpu.dot_dimension_numbers<[1], [0], [0], [1], [0, 0, 1, 1], [], []>} : vector<8x128xf32>, vector<128x8xf32>, vector<8x8xf32> -> vector<8x8xf32>
    %82 = tpu.reciprocal %80 {approx = true} : vector<8x1xf32> -> vector<8x1xf32>
    %83 = vector.broadcast %82 : vector<8x1xf32> to vector<8x8xf32>
    %84 = arith.mulf %81, %83 : vector<8x8xf32>
    %c0_45 = arith.constant 0 : index
    %c24_46 = arith.constant 24 : index
    %85 = vector.load %arg16[%c0_45, %c24_46] : memref<8x32xf32, #tpu.memory_space<vmem>>, vector<8x8xf32>
    tpu.vector_store %arg16[%c0_45, %c24_46], %84 {strides = array<i32>} : memref<8x32xf32, #tpu.memory_space<vmem>>, vector<8x8xf32>,
    %c0_47 = arith.constant 0 : index
    %c0_48 = arith.constant 0 : index
    %86 = vector.load %arg16[%c0_47, %c0_48] : memref<8x32xf32, #tpu.memory_space<vmem>>, vector<8x32xf32>
    %c0_49 = arith.constant 0 : index
    %c0_50 = arith.constant 0 : index
    %87 = vector.load %arg11[%c0_49, %c0_50] : memref<32x32xf32, #tpu.memory_space<vmem>>, vector<32x32xf32>
    %cst_51 = arith.constant dense<0.000000e+00> : vector<8x32xf32>
    %88 = tpu.matmul %86, %87, %cst_51 {dimension_numbers = #tpu.dot_dimension_numbers<[1], [0], [0], [1], [0, 0, 1, 1], [], []>} : vector<8x32xf32>, vector<32x32xf32>, vector<8x32xf32> -> vector<8x32xf32>
    %c0_52 = arith.constant 0 : index
    %c0_53 = arith.constant 0 : index
    %89 = vector.load %arg12[%c0_52, %c0_53] : memref<1x32xf32, #tpu.memory_space<vmem>>, vector<1x32xf32>
    %90 = vector.broadcast %89 : vector<1x32xf32> to vector<8x32xf32>
    %91 = arith.addf %88, %90 : vector<8x32xf32>
    %c0_54 = arith.constant 0 : index
    %c0_55 = arith.constant 0 : index
    %c0_56 = arith.constant 0 : index
    %92 = vector.load %arg13[%c0_54, %c0_55, %c0_56] : memref<1x8x32xf32, #tpu.memory_space<vmem>>, vector<1x8x32xf32>
    %93 = vector.shape_cast %92 : vector<1x8x32xf32> to vector<8x32xf32>
    %94 = vector.shape_cast %91 : vector<8x32xf32> to vector<1x8x32xf32>
    tpu.vector_store %arg13[%c0_54, %c0_55, %c0_56], %94 {strides = array<i32>} : memref<1x8x32xf32, #tpu.memory_space<vmem>>, vector<1x8x32xf32>,
    return
  }
  func.func @transform_0(%arg0: i32, %arg1: i32) -> (i32, i32, i32) {
    %c0_i32 = arith.constant 0 : i32
    %c0_i32_0 = arith.constant 0 : i32
    return %arg0, %arg1, %c0_i32 : i32, i32, i32
  }
  func.func @transform_1(%arg0: i32, %arg1: i32) -> (i32, i32, i32) {
    %c0_i32 = arith.constant 0 : i32
    %c0_i32_0 = arith.constant 0 : i32
    %c0_i32_1 = arith.constant 0 : i32
    return %arg0, %c0_i32, %c0_i32_0 : i32, i32, i32
  }
  func.func @transform_2(%arg0: i32, %arg1: i32) -> (i32, i32, i32) {
    %c0_i32 = arith.constant 0 : i32
    %c0_i32_0 = arith.constant 0 : i32
    %c0_i32_1 = arith.constant 0 : i32
    return %arg0, %c0_i32, %c0_i32_0 : i32, i32, i32
  }
  func.func @transform_3(%arg0: i32, %arg1: i32) -> (i32, i32) {
    %c0_i32 = arith.constant 0 : i32
    %c0_i32_0 = arith.constant 0 : i32
    %c0_i32_1 = arith.constant 0 : i32
    return %c0_i32, %c0_i32_0 : i32, i32
  }
  func.func @transform_4(%arg0: i32, %arg1: i32) -> (i32, i32) {
    %c0_i32 = arith.constant 0 : i32
    %c0_i32_0 = arith.constant 0 : i32
    %c0_i32_1 = arith.constant 0 : i32
    return %c0_i32, %c0_i32_0 : i32, i32
  }
  func.func @transform_5(%arg0: i32, %arg1: i32) -> (i32, i32) {
    %c0_i32 = arith.constant 0 : i32
    %c0_i32_0 = arith.constant 0 : i32
    %c0_i32_1 = arith.constant 0 : i32
    return %c0_i32, %c0_i32_0 : i32, i32
  }
  func.func @transform_6(%arg0: i32, %arg1: i32) -> (i32, i32) {
    %c0_i32 = arith.constant 0 : i32
    %c0_i32_0 = arith.constant 0 : i32
    %c0_i32_1 = arith.constant 0 : i32
    return %c0_i32, %c0_i32_0 : i32, i32
  }
  func.func @transform_7(%arg0: i32, %arg1: i32) -> (i32, i32) {
    %c0_i32 = arith.constant 0 : i32
    %c0_i32_0 = arith.constant 0 : i32
    %c0_i32_1 = arith.constant 0 : i32
    return %c0_i32, %c0_i32_0 : i32, i32
  }
  func.func @transform_8(%arg0: i32, %arg1: i32) -> (i32, i32) {
    %c0_i32 = arith.constant 0 : i32
    %c0_i32_0 = arith.constant 0 : i32
    %c0_i32_1 = arith.constant 0 : i32
    return %c0_i32, %c0_i32_0 : i32, i32
  }
  func.func @transform_9(%arg0: i32, %arg1: i32) -> (i32, i32) {
    %c0_i32 = arith.constant 0 : i32
    %c0_i32_0 = arith.constant 0 : i32
    %c0_i32_1 = arith.constant 0 : i32
    return %c0_i32, %c0_i32_0 : i32, i32
  }
  func.func @transform_10(%arg0: i32, %arg1: i32) -> (i32, i32) {
    %c0_i32 = arith.constant 0 : i32
    %c0_i32_0 = arith.constant 0 : i32
    %c0_i32_1 = arith.constant 0 : i32
    return %c0_i32, %c0_i32_0 : i32, i32
  }
  func.func @transform_11(%arg0: i32, %arg1: i32) -> (i32, i32, i32) {
    %c0_i32 = arith.constant 0 : i32
    %c0_i32_0 = arith.constant 0 : i32
    return %arg0, %arg1, %c0_i32 : i32, i32, i32
  }
}

module attributes {stable_mosaic.version = 11 : i64} {
  func.func @_cross_attn_kernel(%arg0: i32, %arg1: i32, %arg2: memref<1x8x32xf32, #tpu.memory_space<vmem>>, %arg3: memref<1x128x16xf32, #tpu.memory_space<vmem>>, %arg4: memref<1x16x128xf32, #tpu.memory_space<vmem>>, %arg5: memref<32x32xf32, #tpu.memory_space<vmem>>, %arg6: memref<1x32xf32, #tpu.memory_space<vmem>>, %arg7: memref<32x16xf32, #tpu.memory_space<vmem>>, %arg8: memref<32x1xf32, #tpu.memory_space<vmem>>, %arg9: memref<16x32xf32, #tpu.memory_space<vmem>>, %arg10: memref<1x32xf32, #tpu.memory_space<vmem>>, %arg11: memref<32x32xf32, #tpu.memory_space<vmem>>, %arg12: memref<1x32xf32, #tpu.memory_space<vmem>>, %arg13: memref<1x8x32xf32, #tpu.memory_space<vmem>>, %arg14: memref<32x128xf32, #tpu.memory_space<vmem>>, %arg15: memref<128x32xf32, #tpu.memory_space<vmem>>, %arg16: memref<8x32xf32, #tpu.memory_space<vmem>>) attributes {dimension_semantics = [#tpu.dimension_semantics<parallel>, #tpu.dimension_semantics<arbitrary>], iteration_bounds = array<i64: 2, 1>, scalar_prefetch = 0 : i64, scratch_operands = 3 : i64, tpu.core_type = #tpu.core_type<tc>, window_params = [{transform_indices = @transform_0, window_bounds = array<i64: 1, 8, 32>}, {transform_indices = @transform_1, window_bounds = array<i64: 1, 128, 16>}, {transform_indices = @transform_2, window_bounds = array<i64: 1, 16, 128>}, {pipeline_mode = #tpu.pipeline_mode<synchronous>, transform_indices = @transform_3, window_bounds = array<i64: 32, 32>}, {pipeline_mode = #tpu.pipeline_mode<synchronous>, transform_indices = @transform_4, window_bounds = array<i64: 1, 32>}, {pipeline_mode = #tpu.pipeline_mode<synchronous>, transform_indices = @transform_5, window_bounds = array<i64: 32, 16>}, {pipeline_mode = #tpu.pipeline_mode<synchronous>, transform_indices = @transform_6, window_bounds = array<i64: 32, 1>}, {pipeline_mode = #tpu.pipeline_mode<synchronous>, transform_indices = @transform_7, window_bounds = array<i64: 16, 32>}, {pipeline_mode = #tpu.pipeline_mode<synchronous>, transform_indices = @transform_8, window_bounds = array<i64: 1, 32>}, {pipeline_mode = #tpu.pipeline_mode<synchronous>, transform_indices = @transform_9, window_bounds = array<i64: 32, 32>}, {pipeline_mode = #tpu.pipeline_mode<synchronous>, transform_indices = @transform_10, window_bounds = array<i64: 1, 32>}, {transform_indices = @transform_11, window_bounds = array<i64: 1, 8, 32>}]} {
    %c0_i32 = arith.constant 0 : i32
    %0 = arith.cmpi eq, %arg1, %c0_i32 : i32
    %1 = arith.extui %0 : i1 to i32
    %c0_i32_0 = arith.constant 0 : i32
    %2 = arith.cmpi ne, %1, %c0_i32_0 : i32
    scf.if %2 {
      %c0_57 = arith.constant 0 : index
      %c0_58 = arith.constant 0 : index
      %95 = vector.load %arg7[%c0_57, %c0_58] : memref<32x16xf32, #tpu.memory_space<vmem>>, vector<32x16xf32>
      %c0_59 = arith.constant 0 : index
      %c0_60 = arith.constant 0 : index
      %c0_61 = arith.constant 0 : index
      %96 = vector.load %arg4[%c0_59, %c0_60, %c0_61] : memref<1x16x128xf32, #tpu.memory_space<vmem>>, vector<1x16x128xf32>
      %97 = vector.shape_cast %96 : vector<1x16x128xf32> to vector<16x128xf32>
      %cst_62 = arith.constant dense<0.000000e+00> : vector<32x128xf32>
      %98 = tpu.matmul %95, %97, %cst_62 {dimension_numbers = #tpu.dot_dimension_numbers<[1], [0], [0], [1], [0, 0, 1, 1], [], []>} : vector<32x16xf32>, vector<16x128xf32>, vector<32x128xf32> -> vector<32x128xf32>
      %c0_63 = arith.constant 0 : index
      %c0_64 = arith.constant 0 : index
      %99 = vector.load %arg8[%c0_63, %c0_64] : memref<32x1xf32, #tpu.memory_space<vmem>>, vector<32x1xf32>
      %100 = vector.broadcast %99 : vector<32x1xf32> to vector<32x128xf32>
      %101 = arith.addf %98, %100 : vector<32x128xf32>
      %c0_65 = arith.constant 0 : index
      %c0_66 = arith.constant 0 : index
      %102 = vector.load %arg14[%c0_65, %c0_66] : memref<32x128xf32, #tpu.memory_space<vmem>>, vector<32x128xf32>
      tpu.vector_store %arg14[%c0_65, %c0_66], %101 {strides = array<i32>} : memref<32x128xf32, #tpu.memory_space<vmem>>, vector<32x128xf32>,
      %c0_67 = arith.constant 0 : index
      %c0_68 = arith.constant 0 : index
      %c0_69 = arith.constant 0 : index
      %103 = vector.load %arg3[%c0_67, %c0_68, %c0_69] : memref<1x128x16xf32, #tpu.memory_space<vmem>>, vector<1x128x16xf32>
      %104 = vector.shape_cast %103 : vector<1x128x16xf32> to vector<128x16xf32>
      %c0_70 = arith.constant 0 : index
      %c0_71 = arith.constant 0 : index
      %105 = vector.load %arg9[%c0_70, %c0_71] : memref<16x32xf32, #tpu.memory_space<vmem>>, vector<16x32xf32>
      %cst_72 = arith.constant dense<0.000000e+00> : vector<128x32xf32>
      %106 = tpu.matmul %104, %105, %cst_72 {dimension_numbers = #tpu.dot_dimension_numbers<[1], [0], [0], [1], [0, 0, 1, 1], [], []>} : vector<128x16xf32>, vector<16x32xf32>, vector<128x32xf32> -> vector<128x32xf32>
      %c0_73 = arith.constant 0 : index
      %c0_74 = arith.constant 0 : index
      %107 = vector.load %arg10[%c0_73, %c0_74] : memref<1x32xf32, #tpu.memory_space<vmem>>, vector<1x32xf32>
      %108 = vector.broadcast %107 : vector<1x32xf32> to vector<128x32xf32>
      %109 = arith.addf %106, %108 : vector<128x32xf32>
      %c0_75 = arith.constant 0 : index
      %c0_76 = arith.constant 0 : index
      %110 = vector.load %arg15[%c0_75, %c0_76] : memref<128x32xf32, #tpu.memory_space<vmem>>, vector<128x32xf32>
      tpu.vector_store %arg15[%c0_75, %c0_76], %109 {strides = array<i32>} : memref<128x32xf32, #tpu.memory_space<vmem>>, vector<128x32xf32>,
    } else {
    }
    %c0 = arith.constant 0 : index
    %c0_1 = arith.constant 0 : index
    %c0_2 = arith.constant 0 : index
    %3 = vector.load %arg2[%c0, %c0_1, %c0_2] : memref<1x8x32xf32, #tpu.memory_space<vmem>>, vector<1x8x32xf32>
    %4 = vector.shape_cast %3 : vector<1x8x32xf32> to vector<8x32xf32>
    %c0_3 = arith.constant 0 : index
    %c0_4 = arith.constant 0 : index
    %5 = vector.load %arg5[%c0_3, %c0_4] : memref<32x32xf32, #tpu.memory_space<vmem>>, vector<32x32xf32>
    %cst = arith.constant dense<0.000000e+00> : vector<8x32xf32>
    %6 = tpu.matmul %4, %5, %cst {dimension_numbers = #tpu.dot_dimension_numbers<[1], [0], [0], [1], [0, 0, 1, 1], [], []>} : vector<8x32xf32>, vector<32x32xf32>, vector<8x32xf32> -> vector<8x32xf32>
    %c0_5 = arith.constant 0 : index
    %c0_6 = arith.constant 0 : index
    %7 = vector.load %arg6[%c0_5, %c0_6] : memref<1x32xf32, #tpu.memory_space<vmem>>, vector<1x32xf32>
    %8 = vector.broadcast %7 : vector<1x32xf32> to vector<8x32xf32>
    %9 = arith.addf %6, %8 : vector<8x32xf32>
    %cst_7 = arith.constant 0.353553385 : f32
    %10 = vector.broadcast %cst_7 : f32 to vector<8x32xf32>
    %11 = arith.mulf %9, %10 : vector<8x32xf32>
    %12 = tpu.iota {dimensions = array<i32: 1>} : vector<8x128xi32>
    %c8_i32 = arith.constant 8 : i32
    %13 = vector.broadcast %c8_i32 : i32 to vector<8x128xi32>
    %14 = arith.cmpi slt, %12, %13 : vector<8x128xi32>
    %cst_8 = arith.constant 0.000000e+00 : f32
    %cst_9 = arith.constant -1.000000e+30 : f32
    %15 = vector.broadcast %cst_8 : f32 to vector<8x128xf32>
    %16 = vector.broadcast %cst_9 : f32 to vector<8x128xf32>
    %17 = arith.select %14, %15, %16 : vector<8x128xi1>, vector<8x128xf32>
    %18 = vector.extract_strided_slice %11 {offsets = [0, 0], sizes = [8, 8], strides = [1, 1]} : vector<8x32xf32> to vector<8x8xf32>
    %c0_10 = arith.constant 0 : index
    %c0_11 = arith.constant 0 : index
    %19 = vector.load %arg14[%c0_10, %c0_11] : memref<32x128xf32, #tpu.memory_space<vmem>>, vector<8x128xf32>
    %c0_12 = arith.constant 0 : index
    %c0_13 = arith.constant 0 : index
    %20 = vector.load %arg15[%c0_12, %c0_13] : memref<128x32xf32, #tpu.memory_space<vmem>>, vector<128x8xf32>
    %cst_14 = arith.constant dense<0.000000e+00> : vector<8x128xf32>
    %21 = tpu.matmul %18, %19, %cst_14 {dimension_numbers = #tpu.dot_dimension_numbers<[1], [0], [0], [1], [0, 0, 1, 1], [], []>} : vector<8x8xf32>, vector<8x128xf32>, vector<8x128xf32> -> vector<8x128xf32>
    %22 = arith.addf %21, %17 : vector<8x128xf32>
    %cst_15 = arith.constant dense<0xFF800000> : vector<8xf32>
    %23 = vector.multi_reduction <maximumf>, %22, %cst_15 [1] : vector<8x128xf32> to vector<8xf32>
    %24 = vector.shape_cast %23 : vector<8xf32> to vector<8x1xf32>
    %25 = vector.broadcast %24 : vector<8x1xf32> to vector<8x128xf32>
    %26 = arith.subf %22, %25 : vector<8x128xf32>
    %27 = math.exp %26 : vector<8x128xf32>
    %cst_16 = arith.constant dense<0.000000e+00> : vector<8xf32>
    %28 = vector.multi_reduction <add>, %27, %cst_16 [1] : vector<8x128xf32> to vector<8xf32>
    %29 = vector.shape_cast %28 : vector<8xf32> to vector<8x1xf32>
    %cst_17 = arith.constant dense<0.000000e+00> : vector<8x8xf32>
    %30 = tpu.matmul %27, %20, %cst_17 {dimension_numbers = #tpu.dot_dimension_numbers<[1], [0], [0], [1], [0, 0, 1, 1], [], []>} : vector<8x128xf32>, vector<128x8xf32>, vector<8x8xf32> -> vector<8x8xf32>
    %31 = tpu.reciprocal %29 {approx = true} : vector<8x1xf32> -> vector<8x1xf32>
    %32 = vector.broadcast %31 : vector<8x1xf32> to vector<8x8xf32>
    %33 = arith.mulf %30, %32 : vector<8x8xf32>
    %c0_18 = arith.constant 0 : index
    %c0_19 = arith.constant 0 : index
    %34 = vector.load %arg16[%c0_18, %c0_19] : memref<8x32xf32, #tpu.memory_space<vmem>>, vector<8x8xf32>
    tpu.vector_store %arg16[%c0_18, %c0_19], %33 {strides = array<i32>} : memref<8x32xf32, #tpu.memory_space<vmem>>, vector<8x8xf32>,
    %35 = vector.extract_strided_slice %11 {offsets = [0, 8], sizes = [8, 8], strides = [1, 1]} : vector<8x32xf32> to vector<8x8xf32>
    %c8 = arith.constant 8 : index
    %c0_20 = arith.constant 0 : index
    %36 = vector.load %arg14[%c8, %c0_20] : memref<32x128xf32, #tpu.memory_space<vmem>>, vector<8x128xf32>
    %c0_21 = arith.constant 0 : index
    %c8_22 = arith.constant 8 : index
    %37 = vector.load %arg15[%c0_21, %c8_22] : memref<128x32xf32, #tpu.memory_space<vmem>>, vector<128x8xf32>
    %cst_23 = arith.constant dense<0.000000e+00> : vector<8x128xf32>
    %38 = tpu.matmul %35, %36, %cst_23 {dimension_numbers = #tpu.dot_dimension_numbers<[1], [0], [0], [1], [0, 0, 1, 1], [], []>} : vector<8x8xf32>, vector<8x128xf32>, vector<8x128xf32> -> vector<8x128xf32>
    %39 = arith.addf %38, %17 : vector<8x128xf32>
    %cst_24 = arith.constant dense<0xFF800000> : vector<8xf32>
    %40 = vector.multi_reduction <maximumf>, %39, %cst_24 [1] : vector<8x128xf32> to vector<8xf32>
    %41 = vector.shape_cast %40 : vector<8xf32> to vector<8x1xf32>
    %42 = vector.broadcast %41 : vector<8x1xf32> to vector<8x128xf32>
    %43 = arith.subf %39, %42 : vector<8x128xf32>
    %44 = math.exp %43 : vector<8x128xf32>
    %cst_25 = arith.constant dense<0.000000e+00> : vector<8xf32>
    %45 = vector.multi_reduction <add>, %44, %cst_25 [1] : vector<8x128xf32> to vector<8xf32>
    %46 = vector.shape_cast %45 : vector<8xf32> to vector<8x1xf32>
    %cst_26 = arith.constant dense<0.000000e+00> : vector<8x8xf32>
    %47 = tpu.matmul %44, %37, %cst_26 {dimension_numbers = #tpu.dot_dimension_numbers<[1], [0], [0], [1], [0, 0, 1, 1], [], []>} : vector<8x128xf32>, vector<128x8xf32>, vector<8x8xf32> -> vector<8x8xf32>
    %48 = tpu.reciprocal %46 {approx = true} : vector<8x1xf32> -> vector<8x1xf32>
    %49 = vector.broadcast %48 : vector<8x1xf32> to vector<8x8xf32>
    %50 = arith.mulf %47, %49 : vector<8x8xf32>
    %c0_27 = arith.constant 0 : index
    %c8_28 = arith.constant 8 : index
    %51 = vector.load %arg16[%c0_27, %c8_28] : memref<8x32xf32, #tpu.memory_space<vmem>>, vector<8x8xf32>
    tpu.vector_store %arg16[%c0_27, %c8_28], %50 {strides = array<i32>} : memref<8x32xf32, #tpu.memory_space<vmem>>, vector<8x8xf32>,
    %52 = vector.extract_strided_slice %11 {offsets = [0, 16], sizes = [8, 8], strides = [1, 1]} : vector<8x32xf32> to vector<8x8xf32>
    %c16 = arith.constant 16 : index
    %c0_29 = arith.constant 0 : index
    %53 = vector.load %arg14[%c16, %c0_29] : memref<32x128xf32, #tpu.memory_space<vmem>>, vector<8x128xf32>
    %c0_30 = arith.constant 0 : index
    %c16_31 = arith.constant 16 : index
    %54 = vector.load %arg15[%c0_30, %c16_31] : memref<128x32xf32, #tpu.memory_space<vmem>>, vector<128x8xf32>
    %cst_32 = arith.constant dense<0.000000e+00> : vector<8x128xf32>
    %55 = tpu.matmul %52, %53, %cst_32 {dimension_numbers = #tpu.dot_dimension_numbers<[1], [0], [0], [1], [0, 0, 1, 1], [], []>} : vector<8x8xf32>, vector<8x128xf32>, vector<8x128xf32> -> vector<8x128xf32>
    %56 = arith.addf %55, %17 : vector<8x128xf32>
    %cst_33 = arith.constant dense<0xFF800000> : vector<8xf32>
    %57 = vector.multi_reduction <maximumf>, %56, %cst_33 [1] : vector<8x128xf32> to vector<8xf32>
    %58 = vector.shape_cast %57 : vector<8xf32> to vector<8x1xf32>
    %59 = vector.broadcast %58 : vector<8x1xf32> to vector<8x128xf32>
    %60 = arith.subf %56, %59 : vector<8x128xf32>
    %61 = math.exp %60 : vector<8x128xf32>
    %cst_34 = arith.constant dense<0.000000e+00> : vector<8xf32>
    %62 = vector.multi_reduction <add>, %61, %cst_34 [1] : vector<8x128xf32> to vector<8xf32>
    %63 = vector.shape_cast %62 : vector<8xf32> to vector<8x1xf32>
    %cst_35 = arith.constant dense<0.000000e+00> : vector<8x8xf32>
    %64 = tpu.matmul %61, %54, %cst_35 {dimension_numbers = #tpu.dot_dimension_numbers<[1], [0], [0], [1], [0, 0, 1, 1], [], []>} : vector<8x128xf32>, vector<128x8xf32>, vector<8x8xf32> -> vector<8x8xf32>
    %65 = tpu.reciprocal %63 {approx = true} : vector<8x1xf32> -> vector<8x1xf32>
    %66 = vector.broadcast %65 : vector<8x1xf32> to vector<8x8xf32>
    %67 = arith.mulf %64, %66 : vector<8x8xf32>
    %c0_36 = arith.constant 0 : index
    %c16_37 = arith.constant 16 : index
    %68 = vector.load %arg16[%c0_36, %c16_37] : memref<8x32xf32, #tpu.memory_space<vmem>>, vector<8x8xf32>
    tpu.vector_store %arg16[%c0_36, %c16_37], %67 {strides = array<i32>} : memref<8x32xf32, #tpu.memory_space<vmem>>, vector<8x8xf32>,
    %69 = vector.extract_strided_slice %11 {offsets = [0, 24], sizes = [8, 8], strides = [1, 1]} : vector<8x32xf32> to vector<8x8xf32>
    %c24 = arith.constant 24 : index
    %c0_38 = arith.constant 0 : index
    %70 = vector.load %arg14[%c24, %c0_38] : memref<32x128xf32, #tpu.memory_space<vmem>>, vector<8x128xf32>
    %c0_39 = arith.constant 0 : index
    %c24_40 = arith.constant 24 : index
    %71 = vector.load %arg15[%c0_39, %c24_40] : memref<128x32xf32, #tpu.memory_space<vmem>>, vector<128x8xf32>
    %cst_41 = arith.constant dense<0.000000e+00> : vector<8x128xf32>
    %72 = tpu.matmul %69, %70, %cst_41 {dimension_numbers = #tpu.dot_dimension_numbers<[1], [0], [0], [1], [0, 0, 1, 1], [], []>} : vector<8x8xf32>, vector<8x128xf32>, vector<8x128xf32> -> vector<8x128xf32>
    %73 = arith.addf %72, %17 : vector<8x128xf32>
    %cst_42 = arith.constant dense<0xFF800000> : vector<8xf32>
    %74 = vector.multi_reduction <maximumf>, %73, %cst_42 [1] : vector<8x128xf32> to vector<8xf32>
    %75 = vector.shape_cast %74 : vector<8xf32> to vector<8x1xf32>
    %76 = vector.broadcast %75 : vector<8x1xf32> to vector<8x128xf32>
    %77 = arith.subf %73, %76 : vector<8x128xf32>
    %78 = math.exp %77 : vector<8x128xf32>
    %cst_43 = arith.constant dense<0.000000e+00> : vector<8xf32>
    %79 = vector.multi_reduction <add>, %78, %cst_43 [1] : vector<8x128xf32> to vector<8xf32>
    %80 = vector.shape_cast %79 : vector<8xf32> to vector<8x1xf32>
    %cst_44 = arith.constant dense<0.000000e+00> : vector<8x8xf32>
    %81 = tpu.matmul %78, %71, %cst_44 {dimension_numbers = #tpu.dot_dimension_numbers<[1], [0], [0], [1], [0, 0, 1, 1], [], []>} : vector<8x128xf32>, vector<128x8xf32>, vector<8x8xf32> -> vector<8x8xf32>
    %82 = tpu.reciprocal %80 {approx = true} : vector<8x1xf32> -> vector<8x1xf32>
    %83 = vector.broadcast %82 : vector<8x1xf32> to vector<8x8xf32>
    %84 = arith.mulf %81, %83 : vector<8x8xf32>
    %c0_45 = arith.constant 0 : index
    %c24_46 = arith.constant 24 : index
    %85 = vector.load %arg16[%c0_45, %c24_46] : memref<8x32xf32, #tpu.memory_space<vmem>>, vector<8x8xf32>
    tpu.vector_store %arg16[%c0_45, %c24_46], %84 {strides = array<i32>} : memref<8x32xf32, #tpu.memory_space<vmem>>, vector<8x8xf32>,
    %c0_47 = arith.constant 0 : index
    %c0_48 = arith.constant 0 : index
    %86 = vector.load %arg16[%c0_47, %c0_48] : memref<8x32xf32, #tpu.memory_space<vmem>>, vector<8x32xf32>
    %c0_49 = arith.constant 0 : index
    %c0_50 = arith.constant 0 : index
    %87 = vector.load %arg11[%c0_49, %c0_50] : memref<32x32xf32, #tpu.memory_space<vmem>>, vector<32x32xf32>
    %cst_51 = arith.constant dense<0.000000e+00> : vector<8x32xf32>
    %88 = tpu.matmul %86, %87, %cst_51 {dimension_numbers = #tpu.dot_dimension_numbers<[1], [0], [0], [1], [0, 0, 1, 1], [], []>} : vector<8x32xf32>, vector<32x32xf32>, vector<8x32xf32> -> vector<8x32xf32>
    %c0_52 = arith.constant 0 : index
    %c0_53 = arith.constant 0 : index
    %89 = vector.load %arg12[%c0_52, %c0_53] : memref<1x32xf32, #tpu.memory_space<vmem>>, vector<1x32xf32>
    %90 = vector.broadcast %89 : vector<1x32xf32> to vector<8x32xf32>
    %91 = arith.addf %88, %90 : vector<8x32xf32>
    %c0_54 = arith.constant 0 : index
    %c0_55 = arith.constant 0 : index
    %c0_56 = arith.constant 0 : index
    %92 = vector.load %arg13[%c0_54, %c0_55, %c0_56] : memref<1x8x32xf32, #tpu.memory_space<vmem>>, vector<1x8x32xf32>
    %93 = vector.shape_cast %92 : vector<1x8x32xf32> to vector<8x32xf32>
    %94 = vector.shape_cast %91 : vector<8x32xf32> to vector<1x8x32xf32>
    tpu.vector_store %arg13[%c0_54, %c0_55, %c0_56], %94 {strides = array<i32>} : memref<1x8x32xf32, #tpu.memory_space<vmem>>, vector<1x8x32xf32>,
    return
  }
  func.func @transform_0(%arg0: i32, %arg1: i32) -> (i32, i32, i32) {
    %c0_i32 = arith.constant 0 : i32
    %c0_i32_0 = arith.constant 0 : i32
    return %arg0, %arg1, %c0_i32 : i32, i32, i32
  }
  func.func @transform_1(%arg0: i32, %arg1: i32) -> (i32, i32, i32) {
    %c0_i32 = arith.constant 0 : i32
    %c0_i32_0 = arith.constant 0 : i32
    %c0_i32_1 = arith.constant 0 : i32
    return %arg0, %c0_i32, %c0_i32_0 : i32, i32, i32
  }
  func.func @transform_2(%arg0: i32, %arg1: i32) -> (i32, i32, i32) {
    %c0_i32 = arith.constant 0 : i32
    %c0_i32_0 = arith.constant 0 : i32
    %c0_i32_1 = arith.constant 0 : i32
    return %arg0, %c0_i32, %c0_i32_0 : i32, i32, i32
  }
  func.func @transform_3(%arg0: i32, %arg1: i32) -> (i32, i32) {
    %c0_i32 = arith.constant 0 : i32
    %c0_i32_0 = arith.constant 0 : i32
    %c0_i32_1 = arith.constant 0 : i32
    return %c0_i32, %c0_i32_0 : i32, i32
  }
  func.func @transform_4(%arg0: i32, %arg1: i32) -> (i32, i32) {
    %c0_i32 = arith.constant 0 : i32
    %c0_i32_0 = arith.constant 0 : i32
    %c0_i32_1 = arith.constant 0 : i32
    return %c0_i32, %c0_i32_0 : i32, i32
  }
  func.func @transform_5(%arg0: i32, %arg1: i32) -> (i32, i32) {
    %c0_i32 = arith.constant 0 : i32
    %c0_i32_0 = arith.constant 0 : i32
    %c0_i32_1 = arith.constant 0 : i32
    return %c0_i32, %c0_i32_0 : i32, i32
  }
  func.func @transform_6(%arg0: i32, %arg1: i32) -> (i32, i32) {
    %c0_i32 = arith.constant 0 : i32
    %c0_i32_0 = arith.constant 0 : i32
    %c0_i32_1 = arith.constant 0 : i32
    return %c0_i32, %c0_i32_0 : i32, i32
  }
  func.func @transform_7(%arg0: i32, %arg1: i32) -> (i32, i32) {
    %c0_i32 = arith.constant 0 : i32
    %c0_i32_0 = arith.constant 0 : i32
    %c0_i32_1 = arith.constant 0 : i32
    return %c0_i32, %c0_i32_0 : i32, i32
  }
  func.func @transform_8(%arg0: i32, %arg1: i32) -> (i32, i32) {
    %c0_i32 = arith.constant 0 : i32
    %c0_i32_0 = arith.constant 0 : i32
    %c0_i32_1 = arith.constant 0 : i32
    return %c0_i32, %c0_i32_0 : i32, i32
  }
  func.func @transform_9(%arg0: i32, %arg1: i32) -> (i32, i32) {
    %c0_i32 = arith.constant 0 : i32
    %c0_i32_0 = arith.constant 0 : i32
    %c0_i32_1 = arith.constant 0 : i32
    return %c0_i32, %c0_i32_0 : i32, i32
  }
  func.func @transform_10(%arg0: i32, %arg1: i32) -> (i32, i32) {
    %c0_i32 = arith.constant 0 : i32
    %c0_i32_0 = arith.constant 0 : i32
    %c0_i32_1 = arith.constant 0 : i32
    return %c0_i32, %c0_i32_0 : i32, i32
  }
  func.func @transform_11(%arg0: i32, %arg1: i32) -> (i32, i32, i32) {
    %c0_i32 = arith.constant 0 : i32
    %c0_i32_0 = arith.constant 0 : i32
    return %arg0, %arg1, %c0_i32 : i32, i32, i32
  }
}

</mosaic_0001>

<llo_original>
// kernel: tpu_custom_call.1
$region0: #{tpu_custom_call.1}
  #allocation0 [shape = 'u32[]', space=smem, size = 0x4, offset = 0x4, fixed_abs, tag = 'smem constant byte address 0x4 - core index']
  #allocation1 [shape = 'u32[72,128]{1,0:T(1,128)}', space=vmem, size = 0x9000, scoped, tag = 'internal scratch']
  #allocation2 [shape = 'f32[32,128]{1,0:T(8,128)}', space=vmem, size = 0x4000, scoped, tag = 'scratch operand']
  #allocation3 [shape = 'f32[128,32]{1,0:T(8,128)}', space=vmem, size = 0x10000, scoped, tag = 'scratch operand']
  #allocation4 [shape = 'f32[8,32]{1,0:T(8,128)}', space=vmem, size = 0x1000, scoped, tag = 'scratch operand']
  %s0 = inlined_call_operand.vmem [shape: f32[2,8,32], index: 0, kind: input, shape index: {}]
  %s1 = inlined_call_operand.vmem [shape: f32[2,128,16], index: 1, kind: input, shape index: {}]
  %s2 = inlined_call_operand.vmem [shape: f32[2,16,128], index: 2, kind: input, shape index: {}]
  %s3 = inlined_call_operand.vmem [shape: f32[32,32], index: 3, kind: input, shape index: {}]
  %s4 = inlined_call_operand.vmem [shape: f32[1,32], index: 4, kind: input, shape index: {}]
  %s5 = inlined_call_operand.vmem [shape: f32[32,16], index: 5, kind: input, shape index: {}]
  %s6 = inlined_call_operand.vmem [shape: f32[32,1], index: 6, kind: input, shape index: {}]
  %s7 = inlined_call_operand.vmem [shape: f32[16,32], index: 7, kind: input, shape index: {}]
  %s8 = inlined_call_operand.vmem [shape: f32[1,32], index: 8, kind: input, shape index: {}]
  %s9 = inlined_call_operand.vmem [shape: f32[32,32], index: 9, kind: input, shape index: {}]
  %s10 = inlined_call_operand.vmem [shape: f32[1,32], index: 10, kind: input, shape index: {}]
  %s11 = inlined_call_operand.hbm [shape: f32[2,8,32], index: 11, kind: output, shape index: {}]
  %s12 = sld [smem:[#allocation0]]
  $region81: #{tpu_custom_call.1} parent=0
    _
  %s14 = ssub.s32 1, %s12
  %s15 = scalar_select 0, %s14, %s12
  $region1: #{tpu_custom_call.1} parent=0
    #allocation5 [shape = 'u8[8192]{0}', space=vmem, size = 0x2000, scoped, tag = 'output window, operand 0']
    #allocation6 [shape = 's32[2]{0}', space=sflag, size = 0x8, scoped, tag = 'scoped memory for tpu_custom_call.1']
    %16 = vsyncpa [#allocation6], 0
    %s17 = scalar_lea.sflag [#allocation6], 1
    %18 = vsyncpa %s17, 0
    loop: start=0, step=1, limit=4
    $region2: #{tpu_custom_call.1} parent=1 // loop_pre_header
      _
    $region3: #{tpu_custom_call.1} parent=1 // loop_header
      %s20 = sphi 0, %s24
      %p21 = scmp.ge.s32.totalorder %s20, 4
      %s27 = sphi 0, %s39
      %s28 = sphi 0, %s35
      %s29 = sphi 0, %s27
      %s30 = sphi 0, %s28
      %s31 = sphi 0, %s29
      %s32 = sphi 0, %s30
      %s44 = sphi 0, %s46
      %s47 = sphi 0, %s44
      %s48 = sphi 0, %s47
      %s64 = sphi 0, %s48
      %s70 = sphi 0, %s72
      %s73 = sphi 0, %s70
      %s74 = sphi 0, %s73
      %s90 = sphi 0, %s74
      %s96 = sphi 0, %s98
      %s99 = sphi 0, %s96
      %s100 = sphi 0, %s99
      %s116 = sphi 0, %s100
      %s120 = sphi 0, %s120
      %s122 = sphi 0, %s120
      %s123 = sphi 0, %s122
      %s137 = sphi 0, %s123
      %s141 = sphi 0, %s141
      %s143 = sphi 0, %s141
      %s144 = sphi 0, %s143
      %s158 = sphi 0, %s144
      %s162 = sphi 0, %s162
      %s164 = sphi 0, %s162
      %s165 = sphi 0, %s164
      %s179 = sphi 0, %s165
      %s183 = sphi 0, %s183
      %s185 = sphi 0, %s183
      %s186 = sphi 0, %s185
      %s200 = sphi 0, %s186
      %s204 = sphi 0, %s204
      %s206 = sphi 0, %s204
      %s207 = sphi 0, %s206
      %s221 = sphi 0, %s207
      %s225 = sphi 0, %s225
      %s227 = sphi 0, %s225
      %s228 = sphi 0, %s227
      %s242 = sphi 0, %s228
      %s246 = sphi 0, %s246
      %s248 = sphi 0, %s246
      %s249 = sphi 0, %s248
      %s263 = sphi 0, %s249
      %s267 = sphi 0, %s267
      %s269 = sphi 0, %s267
      %s270 = sphi 0, %s269
      %s284 = sphi 0, %s270
      %s292 = sphi 0, %s294
      %s295 = sphi 0, %s292
      %s296 = sphi 0, %s295
      %s312 = sphi 0, %s296
    $region4: #{tpu_custom_call.1} parent=1 // loop_header_branch
      %23 = sbr.rel (%p21) target = $region8
    $region5: #{tpu_custom_call.1} parent=1 // loop_body
      %s25 = ssub.s32 %s20, 1
      %s26 = ssub.s32 %s20, 2
      %s33 = sadd.s32 1, %s28
      %p34 = scmp.ge.s32.totalorder %s33, 1
      %s35 = scalar_select %p34, 0, %s33
      %s36 = sadd.s32 1, %s27
      %s37 = scalar_select %p34, %s36, %s27
      %p38 = scmp.ge.s32.totalorder %s37, 2
      %s39 = scalar_select %p38, 0, %s37
      %s40 = ssub.s32 %s27, %s39
      %s41 = ssub.s32 %s28, %s35
      %s42 = sor.u32 %s40, %s41
      %p43 = scmp.eq.s32.totalorder %s42, 0
      %s45 = sadd.s32 %s44, 1
      %s46 = scalar_select %p43, %s44, %s45
      %p49 = pneg %p43
      %p50 = scmp.eq.s32.totalorder %s20, 1
      %p51 = por %p49, %p50
      %p52 = scmp.ne.s32.totalorder %s44, %s47
      %p53 = scmp.eq.s32.totalorder %s20, 0
      %p54 = por %p52, %p53
      %p55 = scmp.ne.s32.totalorder %s44, %s47
      %p56 = scmp.eq.s32.totalorder %s25, 1
      %p57 = por %p55, %p56
      %p58 = scmp.ne.s32.totalorder %s47, %s48
      %p59 = scmp.eq.s32.totalorder %s25, 0
      %p60 = por %p58, %p59
      %p61 = scmp.ne.s32.totalorder %s47, %s48
      %p62 = scmp.eq.s32.totalorder %s26, 1
      %p63 = por %p61, %p62
      %p65 = scmp.ne.s32.totalorder %s48, %s64
      %p66 = scmp.eq.s32.totalorder %s26, 0
      %p67 = por %p65, %p66
      %s68 = ssub.s32 %s27, %s39
      %p69 = scmp.eq.s32.totalorder %s68, 0
      %s71 = sadd.s32 %s70, 1
      %s72 = scalar_select %p69, %s70, %s71
      %p75 = pneg %p69
      %p76 = scmp.eq.s32.totalorder %s20, 1
      %p77 = por %p75, %p76
      %p78 = scmp.ne.s32.totalorder %s70, %s73
      %p79 = scmp.eq.s32.totalorder %s20, 0
      %p80 = por %p78, %p79
      %p81 = scmp.ne.s32.totalorder %s70, %s73
      %p82 = scmp.eq.s32.totalorder %s25, 1
      %p83 = por %p81, %p82
      %p84 = scmp.ne.s32.totalorder %s73, %s74
      %p85 = scmp.eq.s32.totalorder %s25, 0
      %p86 = por %p84, %p85
      %p87 = scmp.ne.s32.totalorder %s73, %s74
      %p88 = scmp.eq.s32.totalorder %s26, 1
      %p89 = por %p87, %p88
      %p91 = scmp.ne.s32.totalorder %s74, %s90
      %p92 = scmp.eq.s32.totalorder %s26, 0
      %p93 = por %p91, %p92
      %s94 = ssub.s32 %s27, %s39
      %p95 = scmp.eq.s32.totalorder %s94, 0
      %s97 = sadd.s32 %s96, 1
      %s98 = scalar_select %p95, %s96, %s97
      %p101 = pneg %p95
      %p102 = scmp.eq.s32.totalorder %s20, 1
      %p103 = por %p101, %p102
      %p104 = scmp.ne.s32.totalorder %s96, %s99
      %p105 = scmp.eq.s32.totalorder %s20, 0
      %p106 = por %p104, %p105
      %p107 = scmp.ne.s32.totalorder %s96, %s99
      %p108 = scmp.eq.s32.totalorder %s25, 1
      %p109 = por %p107, %p108
      %p110 = scmp.ne.s32.totalorder %s99, %s100
      %p111 = scmp.eq.s32.totalorder %s25, 0
      %p112 = por %p110, %p111
      %p113 = scmp.ne.s32.totalorder %s99, %s100
      %p114 = scmp.eq.s32.totalorder %s26, 1
      %p115 = por %p113, %p114
      %p117 = scmp.ne.s32.totalorder %s100, %s116
      %p118 = scmp.eq.s32.totalorder %s26, 0
      %p119 = por %p117, %p118
      %s121 = sadd.s32 %s120, 1
      %p124 = scmp.eq.s32.totalorder %s20, 1
      %p125 = scmp.ne.s32.totalorder %s120, %s122
      %p126 = scmp.eq.s32.totalorder %s20, 0
      %p127 = por %p125, %p126
      %p128 = scmp.ne.s32.totalorder %s120, %s122
      %p129 = scmp.eq.s32.totalorder %s25, 1
      %p130 = por %p128, %p129
      %p131 = scmp.ne.s32.totalorder %s122, %s123
      %p132 = scmp.eq.s32.totalorder %s25, 0
      %p133 = por %p131, %p132
      %p134 = scmp.ne.s32.totalorder %s122, %s123
      %p135 = scmp.eq.s32.totalorder %s26, 1
      %p136 = por %p134, %p135
      %p138 = scmp.ne.s32.totalorder %s123, %s137
      %p139 = scmp.eq.s32.totalorder %s26, 0
      %p140 = por %p138, %p139
      %s142 = sadd.s32 %s141, 1
      %p145 = scmp.eq.s32.totalorder %s20, 1
      %p146 = scmp.ne.s32.totalorder %s141, %s143
      %p147 = scmp.eq.s32.totalorder %s20, 0
      %p148 = por %p146, %p147
      %p149 = scmp.ne.s32.totalorder %s141, %s143
      %p150 = scmp.eq.s32.totalorder %s25, 1
      %p151 = por %p149, %p150
      %p152 = scmp.ne.s32.totalorder %s143, %s144
      %p153 = scmp.eq.s32.totalorder %s25, 0
      %p154 = por %p152, %p153
      %p155 = scmp.ne.s32.totalorder %s143, %s144
      %p156 = scmp.eq.s32.totalorder %s26, 1
      %p157 = por %p155, %p156
      %p159 = scmp.ne.s32.totalorder %s144, %s158
      %p160 = scmp.eq.s32.totalorder %s26, 0
      %p161 = por %p159, %p160
      %s163 = sadd.s32 %s162, 1
      %p166 = scmp.eq.s32.totalorder %s20, 1
      %p167 = scmp.ne.s32.totalorder %s162, %s164
      %p168 = scmp.eq.s32.totalorder %s20, 0
      %p169 = por %p167, %p168
      %p170 = scmp.ne.s32.totalorder %s162, %s164
      %p171 = scmp.eq.s32.totalorder %s25, 1
      %p172 = por %p170, %p171
      %p173 = scmp.ne.s32.totalorder %s164, %s165
      %p174 = scmp.eq.s32.totalorder %s25, 0
      %p175 = por %p173, %p174
      %p176 = scmp.ne.s32.totalorder %s164, %s165
      %p177 = scmp.eq.s32.totalorder %s26, 1
      %p178 = por %p176, %p177
      %p180 = scmp.ne.s32.totalorder %s165, %s179
      %p181 = scmp.eq.s32.totalorder %s26, 0
      %p182 = por %p180, %p181
      %s184 = sadd.s32 %s183, 1
      %p187 = scmp.eq.s32.totalorder %s20, 1
      %p188 = scmp.ne.s32.totalorder %s183, %s185
      %p189 = scmp.eq.s32.totalorder %s20, 0
      %p190 = por %p188, %p189
      %p191 = scmp.ne.s32.totalorder %s183, %s185
      %p192 = scmp.eq.s32.totalorder %s25, 1
      %p193 = por %p191, %p192
      %p194 = scmp.ne.s32.totalorder %s185, %s186
      %p195 = scmp.eq.s32.totalorder %s25, 0
      %p196 = por %p194, %p195
      %p197 = scmp.ne.s32.totalorder %s185, %s186
      %p198 = scmp.eq.s32.totalorder %s26, 1
      %p199 = por %p197, %p198
      %p201 = scmp.ne.s32.totalorder %s186, %s200
      %p202 = scmp.eq.s32.totalorder %s26, 0
      %p203 = por %p201, %p202
      %s205 = sadd.s32 %s204, 1
      %p208 = scmp.eq.s32.totalorder %s20, 1
      %p209 = scmp.ne.s32.totalorder %s204, %s206
      %p210 = scmp.eq.s32.totalorder %s20, 0
      %p211 = por %p209, %p210
      %p212 = scmp.ne.s32.totalorder %s204, %s206
      %p213 = scmp.eq.s32.totalorder %s25, 1
      %p214 = por %p212, %p213
      %p215 = scmp.ne.s32.totalorder %s206, %s207
      %p216 = scmp.eq.s32.totalorder %s25, 0
      %p217 = por %p215, %p216
      %p218 = scmp.ne.s32.totalorder %s206, %s207
      %p219 = scmp.eq.s32.totalorder %s26, 1
      %p220 = por %p218, %p219
      %p222 = scmp.ne.s32.totalorder %s207, %s221
      %p223 = scmp.eq.s32.totalorder %s26, 0
      %p224 = por %p222, %p223
      %s226 = sadd.s32 %s225, 1
      %p229 = scmp.eq.s32.totalorder %s20, 1
      %p230 = scmp.ne.s32.totalorder %s225, %s227
      %p231 = scmp.eq.s32.totalorder %s20, 0
      %p232 = por %p230, %p231
      %p233 = scmp.ne.s32.totalorder %s225, %s227
      %p234 = scmp.eq.s32.totalorder %s25, 1
      %p235 = por %p233, %p234
      %p236 = scmp.ne.s32.totalorder %s227, %s228
      %p237 = scmp.eq.s32.totalorder %s25, 0
      %p238 = por %p236, %p237
      %p239 = scmp.ne.s32.totalorder %s227, %s228
      %p240 = scmp.eq.s32.totalorder %s26, 1
      %p241 = por %p239, %p240
      %p243 = scmp.ne.s32.totalorder %s228, %s242
      %p244 = scmp.eq.s32.totalorder %s26, 0
      %p245 = por %p243, %p244
      %s247 = sadd.s32 %s246, 1
      %p250 = scmp.eq.s32.totalorder %s20, 1
      %p251 = scmp.ne.s32.totalorder %s246, %s248
      %p252 = scmp.eq.s32.totalorder %s20, 0
      %p253 = por %p251, %p252
      %p254 = scmp.ne.s32.totalorder %s246, %s248
      %p255 = scmp.eq.s32.totalorder %s25, 1
      %p256 = por %p254, %p255
      %p257 = scmp.ne.s32.totalorder %s248, %s249
      %p258 = scmp.eq.s32.totalorder %s25, 0
      %p259 = por %p257, %p258
      %p260 = scmp.ne.s32.totalorder %s248, %s249
      %p261 = scmp.eq.s32.totalorder %s26, 1
      %p262 = por %p260, %p261
      %p264 = scmp.ne.s32.totalorder %s249, %s263
      %p265 = scmp.eq.s32.totalorder %s26, 0
      %p266 = por %p264, %p265
      %s268 = sadd.s32 %s267, 1
      %p271 = scmp.eq.s32.totalorder %s20, 1
      %p272 = scmp.ne.s32.totalorder %s267, %s269
      %p273 = scmp.eq.s32.totalorder %s20, 0
      %p274 = por %p272, %p273
      %p275 = scmp.ne.s32.totalorder %s267, %s269
      %p276 = scmp.eq.s32.totalorder %s25, 1
      %p277 = por %p275, %p276
      %p278 = scmp.ne.s32.totalorder %s269, %s270
      %p279 = scmp.eq.s32.totalorder %s25, 0
      %p280 = por %p278, %p279
      %p281 = scmp.ne.s32.totalorder %s269, %s270
      %p282 = scmp.eq.s32.totalorder %s26, 1
      %p283 = por %p281, %p282
      %p285 = scmp.ne.s32.totalorder %s270, %s284
      %p286 = scmp.eq.s32.totalorder %s26, 0
      %p287 = por %p285, %p286
      %s288 = ssub.s32 %s27, %s39
      %s289 = ssub.s32 %s28, %s35
      %s290 = sor.u32 %s288, %s289
      %p291 = scmp.eq.s32.totalorder %s290, 0
      %s293 = sadd.s32 %s292, 1
      %s294 = scalar_select %p291, %s292, %s293
      %p297 = pneg %p291
      %p298 = scmp.eq.s32.totalorder %s20, 1
      %p299 = por %p297, %p298
      %p300 = scmp.ne.s32.totalorder %s292, %s295
      %p301 = scmp.eq.s32.totalorder %s20, 0
      %p302 = por %p300, %p301
      %p303 = scmp.ne.s32.totalorder %s292, %s295
      %p304 = scmp.eq.s32.totalorder %s25, 1
      %p305 = por %p303, %p304
      %p306 = scmp.ne.s32.totalorder %s295, %s296
      %p307 = scmp.eq.s32.totalorder %s25, 0
      %p308 = por %p306, %p307
      %p309 = scmp.ne.s32.totalorder %s295, %s296
      %p310 = scmp.eq.s32.totalorder %s26, 1
      %p311 = por %p309, %p310
      %p313 = scmp.ne.s32.totalorder %s296, %s312
      %p314 = scmp.eq.s32.totalorder %s26, 0
      %p315 = por %p313, %p314
      %p316 = scmp.le.s32.totalorder 1, %s20
      %p317 = scmp.lt.s32.totalorder %s20, 3
      %p318 = pnand %p316, %p317
      %p319 = pneg %p318
      // Predicated region
      $region9: #{tpu_custom_call.1} parent=5 // pred_check
        _
      $region10: #{tpu_custom_call.1} parent=5 // pred_check_branch
        %321 = sbr.rel (%p318) target = $region12
      $region11: #{tpu_custom_call.1} parent=5 // pred_region
        %s322 = ssub.s32 %s20, 1
        // Predicated region
        $region13: #{tpu_custom_call.1} parent=11 // pred_check
          %p323 = pneg %p133
        $region14: #{tpu_custom_call.1} parent=11 // pred_check_branch
          %325 = sbr.rel (%p323) target = $region16
        $region15: #{tpu_custom_call.1} parent=11 // pred_region
          _
        $region16: #{tpu_custom_call.1} parent=11 // pred_fallthru
          _
        // Predicated region
        $region17: #{tpu_custom_call.1} parent=11 // pred_check
          %p326 = pneg %p154
        $region18: #{tpu_custom_call.1} parent=11 // pred_check_branch
          %328 = sbr.rel (%p326) target = $region20
        $region19: #{tpu_custom_call.1} parent=11 // pred_region
          _
        $region20: #{tpu_custom_call.1} parent=11 // pred_fallthru
          _
        // Predicated region
        $region21: #{tpu_custom_call.1} parent=11 // pred_check
          %p329 = pneg %p175
        $region22: #{tpu_custom_call.1} parent=11 // pred_check_branch
          %331 = sbr.rel (%p329) target = $region24
        $region23: #{tpu_custom_call.1} parent=11 // pred_region
          _
        $region24: #{tpu_custom_call.1} parent=11 // pred_fallthru
          _
        // Predicated region
        $region25: #{tpu_custom_call.1} parent=11 // pred_check
          %p332 = pneg %p196
        $region26: #{tpu_custom_call.1} parent=11 // pred_check_branch
          %334 = sbr.rel (%p332) target = $region28
        $region27: #{tpu_custom_call.1} parent=11 // pred_region
          _
        $region28: #{tpu_custom_call.1} parent=11 // pred_fallthru
          _
        // Predicated region
        $region29: #{tpu_custom_call.1} parent=11 // pred_check
          %p335 = pneg %p217
        $region30: #{tpu_custom_call.1} parent=11 // pred_check_branch
          %337 = sbr.rel (%p335) target = $region32
        $region31: #{tpu_custom_call.1} parent=11 // pred_region
          _
        $region32: #{tpu_custom_call.1} parent=11 // pred_fallthru
          _
        // Predicated region
        $region33: #{tpu_custom_call.1} parent=11 // pred_check
          %p338 = pneg %p238
        $region34: #{tpu_custom_call.1} parent=11 // pred_check_branch
          %340 = sbr.rel (%p338) target = $region36
        $region35: #{tpu_custom_call.1} parent=11 // pred_region
          _
        $region36: #{tpu_custom_call.1} parent=11 // pred_fallthru
          _
        // Predicated region
        $region37: #{tpu_custom_call.1} parent=11 // pred_check
          %p341 = pneg %p259
        $region38: #{tpu_custom_call.1} parent=11 // pred_check_branch
          %343 = sbr.rel (%p341) target = $region40
        $region39: #{tpu_custom_call.1} parent=11 // pred_region
          _
        $region40: #{tpu_custom_call.1} parent=11 // pred_fallthru
          _
        // Predicated region
        $region41: #{tpu_custom_call.1} parent=11 // pred_check
          %p344 = pneg %p280
        $region42: #{tpu_custom_call.1} parent=11 // pred_check_branch
          %346 = sbr.rel (%p344) target = $region44
        $region43: #{tpu_custom_call.1} parent=11 // pred_region
          _
        $region44: #{tpu_custom_call.1} parent=11 // pred_fallthru
          _
      $region12: #{tpu_custom_call.1} parent=5 // pred_fallthru
        _
      %p347 = scmp.lt.s32.totalorder %s20, 2
      // Predicated region
      $region45: #{tpu_custom_call.1} parent=5 // pred_check
        %p348 = pneg %p347
      $region46: #{tpu_custom_call.1} parent=5 // pred_check_branch
        %350 = sbr.rel (%p348) target = $region48
      $region47: #{tpu_custom_call.1} parent=5 // pred_region
        // Predicated region
        $region49: #{tpu_custom_call.1} parent=47 // pred_check
          %p351 = pneg %p54
        $region50: #{tpu_custom_call.1} parent=47 // pred_check_branch
          %353 = sbr.rel (%p351) target = $region52
        $region51: #{tpu_custom_call.1} parent=47 // pred_region
          %p354 = scmp.lt.s32.totalorder %s27, 1
          %s355 = scalar_select %p354, %s27, 1
          %p356 = scmp.lt.s32.totalorder %s28, 0
          %s357 = scalar_select %p356, %s28, 0
          %s358 = sadd.s32 %s357, %s355
          %s359 = smul.addr %s358, 8
          %s360 = scalar_lea.vmem %s0, %s359
        $region52: #{tpu_custom_call.1} parent=47 // pred_fallthru
          _
        // Predicated region
        $region53: #{tpu_custom_call.1} parent=47 // pred_check
          %p361 = pneg %p80
        $region54: #{tpu_custom_call.1} parent=47 // pred_check_branch
          %363 = sbr.rel (%p361) target = $region56
        $region55: #{tpu_custom_call.1} parent=47 // pred_region
          %p364 = scmp.lt.s32.totalorder %s27, 1
          %s365 = scalar_select %p364, %s27, 1
          %s366 = smul.addr %s365, 16
          %s367 = smul.addr %s366, 8
          %s368 = scalar_lea.vmem %s1, %s367
        $region56: #{tpu_custom_call.1} parent=47 // pred_fallthru
          _
        // Predicated region
        $region57: #{tpu_custom_call.1} parent=47 // pred_check
          %p369 = pneg %p106
        $region58: #{tpu_custom_call.1} parent=47 // pred_check_branch
          %371 = sbr.rel (%p369) target = $region60
        $region59: #{tpu_custom_call.1} parent=47 // pred_region
          %p372 = scmp.lt.s32.totalorder %s27, 1
          %s373 = scalar_select %p372, %s27, 1
          %s374 = smul.addr %s373, 2
          %s375 = smul.addr %s374, 8
          %s376 = scalar_lea.vmem %s2, %s375
        $region60: #{tpu_custom_call.1} parent=47 // pred_fallthru
          _
      $region48: #{tpu_custom_call.1} parent=5 // pred_fallthru
        _
      %p377 = scmp.le.s32.totalorder 1, %s20
      %p378 = scmp.lt.s32.totalorder %s20, 3
      %p379 = pnand %p377, %p378
      %p380 = pneg %p379
      // Predicated region
      $region61: #{tpu_custom_call.1} parent=5 // pred_check
        _
      $region62: #{tpu_custom_call.1} parent=5 // pred_check_branch
        %382 = sbr.rel (%p379) target = $region64
      $region63: #{tpu_custom_call.1} parent=5 // pred_region
        %s383 = ssub.s32 %s20, 1
        %p384 = scmp.lt.s32.totalorder %s29, 1
        %s385 = scalar_select %p384, %s29, 1
        %p386 = scmp.lt.s32.totalorder %s30, 0
        %s387 = scalar_select %p386, %s30, 0
        %s388 = sadd.s32 %s387, %s385
        %s389 = smul.addr %s388, 8
        %s390 = scalar_lea.vmem %s0, %s389
        %p391 = pneg %p60
        %p392 = pneg %p57
        %p393 = scmp.lt.s32.totalorder %s29, 1
        %s394 = scalar_select %p393, %s29, 1
        %s395 = smul.addr %s394, 16
        %s396 = smul.addr %s395, 8
        %s397 = scalar_lea.vmem %s1, %s396
        %p398 = pneg %p86
        %p399 = pneg %p83
        %p400 = scmp.lt.s32.totalorder %s29, 1
        %s401 = scalar_select %p400, %s29, 1
        %s402 = smul.addr %s401, 2
        %s403 = smul.addr %s402, 8
        %s404 = scalar_lea.vmem %s2, %s403
        %p405 = pneg %p112
        %p406 = pneg %p109
        %p407 = pneg %p133
        %p408 = pneg %p130
        %p409 = pneg %p154
        %p410 = pneg %p151
        %p411 = pneg %p175
        %p412 = pneg %p172
        %p413 = pneg %p196
        %p414 = pneg %p193
        %p415 = pneg %p217
        %p416 = pneg %p214
        %p417 = pneg %p238
        %p418 = pneg %p235
        %p419 = pneg %p259
        %p420 = pneg %p256
        %p421 = pneg %p280
        %p422 = pneg %p277
        %p423 = pneg %p308
        %p424 = pneg %p305
        %s425 = sand.u32 %s295, 1
        %s426 = scalar_lea.sflag [#allocation6], %s425
        %s427 = sand.u32 %s295, 1
        %s428 = smul.addr %s427, 8
        %s429 = scalar_lea.vmem [#allocation5], %s428
        %p430 = scmp.lt.s32.totalorder %s29, 1
        %s431 = scalar_select %p430, %s29, 1
        %p432 = scmp.lt.s32.totalorder %s30, 0
        %s433 = scalar_select %p432, %s30, 0
        %s434 = sadd.s32 %s433, %s431
        %s435 = smul.addr %s434, 8
        %s436 = scalar_lea.vmem %s0, %s435
        %p437 = scmp.lt.s32.totalorder %s29, 1
        %s438 = scalar_select %p437, %s29, 1
        %s439 = smul.addr %s438, 16
        %s440 = smul.addr %s439, 8
        %s441 = scalar_lea.vmem %s1, %s440
        %p442 = scmp.lt.s32.totalorder %s29, 1
        %s443 = scalar_select %p442, %s29, 1
        %s444 = smul.addr %s443, 2
        %s445 = smul.addr %s444, 8
        %s446 = scalar_lea.vmem %s2, %s445
        %p447 = scmp.eq.s32.totalorder %s30, 0
        // Predicated region
        $region65: #{tpu_custom_call.1} parent=63 // pred_check
          %p448 = pneg %p447
        $region66: #{tpu_custom_call.1} parent=63 // pred_check_branch
          %450 = sbr.rel (%p448) target = $region68
        $region67: #{tpu_custom_call.1} parent=63 // pred_region
          %v451 = vld [vmem:[%s5] sm:$0xff]
          %v452 = vld [vmem:[%s5 + $0x8] sm:$0xff]
          %v453 = vld [vmem:[%s5 + $0x10] sm:$0xff]
          %v454 = vld [vmem:[%s5 + $0x18] sm:$0xff]
          %v455 = vld [vmem:[%s446] sm:$0xff]
          %v456 = vld [vmem:[%s446 + $0x8] sm:$0xff]
          %v457 = vld [vmem:[%s6] sm:$0xff]
          %v458 = vld [vmem:[%s6 + $0x8] sm:$0xff]
          %v459 = vld [vmem:[%s6 + $0x10] sm:$0xff]
          %v460 = vld [vmem:[%s6 + $0x18] sm:$0xff]
          %462 = vset.pattern.permute.xlu0 0
          %463 = vperm.xlu0 %462, %v457
          %v464 = vpop.permute.xlu0 %463
          %467 = vset.pattern.permute.xlu0 0
          %468 = vperm.xlu0 %467, %v458
          %v469 = vpop.permute.xlu0 %468
          %472 = vset.pattern.permute.xlu0 0
          %473 = vperm.xlu0 %472, %v459
          %v474 = vpop.permute.xlu0 %473
          %477 = vset.pattern.permute.xlu0 0
          %478 = vperm.xlu0 %477, %v460
          %v479 = vpop.permute.xlu0 %478
          %vm481 = vcmask 130048
          %v483 = vsel %vm481, %v451, 0
          %v486 = vsel %vm481, %v452, 0
          %v489 = vsel %vm481, %v453, 0
          %v492 = vsel %vm481, %v454, 0
          %494 = vmatpush.msra.mxu0 0.0
          %495 = vmatpush.msra.mxu0 0.0
          %496 = vmatpush.msra.mxu0 0.0
          %497 = vmatpush.msra.mxu0 0.0
          %498 = vmatpush.msra.mxu0 0.0
          %499 = vmatpush.msra.mxu0 0.0
          %500 = vmatpush.msra.mxu0 0.0
          %501 = vmatpush.msra.mxu0 0.0
          %502 = vmatpush.msra.mxu0 0.0
          %503 = vmatpush.msra.mxu0 0.0
          %504 = vmatpush.msra.mxu0 0.0
          %505 = vmatpush.msra.mxu0 0.0
          %506 = vmatpush.msra.mxu0 0.0
          %507 = vmatpush.msra.mxu0 0.0
          %508 = vmatpush.msra.mxu0 %v456
          %509 = vmatpush.msra.mxu0 %v455
          %510 = vmatmul.f32.gmra.mxu0 %v483
          %v511 = vpop.f32.mrf.mxu0
          %v512 = vadd.f32 %v464, %v511
          %513 = vmatmul.f32.gmra.mxu0 %v486
          %v514 = vpop.f32.mrf.mxu0
          %v515 = vadd.f32 %v469, %v514
          %516 = vmatmul.f32.gmra.mxu0 %v489
          %v517 = vpop.f32.mrf.mxu0
          %v518 = vadd.f32 %v474, %v517
          %519 = vmatmul.f32.gmra.mxu0 %v492
          %v520 = vpop.f32.mrf.mxu0
          %v521 = vadd.f32 %v479, %v520
          %522 = vdwg.mxu0
          %523 = vst [vmem:[#allocation2] sm:$0xff] %v512
          %524 = vst [vmem:[#allocation2 + $0x8] sm:$0xff] %v515
          %525 = vst [vmem:[#allocation2 + $0x10] sm:$0xff] %v518
          %526 = vst [vmem:[#allocation2 + $0x18] sm:$0xff] %v521
          %v527 = vld [vmem:[%s441] sm:$0xff]
          %v528 = vld [vmem:[%s441 + $0x8] sm:$0xff]
          %v529 = vld [vmem:[%s441 + $0x10] sm:$0xff]
          %v530 = vld [vmem:[%s441 + $0x18] sm:$0xff]
          %v531 = vld [vmem:[%s441 + $0x20] sm:$0xff]
          %v532 = vld [vmem:[%s441 + $0x28] sm:$0xff]
          %v533 = vld [vmem:[%s441 + $0x30] sm:$0xff]
          %v534 = vld [vmem:[%s441 + $0x38] sm:$0xff]
          %v535 = vld [vmem:[%s441 + $0x40] sm:$0xff]
          %v536 = vld [vmem:[%s441 + $0x48] sm:$0xff]
          %v537 = vld [vmem:[%s441 + $0x50] sm:$0xff]
          %v538 = vld [vmem:[%s441 + $0x58] sm:$0xff]
          %v539 = vld [vmem:[%s441 + $0x60] sm:$0xff]
          %v540 = vld [vmem:[%s441 + $0x68] sm:$0xff]
          %v541 = vld [vmem:[%s441 + $0x70] sm:$0xff]
          %v542 = vld [vmem:[%s441 + $0x78] sm:$0xff]
          %v543 = vld [vmem:[%s7] sm:$0xff]
          %v544 = vld [vmem:[%s7 + $0x8] sm:$0xff]
          %v545 = vld [vmem:[%s8] sm:$0x1]
          %v547 = vperm.slane %v545, 0
          %v550 = vsel %vm481, %v527, 0
          %v553 = vsel %vm481, %v528, 0
          %v556 = vsel %vm481, %v529, 0
          %v559 = vsel %vm481, %v530, 0
          %v562 = vsel %vm481, %v531, 0
          %v565 = vsel %vm481, %v532, 0
          %v568 = vsel %vm481, %v533, 0
          %v571 = vsel %vm481, %v534, 0
          %v574 = vsel %vm481, %v535, 0
          %v577 = vsel %vm481, %v536, 0
          %v580 = vsel %vm481, %v537, 0
          %v583 = vsel %vm481, %v538, 0
          %v586 = vsel %vm481, %v539, 0
          %v589 = vsel %vm481, %v540, 0
          %v592 = vsel %vm481, %v541, 0
          %v595 = vsel %vm481, %v542, 0
          %597 = vmatpush.msra.mxu0 0.0
          %598 = vmatpush.msra.mxu0 0.0
          %599 = vmatpush.msra.mxu0 0.0
          %600 = vmatpush.msra.mxu0 0.0
          %601 = vmatpush.msra.mxu0 0.0
          %602 = vmatpush.msra.mxu0 0.0
          %603 = vmatpush.msra.mxu0 0.0
          %604 = vmatpush.msra.mxu0 0.0
          %605 = vmatpush.msra.mxu0 0.0
          %606 = vmatpush.msra.mxu0 0.0
          %607 = vmatpush.msra.mxu0 0.0
          %608 = vmatpush.msra.mxu0 0.0
          %609 = vmatpush.msra.mxu0 0.0
          %610 = vmatpush.msra.mxu0 0.0
          %611 = vmatpush.msra.mxu0 %v544
          %612 = vmatpush.msra.mxu0 %v543
          %613 = vmatmul.f32.gmra.mxu0 %v550
          %v614 = vpop.f32.mrf.mxu0
          %v615 = vadd.f32 %v547, %v614
          %616 = vmatmul.f32.gmra.mxu0 %v553
          %v617 = vpop.f32.mrf.mxu0
          %v618 = vadd.f32 %v547, %v617
          %619 = vmatmul.f32.gmra.mxu0 %v556
          %v620 = vpop.f32.mrf.mxu0
          %v621 = vadd.f32 %v547, %v620
          %622 = vmatmul.f32.gmra.mxu0 %v559
          %v623 = vpop.f32.mrf.mxu0
          %v624 = vadd.f32 %v547, %v623
          %625 = vmatmul.f32.gmra.mxu0 %v562
          %v626 = vpop.f32.mrf.mxu0
          %v627 = vadd.f32 %v547, %v626
          %628 = vmatmul.f32.gmra.mxu0 %v565
          %v629 = vpop.f32.mrf.mxu0
          %v630 = vadd.f32 %v547, %v629
          %631 = vmatmul.f32.gmra.mxu0 %v568
          %v632 = vpop.f32.mrf.mxu0
          %v633 = vadd.f32 %v547, %v632
          %634 = vmatmul.f32.gmra.mxu0 %v571
          %v635 = vpop.f32.mrf.mxu0
          %v636 = vadd.f32 %v547, %v635
          %637 = vmatmul.f32.gmra.mxu0 %v574
          %v638 = vpop.f32.mrf.mxu0
          %v639 = vadd.f32 %v547, %v638
          %640 = vmatmul.f32.gmra.mxu0 %v577
          %v641 = vpop.f32.mrf.mxu0
          %v642 = vadd.f32 %v547, %v641
          %643 = vmatmul.f32.gmra.mxu0 %v580
          %v644 = vpop.f32.mrf.mxu0
          %v645 = vadd.f32 %v547, %v644
          %646 = vmatmul.f32.gmra.mxu0 %v583
          %v647 = vpop.f32.mrf.mxu0
          %v648 = vadd.f32 %v547, %v647
          %649 = vmatmul.f32.gmra.mxu0 %v586
          %v650 = vpop.f32.mrf.mxu0
          %v651 = vadd.f32 %v547, %v650
          %652 = vmatmul.f32.gmra.mxu0 %v589
          %v653 = vpop.f32.mrf.mxu0
          %v654 = vadd.f32 %v547, %v653
          %655 = vmatmul.f32.gmra.mxu0 %v592
          %v656 = vpop.f32.mrf.mxu0
          %v657 = vadd.f32 %v547, %v656
          %658 = vmatmul.f32.gmra.mxu0 %v595
          %v659 = vpop.f32.mrf.mxu0
          %v660 = vadd.f32 %v547, %v659
          %661 = vdwg.mxu0
          %vm662 = vcmask 261120
          %663 = vst.msk [vmem:[#allocation3] sm:$0xff] %vm662, %v615
          %664 = vst.msk [vmem:[#allocation3 + $0x8] sm:$0xff] %vm662, %v618
          %665 = vst.msk [vmem:[#allocation3 + $0x10] sm:$0xff] %vm662, %v621
          %666 = vst.msk [vmem:[#allocation3 + $0x18] sm:$0xff] %vm662, %v624
          %667 = vst.msk [vmem:[#allocation3 + $0x20] sm:$0xff] %vm662, %v627
          %668 = vst.msk [vmem:[#allocation3 + $0x28] sm:$0xff] %vm662, %v630
          %669 = vst.msk [vmem:[#allocation3 + $0x30] sm:$0xff] %vm662, %v633
          %670 = vst.msk [vmem:[#allocation3 + $0x38] sm:$0xff] %vm662, %v636
          %671 = vst.msk [vmem:[#allocation3 + $0x40] sm:$0xff] %vm662, %v639
          %672 = vst.msk [vmem:[#allocation3 + $0x48] sm:$0xff] %vm662, %v642
          %673 = vst.msk [vmem:[#allocation3 + $0x50] sm:$0xff] %vm662, %v645
          %674 = vst.msk [vmem:[#allocation3 + $0x58] sm:$0xff] %vm662, %v648
          %675 = vst.msk [vmem:[#allocation3 + $0x60] sm:$0xff] %vm662, %v651
          %676 = vst.msk [vmem:[#allocation3 + $0x68] sm:$0xff] %vm662, %v654
          %677 = vst.msk [vmem:[#allocation3 + $0x70] sm:$0xff] %vm662, %v657
          %678 = vst.msk [vmem:[#allocation3 + $0x78] sm:$0xff] %vm662, %v660
        $region68: #{tpu_custom_call.1} parent=63 // pred_fallthru
          _
        %v679 = vld [vmem:[%s436] sm:$0xff]
        %v680 = vld [vmem:[%s3] sm:$0xff]
        %v681 = vld [vmem:[%s3 + $0x8] sm:$0xff]
        %v682 = vld [vmem:[%s3 + $0x10] sm:$0xff]
        %v683 = vld [vmem:[%s3 + $0x18] sm:$0xff]
        %v684 = vld [vmem:[%s4] sm:$0x1]
        %v686 = vperm.slane %v684, 0
        %vm688 = vcmask 261120
        %v690 = vsel %vm688, %v679, 0
        %692 = vmatpush.msra.mxu0 0.0
        %693 = vmatpush.msra.mxu0 0.0
        %694 = vmatpush.msra.mxu0 0.0
        %695 = vmatpush.msra.mxu0 0.0
        %696 = vmatpush.msra.mxu0 0.0
        %697 = vmatpush.msra.mxu0 0.0
        %698 = vmatpush.msra.mxu0 0.0
        %699 = vmatpush.msra.mxu0 0.0
        %700 = vmatpush.msra.mxu0 0.0
        %701 = vmatpush.msra.mxu0 0.0
        %702 = vmatpush.msra.mxu0 0.0
        %703 = vmatpush.msra.mxu0 0.0
        %704 = vmatpush.msra.mxu0 %v683
        %705 = vmatpush.msra.mxu0 %v682
        %706 = vmatpush.msra.mxu0 %v681
        %707 = vmatpush.msra.mxu0 %v680
        %708 = vmatmul.f32.gmra.mxu0 %v690
        %v709 = vpop.f32.mrf.mxu0
        %v710 = vadd.f32 %v686, %v709
        %711 = vdwg.mxu0
        %v712 = vmul.f32 %v710, 0.35355338
        %v713 = vlaneseq
        %v714 = vand.u32 %v713, 127
        %vm715 = vcmp.lt.s32.totalorder %v714, 8
        %v716 = vsel %vm715, 0.0, -1e+30
        %v717 = vld [vmem:[#allocation2] sm:$0xff]
        %v718 = vld [vmem:[#allocation3] sm:$0xff]
        %v719 = vld [vmem:[#allocation3 + $0x8] sm:$0xff]
        %v720 = vld [vmem:[#allocation3 + $0x10] sm:$0xff]
        %v721 = vld [vmem:[#allocation3 + $0x18] sm:$0xff]
        %v722 = vld [vmem:[#allocation3 + $0x20] sm:$0xff]
        %v723 = vld [vmem:[#allocation3 + $0x28] sm:$0xff]
        %v724 = vld [vmem:[#allocation3 + $0x30] sm:$0xff]
        %v725 = vld [vmem:[#allocation3 + $0x38] sm:$0xff]
        %v726 = vld [vmem:[#allocation3 + $0x40] sm:$0xff]
        %v727 = vld [vmem:[#allocation3 + $0x48] sm:$0xff]
        %v728 = vld [vmem:[#allocation3 + $0x50] sm:$0xff]
        %v729 = vld [vmem:[#allocation3 + $0x58] sm:$0xff]
        %v730 = vld [vmem:[#allocation3 + $0x60] sm:$0xff]
        %v731 = vld [vmem:[#allocation3 + $0x68] sm:$0xff]
        %v732 = vld [vmem:[#allocation3 + $0x70] sm:$0xff]
        %v733 = vld [vmem:[#allocation3 + $0x78] sm:$0xff]
        %vm734 = vcmask 64512
        %v736 = vsel %vm734, %v712, 0
        %738 = vmatpush.msra.mxu0 0.0
        %739 = vmatpush.msra.mxu0 0.0
        %740 = vmatpush.msra.mxu0 0.0
        %741 = vmatpush.msra.mxu0 0.0
        %742 = vmatpush.msra.mxu0 0.0
        %743 = vmatpush.msra.mxu0 0.0
        %744 = vmatpush.msra.mxu0 0.0
        %745 = vmatpush.msra.mxu0 0.0
        %746 = vmatpush.msra.mxu0 0.0
        %747 = vmatpush.msra.mxu0 0.0
        %748 = vmatpush.msra.mxu0 0.0
        %749 = vmatpush.msra.mxu0 0.0
        %750 = vmatpush.msra.mxu0 0.0
        %751 = vmatpush.msra.mxu0 0.0
        %752 = vmatpush.msra.mxu0 0.0
        %753 = vmatpush.msra.mxu0 %v717
        %754 = vmatmul.f32.gmra.mxu0 %v736
        %v755 = vpop.f32.mrf.mxu0
        %v756 = vadd.f32 %v716, %v755
        %757 = vdwg.mxu0
        %758 = vmax.xlane.f32.xlu0 %v756
        %v759 = vpop.xlane.xlu0 %758
        %v760 = vsub.f32 %v756, %v759
        %v761 = vmul.f32 %v760, 1.442695
        %v762 = vpow.pop %v761
        %763 = vadd.xlane.f32.xlu0 %v762
        %v764 = vpop.xlane.xlu0 %763
        %765 = vmatpush.msra.mxu0 %v733
        %766 = vmatpush.msra.mxu0 %v732
        %767 = vmatpush.msra.mxu0 %v731
        %768 = vmatpush.msra.mxu0 %v730
        %769 = vmatpush.msra.mxu0 %v729
        %770 = vmatpush.msra.mxu0 %v728
        %771 = vmatpush.msra.mxu0 %v727
        %772 = vmatpush.msra.mxu0 %v726
        %773 = vmatpush.msra.mxu0 %v725
        %774 = vmatpush.msra.mxu0 %v724
        %775 = vmatpush.msra.mxu0 %v723
        %776 = vmatpush.msra.mxu0 %v722
        %777 = vmatpush.msra.mxu0 %v721
        %778 = vmatpush.msra.mxu0 %v720
        %779 = vmatpush.msra.mxu0 %v719
        %780 = vmatpush.msra.mxu0 %v718
        %781 = vmatmul.f32.gmra.mxu0 %v762
        %v782 = vpop.f32.mrf.mxu0
        %v783 = vadd.f32 0.0, %v782
        %784 = vdwg.mxu0
        %v785 = vrcp.pop %v764
        %v786 = vmul.f32 %v783, %v785
        %787 = vst.msk [vmem:[#allocation4] sm:$0xff] %vm734, %v786
        %v788 = vld [vmem:[#allocation2 + $0x8] sm:$0xff]
        %v789 = vld [vmem:[#allocation3] sm:$0xff]
        %v790 = vld [vmem:[#allocation3 + $0x8] sm:$0xff]
        %v791 = vld [vmem:[#allocation3 + $0x10] sm:$0xff]
        %v792 = vld [vmem:[#allocation3 + $0x18] sm:$0xff]
        %v793 = vld [vmem:[#allocation3 + $0x20] sm:$0xff]
        %v794 = vld [vmem:[#allocation3 + $0x28] sm:$0xff]
        %v795 = vld [vmem:[#allocation3 + $0x30] sm:$0xff]
        %v796 = vld [vmem:[#allocation3 + $0x38] sm:$0xff]
        %v797 = vld [vmem:[#allocation3 + $0x40] sm:$0xff]
        %v798 = vld [vmem:[#allocation3 + $0x48] sm:$0xff]
        %v799 = vld [vmem:[#allocation3 + $0x50] sm:$0xff]
        %v800 = vld [vmem:[#allocation3 + $0x58] sm:$0xff]
        %v801 = vld [vmem:[#allocation3 + $0x60] sm:$0xff]
        %v802 = vld [vmem:[#allocation3 + $0x68] sm:$0xff]
        %v803 = vld [vmem:[#allocation3 + $0x70] sm:$0xff]
        %v804 = vld [vmem:[#allocation3 + $0x78] sm:$0xff]
        %805 = vrot.lane.b32.xlu0 %v712, 120
        %v806 = vpop.permute.xlu0 %805
        %v807 = vsel %vm734, %v806, 0
        %809 = vmatpush.msra.mxu0 0.0
        %810 = vmatpush.msra.mxu0 0.0
        %811 = vmatpush.msra.mxu0 0.0
        %812 = vmatpush.msra.mxu0 0.0
        %813 = vmatpush.msra.mxu0 0.0
        %814 = vmatpush.msra.mxu0 0.0
        %815 = vmatpush.msra.mxu0 0.0
        %816 = vmatpush.msra.mxu0 0.0
        %817 = vmatpush.msra.mxu0 0.0
        %818 = vmatpush.msra.mxu0 0.0
        %819 = vmatpush.msra.mxu0 0.0
        %820 = vmatpush.msra.mxu0 0.0
        %821 = vmatpush.msra.mxu0 0.0
        %822 = vmatpush.msra.mxu0 0.0
        %823 = vmatpush.msra.mxu0 0.0
        %824 = vmatpush.msra.mxu0 %v788
        %825 = vmatmul.f32.gmra.mxu0 %v807
        %v826 = vpop.f32.mrf.mxu0
        %v827 = vadd.f32 %v716, %v826
        %828 = vdwg.mxu0
        %829 = vmax.xlane.f32.xlu0 %v827
        %v830 = vpop.xlane.xlu0 %829
        %v831 = vsub.f32 %v827, %v830
        %v832 = vmul.f32 %v831, 1.442695
        %v833 = vpow.pop %v832
        %834 = vadd.xlane.f32.xlu0 %v833
        %v835 = vpop.xlane.xlu0 %834
        %852 = vrot.lane.b32.xlu0 %v789, 120
        %v853 = vpop.permute.xlu0 %852
        %854 = vrot.lane.b32.xlu0 %v790, 120
        %v855 = vpop.permute.xlu0 %854
        %856 = vrot.lane.b32.xlu0 %v791, 120
        %v857 = vpop.permute.xlu0 %856
        %858 = vrot.lane.b32.xlu0 %v792, 120
        %v859 = vpop.permute.xlu0 %858
        %860 = vrot.lane.b32.xlu0 %v793, 120
        %v861 = vpop.permute.xlu0 %860
        %862 = vrot.lane.b32.xlu0 %v794, 120
        %v863 = vpop.permute.xlu0 %862
        %864 = vrot.lane.b32.xlu0 %v795, 120
        %v865 = vpop.permute.xlu0 %864
        %866 = vrot.lane.b32.xlu0 %v796, 120
        %v867 = vpop.permute.xlu0 %866
        %868 = vrot.lane.b32.xlu0 %v797, 120
        %v869 = vpop.permute.xlu0 %868
        %870 = vrot.lane.b32.xlu0 %v798, 120
        %v871 = vpop.permute.xlu0 %870
        %872 = vrot.lane.b32.xlu0 %v799, 120
        %v873 = vpop.permute.xlu0 %872
        %874 = vrot.lane.b32.xlu0 %v800, 120
        %v875 = vpop.permute.xlu0 %874
        %876 = vrot.lane.b32.xlu0 %v801, 120
        %v877 = vpop.permute.xlu0 %876
        %878 = vrot.lane.b32.xlu0 %v802, 120
        %v879 = vpop.permute.xlu0 %878
        %880 = vrot.lane.b32.xlu0 %v803, 120
        %v881 = vpop.permute.xlu0 %880
        %882 = vrot.lane.b32.xlu0 %v804, 120
        %v883 = vpop.permute.xlu0 %882
        %900 = vmatpush.msra.mxu0 %v883
        %901 = vmatpush.msra.mxu0 %v881
        %902 = vmatpush.msra.mxu0 %v879
        %903 = vmatpush.msra.mxu0 %v877
        %904 = vmatpush.msra.mxu0 %v875
        %905 = vmatpush.msra.mxu0 %v873
        %906 = vmatpush.msra.mxu0 %v871
        %907 = vmatpush.msra.mxu0 %v869
        %908 = vmatpush.msra.mxu0 %v867
        %909 = vmatpush.msra.mxu0 %v865
        %910 = vmatpush.msra.mxu0 %v863
        %911 = vmatpush.msra.mxu0 %v861
        %912 = vmatpush.msra.mxu0 %v859
        %913 = vmatpush.msra.mxu0 %v857
        %914 = vmatpush.msra.mxu0 %v855
        %915 = vmatpush.msra.mxu0 %v853
        %916 = vmatmul.f32.gmra.mxu0 %v833
        %v917 = vpop.f32.mrf.mxu0
        %v918 = vadd.f32 0.0, %v917
        %919 = vdwg.mxu0
        %v920 = vrcp.pop %v835
        %v921 = vmul.f32 %v918, %v920
        %923 = vrot.lane.b32.xlu0 %v921, 8
        %v924 = vpop.permute.xlu0 %923
        %vm926 = vcmask 130112
        %927 = vst.msk [vmem:[#allocation4] sm:$0xff] %vm926, %v924
        %v928 = vld [vmem:[#allocation2 + $0x10] sm:$0xff]
        %v929 = vld [vmem:[#allocation3] sm:$0xff]
        %v930 = vld [vmem:[#allocation3 + $0x8] sm:$0xff]
        %v931 = vld [vmem:[#allocation3 + $0x10] sm:$0xff]
        %v932 = vld [vmem:[#allocation3 + $0x18] sm:$0xff]
        %v933 = vld [vmem:[#allocation3 + $0x20] sm:$0xff]
        %v934 = vld [vmem:[#allocation3 + $0x28] sm:$0xff]
        %v935 = vld [vmem:[#allocation3 + $0x30] sm:$0xff]
        %v936 = vld [vmem:[#allocation3 + $0x38] sm:$0xff]
        %v937 = vld [vmem:[#allocation3 + $0x40] sm:$0xff]
        %v938 = vld [vmem:[#allocation3 + $0x48] sm:$0xff]
        %v939 = vld [vmem:[#allocation3 + $0x50] sm:$0xff]
        %v940 = vld [vmem:[#allocation3 + $0x58] sm:$0xff]
        %v941 = vld [vmem:[#allocation3 + $0x60] sm:$0xff]
        %v942 = vld [vmem:[#allocation3 + $0x68] sm:$0xff]
        %v943 = vld [vmem:[#allocation3 + $0x70] sm:$0xff]
        %v944 = vld [vmem:[#allocation3 + $0x78] sm:$0xff]
        %945 = vrot.lane.b32.xlu0 %v712, 112
        %v946 = vpop.permute.xlu0 %945
        %v947 = vsel %vm734, %v946, 0
        %949 = vmatpush.msra.mxu0 0.0
        %950 = vmatpush.msra.mxu0 0.0
        %951 = vmatpush.msra.mxu0 0.0
        %952 = vmatpush.msra.mxu0 0.0
        %953 = vmatpush.msra.mxu0 0.0
        %954 = vmatpush.msra.mxu0 0.0
        %955 = vmatpush.msra.mxu0 0.0
        %956 = vmatpush.msra.mxu0 0.0
        %957 = vmatpush.msra.mxu0 0.0
        %958 = vmatpush.msra.mxu0 0.0
        %959 = vmatpush.msra.mxu0 0.0
        %960 = vmatpush.msra.mxu0 0.0
        %961 = vmatpush.msra.mxu0 0.0
        %962 = vmatpush.msra.mxu0 0.0
        %963 = vmatpush.msra.mxu0 0.0
        %964 = vmatpush.msra.mxu0 %v928
        %965 = vmatmul.f32.gmra.mxu0 %v947
        %v966 = vpop.f32.mrf.mxu0
        %v967 = vadd.f32 %v716, %v966
        %968 = vdwg.mxu0
        %969 = vmax.xlane.f32.xlu0 %v967
        %v970 = vpop.xlane.xlu0 %969
        %v971 = vsub.f32 %v967, %v970
        %v972 = vmul.f32 %v971, 1.442695
        %v973 = vpow.pop %v972
        %974 = vadd.xlane.f32.xlu0 %v973
        %v975 = vpop.xlane.xlu0 %974
        %992 = vrot.lane.b32.xlu0 %v929, 112
        %v993 = vpop.permute.xlu0 %992
        %994 = vrot.lane.b32.xlu0 %v930, 112
        %v995 = vpop.permute.xlu0 %994
        %996 = vrot.lane.b32.xlu0 %v931, 112
        %v997 = vpop.permute.xlu0 %996
        %998 = vrot.lane.b32.xlu0 %v932, 112
        %v999 = vpop.permute.xlu0 %998
        %1000 = vrot.lane.b32.xlu0 %v933, 112
        %v1001 = vpop.permute.xlu0 %1000
        %1002 = vrot.lane.b32.xlu0 %v934, 112
        %v1003 = vpop.permute.xlu0 %1002
        %1004 = vrot.lane.b32.xlu0 %v935, 112
        %v1005 = vpop.permute.xlu0 %1004
        %1006 = vrot.lane.b32.xlu0 %v936, 112
        %v1007 = vpop.permute.xlu0 %1006
        %1008 = vrot.lane.b32.xlu0 %v937, 112
        %v1009 = vpop.permute.xlu0 %1008
        %1010 = vrot.lane.b32.xlu0 %v938, 112
        %v1011 = vpop.permute.xlu0 %1010
        %1012 = vrot.lane.b32.xlu0 %v939, 112
        %v1013 = vpop.permute.xlu0 %1012
        %1014 = vrot.lane.b32.xlu0 %v940, 112
        %v1015 = vpop.permute.xlu0 %1014
        %1016 = vrot.lane.b32.xlu0 %v941, 112
        %v1017 = vpop.permute.xlu0 %1016
        %1018 = vrot.lane.b32.xlu0 %v942, 112
        %v1019 = vpop.permute.xlu0 %1018
        %1020 = vrot.lane.b32.xlu0 %v943, 112
        %v1021 = vpop.permute.xlu0 %1020
        %1022 = vrot.lane.b32.xlu0 %v944, 112
        %v1023 = vpop.permute.xlu0 %1022
        %1040 = vmatpush.msra.mxu0 %v1023
        %1041 = vmatpush.msra.mxu0 %v1021
        %1042 = vmatpush.msra.mxu0 %v1019
        %1043 = vmatpush.msra.mxu0 %v1017
        %1044 = vmatpush.msra.mxu0 %v1015
        %1045 = vmatpush.msra.mxu0 %v1013
        %1046 = vmatpush.msra.mxu0 %v1011
        %1047 = vmatpush.msra.mxu0 %v1009
        %1048 = vmatpush.msra.mxu0 %v1007
        %1049 = vmatpush.msra.mxu0 %v1005
        %1050 = vmatpush.msra.mxu0 %v1003
        %1051 = vmatpush.msra.mxu0 %v1001
        %1052 = vmatpush.msra.mxu0 %v999
        %1053 = vmatpush.msra.mxu0 %v997
        %1054 = vmatpush.msra.mxu0 %v995
        %1055 = vmatpush.msra.mxu0 %v993
        %1056 = vmatmul.f32.gmra.mxu0 %v973
        %v1057 = vpop.f32.mrf.mxu0
        %v1058 = vadd.f32 0.0, %v1057
        %1059 = vdwg.mxu0
        %v1060 = vrcp.pop %v975
        %v1061 = vmul.f32 %v1058, %v1060
        %1063 = vrot.lane.b32.xlu0 %v1061, 16
        %v1064 = vpop.permute.xlu0 %1063
        %vm1066 = vcmask 195712
        %1067 = vst.msk [vmem:[#allocation4] sm:$0xff] %vm1066, %v1064
        %v1068 = vld [vmem:[#allocation2 + $0x18] sm:$0xff]
        %v1069 = vld [vmem:[#allocation3] sm:$0xff]
        %v1070 = vld [vmem:[#allocation3 + $0x8] sm:$0xff]
        %v1071 = vld [vmem:[#allocation3 + $0x10] sm:$0xff]
        %v1072 = vld [vmem:[#allocation3 + $0x18] sm:$0xff]
        %v1073 = vld [vmem:[#allocation3 + $0x20] sm:$0xff]
        %v1074 = vld [vmem:[#allocation3 + $0x28] sm:$0xff]
        %v1075 = vld [vmem:[#allocation3 + $0x30] sm:$0xff]
        %v1076 = vld [vmem:[#allocation3 + $0x38] sm:$0xff]
        %v1077 = vld [vmem:[#allocation3 + $0x40] sm:$0xff]
        %v1078 = vld [vmem:[#allocation3 + $0x48] sm:$0xff]
        %v1079 = vld [vmem:[#allocation3 + $0x50] sm:$0xff]
        %v1080 = vld [vmem:[#allocation3 + $0x58] sm:$0xff]
        %v1081 = vld [vmem:[#allocation3 + $0x60] sm:$0xff]
        %v1082 = vld [vmem:[#allocation3 + $0x68] sm:$0xff]
        %v1083 = vld [vmem:[#allocation3 + $0x70] sm:$0xff]
        %v1084 = vld [vmem:[#allocation3 + $0x78] sm:$0xff]
        %1085 = vrot.lane.b32.xlu0 %v712, 104
        %v1086 = vpop.permute.xlu0 %1085
        %v1087 = vsel %vm734, %v1086, 0
        %1089 = vmatpush.msra.mxu0 0.0
        %1090 = vmatpush.msra.mxu0 0.0
        %1091 = vmatpush.msra.mxu0 0.0
        %1092 = vmatpush.msra.mxu0 0.0
        %1093 = vmatpush.msra.mxu0 0.0
        %1094 = vmatpush.msra.mxu0 0.0
        %1095 = vmatpush.msra.mxu0 0.0
        %1096 = vmatpush.msra.mxu0 0.0
        %1097 = vmatpush.msra.mxu0 0.0
        %1098 = vmatpush.msra.mxu0 0.0
        %1099 = vmatpush.msra.mxu0 0.0
        %1100 = vmatpush.msra.mxu0 0.0
        %1101 = vmatpush.msra.mxu0 0.0
        %1102 = vmatpush.msra.mxu0 0.0
        %1103 = vmatpush.msra.mxu0 0.0
        %1104 = vmatpush.msra.mxu0 %v1068
        %1105 = vmatmul.f32.gmra.mxu0 %v1087
        %v1106 = vpop.f32.mrf.mxu0
        %v1107 = vadd.f32 %v716, %v1106
        %1108 = vdwg.mxu0
        %1109 = vmax.xlane.f32.xlu0 %v1107
        %v1110 = vpop.xlane.xlu0 %1109
        %v1111 = vsub.f32 %v1107, %v1110
        %v1112 = vmul.f32 %v1111, 1.442695
        %v1113 = vpow.pop %v1112
        %1114 = vadd.xlane.f32.xlu0 %v1113
        %v1115 = vpop.xlane.xlu0 %1114
        %1132 = vrot.lane.b32.xlu0 %v1069, 104
        %v1133 = vpop.permute.xlu0 %1132
        %1134 = vrot.lane.b32.xlu0 %v1070, 104
        %v1135 = vpop.permute.xlu0 %1134
        %1136 = vrot.lane.b32.xlu0 %v1071, 104
        %v1137 = vpop.permute.xlu0 %1136
        %1138 = vrot.lane.b32.xlu0 %v1072, 104
        %v1139 = vpop.permute.xlu0 %1138
        %1140 = vrot.lane.b32.xlu0 %v1073, 104
        %v1141 = vpop.permute.xlu0 %1140
        %1142 = vrot.lane.b32.xlu0 %v1074, 104
        %v1143 = vpop.permute.xlu0 %1142
        %1144 = vrot.lane.b32.xlu0 %v1075, 104
        %v1145 = vpop.permute.xlu0 %1144
        %1146 = vrot.lane.b32.xlu0 %v1076, 104
        %v1147 = vpop.permute.xlu0 %1146
        %1148 = vrot.lane.b32.xlu0 %v1077, 104
        %v1149 = vpop.permute.xlu0 %1148
        %1150 = vrot.lane.b32.xlu0 %v1078, 104
        %v1151 = vpop.permute.xlu0 %1150
        %1152 = vrot.lane.b32.xlu0 %v1079, 104
        %v1153 = vpop.permute.xlu0 %1152
        %1154 = vrot.lane.b32.xlu0 %v1080, 104
        %v1155 = vpop.permute.xlu0 %1154
        %1156 = vrot.lane.b32.xlu0 %v1081, 104
        %v1157 = vpop.permute.xlu0 %1156
        %1158 = vrot.lane.b32.xlu0 %v1082, 104
        %v1159 = vpop.permute.xlu0 %1158
        %1160 = vrot.lane.b32.xlu0 %v1083, 104
        %v1161 = vpop.permute.xlu0 %1160
        %1162 = vrot.lane.b32.xlu0 %v1084, 104
        %v1163 = vpop.permute.xlu0 %1162
        %1180 = vmatpush.msra.mxu0 %v1163
        %1181 = vmatpush.msra.mxu0 %v1161
        %1182 = vmatpush.msra.mxu0 %v1159
        %1183 = vmatpush.msra.mxu0 %v1157
        %1184 = vmatpush.msra.mxu0 %v1155
        %1185 = vmatpush.msra.mxu0 %v1153
        %1186 = vmatpush.msra.mxu0 %v1151
        %1187 = vmatpush.msra.mxu0 %v1149
        %1188 = vmatpush.msra.mxu0 %v1147
        %1189 = vmatpush.msra.mxu0 %v1145
        %1190 = vmatpush.msra.mxu0 %v1143
        %1191 = vmatpush.msra.mxu0 %v1141
        %1192 = vmatpush.msra.mxu0 %v1139
        %1193 = vmatpush.msra.mxu0 %v1137
        %1194 = vmatpush.msra.mxu0 %v1135
        %1195 = vmatpush.msra.mxu0 %v1133
        %1196 = vmatmul.f32.gmra.mxu0 %v1113
        %v1197 = vpop.f32.mrf.mxu0
        %v1198 = vadd.f32 0.0, %v1197
        %1199 = vdwg.mxu0
        %v1200 = vrcp.pop %v1115
        %v1201 = vmul.f32 %v1198, %v1200
        %1203 = vrot.lane.b32.xlu0 %v1201, 24
        %v1204 = vpop.permute.xlu0 %1203
        %vm1206 = vcmask 261312
        %1207 = vst.msk [vmem:[#allocation4] sm:$0xff] %vm1206, %v1204
        %v1208 = vld [vmem:[#allocation4] sm:$0xff]
        %v1209 = vld [vmem:[%s9] sm:$0xff]
        %v1210 = vld [vmem:[%s9 + $0x8] sm:$0xff]
        %v1211 = vld [vmem:[%s9 + $0x10] sm:$0xff]
        %v1212 = vld [vmem:[%s9 + $0x18] sm:$0xff]
        %v1213 = vld [vmem:[%s10] sm:$0x1]
        %v1215 = vperm.slane %v1213, 0
        %v1218 = vsel %vm688, %v1208, 0
        %1220 = vmatpush.msra.mxu0 0.0
        %1221 = vmatpush.msra.mxu0 0.0
        %1222 = vmatpush.msra.mxu0 0.0
        %1223 = vmatpush.msra.mxu0 0.0
        %1224 = vmatpush.msra.mxu0 0.0
        %1225 = vmatpush.msra.mxu0 0.0
        %1226 = vmatpush.msra.mxu0 0.0
        %1227 = vmatpush.msra.mxu0 0.0
        %1228 = vmatpush.msra.mxu0 0.0
        %1229 = vmatpush.msra.mxu0 0.0
        %1230 = vmatpush.msra.mxu0 0.0
        %1231 = vmatpush.msra.mxu0 0.0
        %1232 = vmatpush.msra.mxu0 %v1212
        %1233 = vmatpush.msra.mxu0 %v1211
        %1234 = vmatpush.msra.mxu0 %v1210
        %1235 = vmatpush.msra.mxu0 %v1209
        %1236 = vmatmul.f32.gmra.mxu0 %v1218
        %v1237 = vpop.f32.mrf.mxu0
        %v1238 = vadd.f32 %v1215, %v1237
        %1239 = vdwg.mxu0
        %1240 = vst.msk [vmem:[%s429] sm:$0xff] %vm688, %v1238
        %s1241 = sand.u32 %s295, 1
        %s1242 = scalar_lea.sflag [#allocation6], %s1241
        %s1243 = sand.u32 %s295, 1
        %s1244 = smul.addr %s1243, 8
        %s1245 = scalar_lea.vmem [#allocation5], %s1244
        // Predicated region
        $region69: #{tpu_custom_call.1} parent=63 // pred_check
          %p1246 = pneg %p305
        $region70: #{tpu_custom_call.1} parent=63 // pred_check_branch
          %1248 = sbr.rel (%p1246) target = $region72
        $region71: #{tpu_custom_call.1} parent=63 // pred_region
          %1250 = vsyncadd %s1242, 0
          %s1251 = sadd.s32 %s30, %s29
          %s1252 = smul.addr %s1251, 8
          %s1253 = scalar_lea.hbm %s11, %s1252
          %s1255 = sshll.u32 %s1245, 4
          %s1256 = int_to_ptr.vmem [resolvable:$true] %s1255
          %s1257 = sshll.u32 %s1253, 4
          %s1258 = int_to_ptr.hbm [resolvable:$true] %s1257
          %1260 = dma.vmem_to_hbm [thread:$0]  %s1256, 128, %s1258, %s1242
        $region72: #{tpu_custom_call.1} parent=63 // pred_fallthru
          _
      $region64: #{tpu_custom_call.1} parent=5 // pred_fallthru
        _
      %p1261 = scmp.le.s32.totalorder 2, %s20
      // Predicated region
      $region73: #{tpu_custom_call.1} parent=5 // pred_check
        %p1262 = pneg %p1261
      $region74: #{tpu_custom_call.1} parent=5 // pred_check_branch
        %1264 = sbr.rel (%p1262) target = $region76
      $region75: #{tpu_custom_call.1} parent=5 // pred_region
        %s1265 = ssub.s32 %s20, 2
        // Predicated region
        $region77: #{tpu_custom_call.1} parent=75 // pred_check
          %p1266 = pneg %p311
        $region78: #{tpu_custom_call.1} parent=75 // pred_check_branch
          %1268 = sbr.rel (%p1266) target = $region80
        $region79: #{tpu_custom_call.1} parent=75 // pred_region
          %s1269 = sand.u32 %s296, 1
          %s1270 = scalar_lea.sflag [#allocation6], %s1269
          %s1271 = sand.u32 %s296, 1
          %s1272 = smul.addr %s1271, 8
          %s1273 = scalar_lea.vmem [#allocation5], %s1272
          %1275 = dma.done %s1270, 128
        $region80: #{tpu_custom_call.1} parent=75 // pred_fallthru
          _
      $region76: #{tpu_custom_call.1} parent=5 // pred_fallthru
        _
    $region6: #{tpu_custom_call.1} parent=1 // loop_footer
      %s24 = sadd.s32 1, %s20
    $region7: #{tpu_custom_call.1} parent=1 // loop_footer_branch
      %19 = sbr.rel target = $region3
    $region8: #{tpu_custom_call.1} parent=1 // loop_exit
      _
    %1276 = vsyncpa [#allocation6], 1
    %s1277 = scalar_lea.sflag [#allocation6], 1
    %1278 = vsyncpa %s1277, 1

// kernel: tpu_custom_call.1
$region0: #{tpu_custom_call.1}
  #allocation0 [shape = 'u32[]', space=smem, size = 0x4, offset = 0x4, fixed_abs, tag = 'smem constant byte address 0x4 - core index']
  #allocation1 [shape = 'u32[72,128]{1,0:T(1,128)}', space=vmem, size = 0x9000, scoped, tag = 'internal scratch']
  #allocation2 [shape = 'f32[32,128]{1,0:T(8,128)}', space=vmem, size = 0x4000, scoped, tag = 'scratch operand']
  #allocation3 [shape = 'f32[128,32]{1,0:T(8,128)}', space=vmem, size = 0x10000, scoped, tag = 'scratch operand']
  #allocation4 [shape = 'f32[8,32]{1,0:T(8,128)}', space=vmem, size = 0x1000, scoped, tag = 'scratch operand']
  %s0 = inlined_call_operand.vmem [shape: f32[2,8,32], index: 0, kind: input, shape index: {}]
  %s1 = inlined_call_operand.vmem [shape: f32[2,128,16], index: 1, kind: input, shape index: {}]
  %s2 = inlined_call_operand.vmem [shape: f32[2,16,128], index: 2, kind: input, shape index: {}]
  %s3 = inlined_call_operand.vmem [shape: f32[32,32], index: 3, kind: input, shape index: {}]
  %s4 = inlined_call_operand.vmem [shape: f32[1,32], index: 4, kind: input, shape index: {}]
  %s5 = inlined_call_operand.vmem [shape: f32[32,16], index: 5, kind: input, shape index: {}]
  %s6 = inlined_call_operand.vmem [shape: f32[32,1], index: 6, kind: input, shape index: {}]
  %s7 = inlined_call_operand.vmem [shape: f32[16,32], index: 7, kind: input, shape index: {}]
  %s8 = inlined_call_operand.vmem [shape: f32[1,32], index: 8, kind: input, shape index: {}]
  %s9 = inlined_call_operand.vmem [shape: f32[32,32], index: 9, kind: input, shape index: {}]
  %s10 = inlined_call_operand.vmem [shape: f32[1,32], index: 10, kind: input, shape index: {}]
  %s11 = inlined_call_operand.hbm [shape: f32[2,8,32], index: 11, kind: output, shape index: {}]
  %s12 = sld [smem:[#allocation0]]
  $region81: #{tpu_custom_call.1} parent=0
    _
  %s14 = ssub.s32 1, %s12
  %s15 = scalar_select 0, %s14, %s12
  $region1: #{tpu_custom_call.1} parent=0
    #allocation5 [shape = 'u8[8192]{0}', space=vmem, size = 0x2000, scoped, tag = 'output window, operand 0']
    #allocation6 [shape = 's32[2]{0}', space=sflag, size = 0x8, scoped, tag = 'scoped memory for tpu_custom_call.1']
    %16 = vsyncpa [#allocation6], 0
    %s17 = scalar_lea.sflag [#allocation6], 1
    %18 = vsyncpa %s17, 0
    loop: start=0, step=1, limit=4
    $region2: #{tpu_custom_call.1} parent=1 // loop_pre_header
      _
    $region3: #{tpu_custom_call.1} parent=1 // loop_header
      %s20 = sphi 0, %s24
      %p21 = scmp.ge.s32.totalorder %s20, 4
      %s27 = sphi 0, %s39
      %s28 = sphi 0, %s35
      %s29 = sphi 0, %s27
      %s30 = sphi 0, %s28
      %s31 = sphi 0, %s29
      %s32 = sphi 0, %s30
      %s44 = sphi 0, %s46
      %s47 = sphi 0, %s44
      %s48 = sphi 0, %s47
      %s64 = sphi 0, %s48
      %s70 = sphi 0, %s72
      %s73 = sphi 0, %s70
      %s74 = sphi 0, %s73
      %s90 = sphi 0, %s74
      %s96 = sphi 0, %s98
      %s99 = sphi 0, %s96
      %s100 = sphi 0, %s99
      %s116 = sphi 0, %s100
      %s120 = sphi 0, %s120
      %s122 = sphi 0, %s120
      %s123 = sphi 0, %s122
      %s137 = sphi 0, %s123
      %s141 = sphi 0, %s141
      %s143 = sphi 0, %s141
      %s144 = sphi 0, %s143
      %s158 = sphi 0, %s144
      %s162 = sphi 0, %s162
      %s164 = sphi 0, %s162
      %s165 = sphi 0, %s164
      %s179 = sphi 0, %s165
      %s183 = sphi 0, %s183
      %s185 = sphi 0, %s183
      %s186 = sphi 0, %s185
      %s200 = sphi 0, %s186
      %s204 = sphi 0, %s204
      %s206 = sphi 0, %s204
      %s207 = sphi 0, %s206
      %s221 = sphi 0, %s207
      %s225 = sphi 0, %s225
      %s227 = sphi 0, %s225
      %s228 = sphi 0, %s227
      %s242 = sphi 0, %s228
      %s246 = sphi 0, %s246
      %s248 = sphi 0, %s246
      %s249 = sphi 0, %s248
      %s263 = sphi 0, %s249
      %s267 = sphi 0, %s267
      %s269 = sphi 0, %s267
      %s270 = sphi 0, %s269
      %s284 = sphi 0, %s270
      %s292 = sphi 0, %s294
      %s295 = sphi 0, %s292
      %s296 = sphi 0, %s295
      %s312 = sphi 0, %s296
    $region4: #{tpu_custom_call.1} parent=1 // loop_header_branch
      %23 = sbr.rel (%p21) target = $region8
    $region5: #{tpu_custom_call.1} parent=1 // loop_body
      %s25 = ssub.s32 %s20, 1
      %s26 = ssub.s32 %s20, 2
      %s33 = sadd.s32 1, %s28
      %p34 = scmp.ge.s32.totalorder %s33, 1
      %s35 = scalar_select %p34, 0, %s33
      %s36 = sadd.s32 1, %s27
      %s37 = scalar_select %p34, %s36, %s27
      %p38 = scmp.ge.s32.totalorder %s37, 2
      %s39 = scalar_select %p38, 0, %s37
      %s40 = ssub.s32 %s27, %s39
      %s41 = ssub.s32 %s28, %s35
      %s42 = sor.u32 %s40, %s41
      %p43 = scmp.eq.s32.totalorder %s42, 0
      %s45 = sadd.s32 %s44, 1
      %s46 = scalar_select %p43, %s44, %s45
      %p49 = pneg %p43
      %p50 = scmp.eq.s32.totalorder %s20, 1
      %p51 = por %p49, %p50
      %p52 = scmp.ne.s32.totalorder %s44, %s47
      %p53 = scmp.eq.s32.totalorder %s20, 0
      %p54 = por %p52, %p53
      %p55 = scmp.ne.s32.totalorder %s44, %s47
      %p56 = scmp.eq.s32.totalorder %s25, 1
      %p57 = por %p55, %p56
      %p58 = scmp.ne.s32.totalorder %s47, %s48
      %p59 = scmp.eq.s32.totalorder %s25, 0
      %p60 = por %p58, %p59
      %p61 = scmp.ne.s32.totalorder %s47, %s48
      %p62 = scmp.eq.s32.totalorder %s26, 1
      %p63 = por %p61, %p62
      %p65 = scmp.ne.s32.totalorder %s48, %s64
      %p66 = scmp.eq.s32.totalorder %s26, 0
      %p67 = por %p65, %p66
      %s68 = ssub.s32 %s27, %s39
      %p69 = scmp.eq.s32.totalorder %s68, 0
      %s71 = sadd.s32 %s70, 1
      %s72 = scalar_select %p69, %s70, %s71
      %p75 = pneg %p69
      %p76 = scmp.eq.s32.totalorder %s20, 1
      %p77 = por %p75, %p76
      %p78 = scmp.ne.s32.totalorder %s70, %s73
      %p79 = scmp.eq.s32.totalorder %s20, 0
      %p80 = por %p78, %p79
      %p81 = scmp.ne.s32.totalorder %s70, %s73
      %p82 = scmp.eq.s32.totalorder %s25, 1
      %p83 = por %p81, %p82
      %p84 = scmp.ne.s32.totalorder %s73, %s74
      %p85 = scmp.eq.s32.totalorder %s25, 0
      %p86 = por %p84, %p85
      %p87 = scmp.ne.s32.totalorder %s73, %s74
      %p88 = scmp.eq.s32.totalorder %s26, 1
      %p89 = por %p87, %p88
      %p91 = scmp.ne.s32.totalorder %s74, %s90
      %p92 = scmp.eq.s32.totalorder %s26, 0
      %p93 = por %p91, %p92
      %s94 = ssub.s32 %s27, %s39
      %p95 = scmp.eq.s32.totalorder %s94, 0
      %s97 = sadd.s32 %s96, 1
      %s98 = scalar_select %p95, %s96, %s97
      %p101 = pneg %p95
      %p102 = scmp.eq.s32.totalorder %s20, 1
      %p103 = por %p101, %p102
      %p104 = scmp.ne.s32.totalorder %s96, %s99
      %p105 = scmp.eq.s32.totalorder %s20, 0
      %p106 = por %p104, %p105
      %p107 = scmp.ne.s32.totalorder %s96, %s99
      %p108 = scmp.eq.s32.totalorder %s25, 1
      %p109 = por %p107, %p108
      %p110 = scmp.ne.s32.totalorder %s99, %s100
      %p111 = scmp.eq.s32.totalorder %s25, 0
      %p112 = por %p110, %p111
      %p113 = scmp.ne.s32.totalorder %s99, %s100
      %p114 = scmp.eq.s32.totalorder %s26, 1
      %p115 = por %p113, %p114
      %p117 = scmp.ne.s32.totalorder %s100, %s116
      %p118 = scmp.eq.s32.totalorder %s26, 0
      %p119 = por %p117, %p118
      %s121 = sadd.s32 %s120, 1
      %p124 = scmp.eq.s32.totalorder %s20, 1
      %p125 = scmp.ne.s32.totalorder %s120, %s122
      %p126 = scmp.eq.s32.totalorder %s20, 0
      %p127 = por %p125, %p126
      %p128 = scmp.ne.s32.totalorder %s120, %s122
      %p129 = scmp.eq.s32.totalorder %s25, 1
      %p130 = por %p128, %p129
      %p131 = scmp.ne.s32.totalorder %s122, %s123
      %p132 = scmp.eq.s32.totalorder %s25, 0
      %p133 = por %p131, %p132
      %p134 = scmp.ne.s32.totalorder %s122, %s123
      %p135 = scmp.eq.s32.totalorder %s26, 1
      %p136 = por %p134, %p135
      %p138 = scmp.ne.s32.totalorder %s123, %s137
      %p139 = scmp.eq.s32.totalorder %s26, 0
      %p140 = por %p138, %p139
      %s142 = sadd.s32 %s141, 1
      %p145 = scmp.eq.s32.totalorder %s20, 1
      %p146 = scmp.ne.s32.totalorder %s141, %s143
      %p147 = scmp.eq.s32.totalorder %s20, 0
      %p148 = por %p146, %p147
      %p149 = scmp.ne.s32.totalorder %s141, %s143
      %p150 = scmp.eq.s32.totalorder %s25, 1
      %p151 = por %p149, %p150
      %p152 = scmp.ne.s32.totalorder %s143, %s144
      %p153 = scmp.eq.s32.totalorder %s25, 0
      %p154 = por %p152, %p153
      %p155 = scmp.ne.s32.totalorder %s143, %s144
      %p156 = scmp.eq.s32.totalorder %s26, 1
      %p157 = por %p155, %p156
      %p159 = scmp.ne.s32.totalorder %s144, %s158
      %p160 = scmp.eq.s32.totalorder %s26, 0
      %p161 = por %p159, %p160
      %s163 = sadd.s32 %s162, 1
      %p166 = scmp.eq.s32.totalorder %s20, 1
      %p167 = scmp.ne.s32.totalorder %s162, %s164
      %p168 = scmp.eq.s32.totalorder %s20, 0
      %p169 = por %p167, %p168
      %p170 = scmp.ne.s32.totalorder %s162, %s164
      %p171 = scmp.eq.s32.totalorder %s25, 1
      %p172 = por %p170, %p171
      %p173 = scmp.ne.s32.totalorder %s164, %s165
      %p174 = scmp.eq.s32.totalorder %s25, 0
      %p175 = por %p173, %p174
      %p176 = scmp.ne.s32.totalorder %s164, %s165
      %p177 = scmp.eq.s32.totalorder %s26, 1
      %p178 = por %p176, %p177
      %p180 = scmp.ne.s32.totalorder %s165, %s179
      %p181 = scmp.eq.s32.totalorder %s26, 0
      %p182 = por %p180, %p181
      %s184 = sadd.s32 %s183, 1
      %p187 = scmp.eq.s32.totalorder %s20, 1
      %p188 = scmp.ne.s32.totalorder %s183, %s185
      %p189 = scmp.eq.s32.totalorder %s20, 0
      %p190 = por %p188, %p189
      %p191 = scmp.ne.s32.totalorder %s183, %s185
      %p192 = scmp.eq.s32.totalorder %s25, 1
      %p193 = por %p191, %p192
      %p194 = scmp.ne.s32.totalorder %s185, %s186
      %p195 = scmp.eq.s32.totalorder %s25, 0
      %p196 = por %p194, %p195
      %p197 = scmp.ne.s32.totalorder %s185, %s186
      %p198 = scmp.eq.s32.totalorder %s26, 1
      %p199 = por %p197, %p198
      %p201 = scmp.ne.s32.totalorder %s186, %s200
      %p202 = scmp.eq.s32.totalorder %s26, 0
      %p203 = por %p201, %p202
      %s205 = sadd.s32 %s204, 1
      %p208 = scmp.eq.s32.totalorder %s20, 1
      %p209 = scmp.ne.s32.totalorder %s204, %s206
      %p210 = scmp.eq.s32.totalorder %s20, 0
      %p211 = por %p209, %p210
      %p212 = scmp.ne.s32.totalorder %s204, %s206
      %p213 = scmp.eq.s32.totalorder %s25, 1
      %p214 = por %p212, %p213
      %p215 = scmp.ne.s32.totalorder %s206, %s207
      %p216 = scmp.eq.s32.totalorder %s25, 0
      %p217 = por %p215, %p216
      %p218 = scmp.ne.s32.totalorder %s206, %s207
      %p219 = scmp.eq.s32.totalorder %s26, 1
      %p220 = por %p218, %p219
      %p222 = scmp.ne.s32.totalorder %s207, %s221
      %p223 = scmp.eq.s32.totalorder %s26, 0
      %p224 = por %p222, %p223
      %s226 = sadd.s32 %s225, 1
      %p229 = scmp.eq.s32.totalorder %s20, 1
      %p230 = scmp.ne.s32.totalorder %s225, %s227
      %p231 = scmp.eq.s32.totalorder %s20, 0
      %p232 = por %p230, %p231
      %p233 = scmp.ne.s32.totalorder %s225, %s227
      %p234 = scmp.eq.s32.totalorder %s25, 1
      %p235 = por %p233, %p234
      %p236 = scmp.ne.s32.totalorder %s227, %s228
      %p237 = scmp.eq.s32.totalorder %s25, 0
      %p238 = por %p236, %p237
      %p239 = scmp.ne.s32.totalorder %s227, %s228
      %p240 = scmp.eq.s32.totalorder %s26, 1
      %p241 = por %p239, %p240
      %p243 = scmp.ne.s32.totalorder %s228, %s242
      %p244 = scmp.eq.s32.totalorder %s26, 0
      %p245 = por %p243, %p244
      %s247 = sadd.s32 %s246, 1
      %p250 = scmp.eq.s32.totalorder %s20, 1
      %p251 = scmp.ne.s32.totalorder %s246, %s248
      %p252 = scmp.eq.s32.totalorder %s20, 0
      %p253 = por %p251, %p252
      %p254 = scmp.ne.s32.totalorder %s246, %s248
      %p255 = scmp.eq.s32.totalorder %s25, 1
      %p256 = por %p254, %p255
      %p257 = scmp.ne.s32.totalorder %s248, %s249
      %p258 = scmp.eq.s32.totalorder %s25, 0
      %p259 = por %p257, %p258
      %p260 = scmp.ne.s32.totalorder %s248, %s249
      %p261 = scmp.eq.s32.totalorder %s26, 1
      %p262 = por %p260, %p261
      %p264 = scmp.ne.s32.totalorder %s249, %s263
      %p265 = scmp.eq.s32.totalorder %s26, 0
      %p266 = por %p264, %p265
      %s268 = sadd.s32 %s267, 1
      %p271 = scmp.eq.s32.totalorder %s20, 1
      %p272 = scmp.ne.s32.totalorder %s267, %s269
      %p273 = scmp.eq.s32.totalorder %s20, 0
      %p274 = por %p272, %p273
      %p275 = scmp.ne.s32.totalorder %s267, %s269
      %p276 = scmp.eq.s32.totalorder %s25, 1
      %p277 = por %p275, %p276
      %p278 = scmp.ne.s32.totalorder %s269, %s270
      %p279 = scmp.eq.s32.totalorder %s25, 0
      %p280 = por %p278, %p279
      %p281 = scmp.ne.s32.totalorder %s269, %s270
      %p282 = scmp.eq.s32.totalorder %s26, 1
      %p283 = por %p281, %p282
      %p285 = scmp.ne.s32.totalorder %s270, %s284
      %p286 = scmp.eq.s32.totalorder %s26, 0
      %p287 = por %p285, %p286
      %s288 = ssub.s32 %s27, %s39
      %s289 = ssub.s32 %s28, %s35
      %s290 = sor.u32 %s288, %s289
      %p291 = scmp.eq.s32.totalorder %s290, 0
      %s293 = sadd.s32 %s292, 1
      %s294 = scalar_select %p291, %s292, %s293
      %p297 = pneg %p291
      %p298 = scmp.eq.s32.totalorder %s20, 1
      %p299 = por %p297, %p298
      %p300 = scmp.ne.s32.totalorder %s292, %s295
      %p301 = scmp.eq.s32.totalorder %s20, 0
      %p302 = por %p300, %p301
      %p303 = scmp.ne.s32.totalorder %s292, %s295
      %p304 = scmp.eq.s32.totalorder %s25, 1
      %p305 = por %p303, %p304
      %p306 = scmp.ne.s32.totalorder %s295, %s296
      %p307 = scmp.eq.s32.totalorder %s25, 0
      %p308 = por %p306, %p307
      %p309 = scmp.ne.s32.totalorder %s295, %s296
      %p310 = scmp.eq.s32.totalorder %s26, 1
      %p311 = por %p309, %p310
      %p313 = scmp.ne.s32.totalorder %s296, %s312
      %p314 = scmp.eq.s32.totalorder %s26, 0
      %p315 = por %p313, %p314
      %p316 = scmp.le.s32.totalorder 1, %s20
      %p317 = scmp.lt.s32.totalorder %s20, 3
      %p318 = pnand %p316, %p317
      %p319 = pneg %p318
      // Predicated region
      $region9: #{tpu_custom_call.1} parent=5 // pred_check
        _
      $region10: #{tpu_custom_call.1} parent=5 // pred_check_branch
        %321 = sbr.rel (%p318) target = $region12
      $region11: #{tpu_custom_call.1} parent=5 // pred_region
        %s322 = ssub.s32 %s20, 1
        // Predicated region
        $region13: #{tpu_custom_call.1} parent=11 // pred_check
          %p323 = pneg %p133
        $region14: #{tpu_custom_call.1} parent=11 // pred_check_branch
          %325 = sbr.rel (%p323) target = $region16
        $region15: #{tpu_custom_call.1} parent=11 // pred_region
          _
        $region16: #{tpu_custom_call.1} parent=11 // pred_fallthru
          _
        // Predicated region
        $region17: #{tpu_custom_call.1} parent=11 // pred_check
          %p326 = pneg %p154
        $region18: #{tpu_custom_call.1} parent=11 // pred_check_branch
          %328 = sbr.rel (%p326) target = $region20
        $region19: #{tpu_custom_call.1} parent=11 // pred_region
          _
        $region20: #{tpu_custom_call.1} parent=11 // pred_fallthru
          _
        // Predicated region
        $region21: #{tpu_custom_call.1} parent=11 // pred_check
          %p329 = pneg %p175
        $region22: #{tpu_custom_call.1} parent=11 // pred_check_branch
          %331 = sbr.rel (%p329) target = $region24
        $region23: #{tpu_custom_call.1} parent=11 // pred_region
          _
        $region24: #{tpu_custom_call.1} parent=11 // pred_fallthru
          _
        // Predicated region
        $region25: #{tpu_custom_call.1} parent=11 // pred_check
          %p332 = pneg %p196
        $region26: #{tpu_custom_call.1} parent=11 // pred_check_branch
          %334 = sbr.rel (%p332) target = $region28
        $region27: #{tpu_custom_call.1} parent=11 // pred_region
          _
        $region28: #{tpu_custom_call.1} parent=11 // pred_fallthru
          _
        // Predicated region
        $region29: #{tpu_custom_call.1} parent=11 // pred_check
          %p335 = pneg %p217
        $region30: #{tpu_custom_call.1} parent=11 // pred_check_branch
          %337 = sbr.rel (%p335) target = $region32
        $region31: #{tpu_custom_call.1} parent=11 // pred_region
          _
        $region32: #{tpu_custom_call.1} parent=11 // pred_fallthru
          _
        // Predicated region
        $region33: #{tpu_custom_call.1} parent=11 // pred_check
          %p338 = pneg %p238
        $region34: #{tpu_custom_call.1} parent=11 // pred_check_branch
          %340 = sbr.rel (%p338) target = $region36
        $region35: #{tpu_custom_call.1} parent=11 // pred_region
          _
        $region36: #{tpu_custom_call.1} parent=11 // pred_fallthru
          _
        // Predicated region
        $region37: #{tpu_custom_call.1} parent=11 // pred_check
          %p341 = pneg %p259
        $region38: #{tpu_custom_call.1} parent=11 // pred_check_branch
          %343 = sbr.rel (%p341) target = $region40
        $region39: #{tpu_custom_call.1} parent=11 // pred_region
          _
        $region40: #{tpu_custom_call.1} parent=11 // pred_fallthru
          _
        // Predicated region
        $region41: #{tpu_custom_call.1} parent=11 // pred_check
          %p344 = pneg %p280
        $region42: #{tpu_custom_call.1} parent=11 // pred_check_branch
          %346 = sbr.rel (%p344) target = $region44
        $region43: #{tpu_custom_call.1} parent=11 // pred_region
          _
        $region44: #{tpu_custom_call.1} parent=11 // pred_fallthru
          _
      $region12: #{tpu_custom_call.1} parent=5 // pred_fallthru
        _
      %p347 = scmp.lt.s32.totalorder %s20, 2
      // Predicated region
      $region45: #{tpu_custom_call.1} parent=5 // pred_check
        %p348 = pneg %p347
      $region46: #{tpu_custom_call.1} parent=5 // pred_check_branch
        %350 = sbr.rel (%p348) target = $region48
      $region47: #{tpu_custom_call.1} parent=5 // pred_region
        // Predicated region
        $region49: #{tpu_custom_call.1} parent=47 // pred_check
          %p351 = pneg %p54
        $region50: #{tpu_custom_call.1} parent=47 // pred_check_branch
          %353 = sbr.rel (%p351) target = $region52
        $region51: #{tpu_custom_call.1} parent=47 // pred_region
          %p354 = scmp.lt.s32.totalorder %s27, 1
          %s355 = scalar_select %p354, %s27, 1
          %p356 = scmp.lt.s32.totalorder %s28, 0
          %s357 = scalar_select %p356, %s28, 0
          %s358 = sadd.s32 %s357, %s355
          %s359 = smul.addr %s358, 8
          %s360 = scalar_lea.vmem %s0, %s359
        $region52: #{tpu_custom_call.1} parent=47 // pred_fallthru
          _
        // Predicated region
        $region53: #{tpu_custom_call.1} parent=47 // pred_check
          %p361 = pneg %p80
        $region54: #{tpu_custom_call.1} parent=47 // pred_check_branch
          %363 = sbr.rel (%p361) target = $region56
        $region55: #{tpu_custom_call.1} parent=47 // pred_region
          %p364 = scmp.lt.s32.totalorder %s27, 1
          %s365 = scalar_select %p364, %s27, 1
          %s366 = smul.addr %s365, 16
          %s367 = smul.addr %s366, 8
          %s368 = scalar_lea.vmem %s1, %s367
        $region56: #{tpu_custom_call.1} parent=47 // pred_fallthru
          _
        // Predicated region
        $region57: #{tpu_custom_call.1} parent=47 // pred_check
          %p369 = pneg %p106
        $region58: #{tpu_custom_call.1} parent=47 // pred_check_branch
          %371 = sbr.rel (%p369) target = $region60
        $region59: #{tpu_custom_call.1} parent=47 // pred_region
          %p372 = scmp.lt.s32.totalorder %s27, 1
          %s373 = scalar_select %p372, %s27, 1
          %s374 = smul.addr %s373, 2
          %s375 = smul.addr %s374, 8
          %s376 = scalar_lea.vmem %s2, %s375
        $region60: #{tpu_custom_call.1} parent=47 // pred_fallthru
          _
      $region48: #{tpu_custom_call.1} parent=5 // pred_fallthru
        _
      %p377 = scmp.le.s32.totalorder 1, %s20
      %p378 = scmp.lt.s32.totalorder %s20, 3
      %p379 = pnand %p377, %p378
      %p380 = pneg %p379
      // Predicated region
      $region61: #{tpu_custom_call.1} parent=5 // pred_check
        _
      $region62: #{tpu_custom_call.1} parent=5 // pred_check_branch
        %382 = sbr.rel (%p379) target = $region64
      $region63: #{tpu_custom_call.1} parent=5 // pred_region
        %s383 = ssub.s32 %s20, 1
        %p384 = scmp.lt.s32.totalorder %s29, 1
        %s385 = scalar_select %p384, %s29, 1
        %p386 = scmp.lt.s32.totalorder %s30, 0
        %s387 = scalar_select %p386, %s30, 0
        %s388 = sadd.s32 %s387, %s385
        %s389 = smul.addr %s388, 8
        %s390 = scalar_lea.vmem %s0, %s389
        %p391 = pneg %p60
        %p392 = pneg %p57
        %p393 = scmp.lt.s32.totalorder %s29, 1
        %s394 = scalar_select %p393, %s29, 1
        %s395 = smul.addr %s394, 16
        %s396 = smul.addr %s395, 8
        %s397 = scalar_lea.vmem %s1, %s396
        %p398 = pneg %p86
        %p399 = pneg %p83
        %p400 = scmp.lt.s32.totalorder %s29, 1
        %s401 = scalar_select %p400, %s29, 1
        %s402 = smul.addr %s401, 2
        %s403 = smul.addr %s402, 8
        %s404 = scalar_lea.vmem %s2, %s403
        %p405 = pneg %p112
        %p406 = pneg %p109
        %p407 = pneg %p133
        %p408 = pneg %p130
        %p409 = pneg %p154
        %p410 = pneg %p151
        %p411 = pneg %p175
        %p412 = pneg %p172
        %p413 = pneg %p196
        %p414 = pneg %p193
        %p415 = pneg %p217
        %p416 = pneg %p214
        %p417 = pneg %p238
        %p418 = pneg %p235
        %p419 = pneg %p259
        %p420 = pneg %p256
        %p421 = pneg %p280
        %p422 = pneg %p277
        %p423 = pneg %p308
        %p424 = pneg %p305
        %s425 = sand.u32 %s295, 1
        %s426 = scalar_lea.sflag [#allocation6], %s425
        %s427 = sand.u32 %s295, 1
        %s428 = smul.addr %s427, 8
        %s429 = scalar_lea.vmem [#allocation5], %s428
        %p430 = scmp.lt.s32.totalorder %s29, 1
        %s431 = scalar_select %p430, %s29, 1
        %p432 = scmp.lt.s32.totalorder %s30, 0
        %s433 = scalar_select %p432, %s30, 0
        %s434 = sadd.s32 %s433, %s431
        %s435 = smul.addr %s434, 8
        %s436 = scalar_lea.vmem %s0, %s435
        %p437 = scmp.lt.s32.totalorder %s29, 1
        %s438 = scalar_select %p437, %s29, 1
        %s439 = smul.addr %s438, 16
        %s440 = smul.addr %s439, 8
        %s441 = scalar_lea.vmem %s1, %s440
        %p442 = scmp.lt.s32.totalorder %s29, 1
        %s443 = scalar_select %p442, %s29, 1
        %s444 = smul.addr %s443, 2
        %s445 = smul.addr %s444, 8
        %s446 = scalar_lea.vmem %s2, %s445
        %p447 = scmp.eq.s32.totalorder %s30, 0
        // Predicated region
        $region65: #{tpu_custom_call.1} parent=63 // pred_check
          %p448 = pneg %p447
        $region66: #{tpu_custom_call.1} parent=63 // pred_check_branch
          %450 = sbr.rel (%p448) target = $region68
        $region67: #{tpu_custom_call.1} parent=63 // pred_region
          %v451 = vld [vmem:[%s5] sm:$0xff]
          %v452 = vld [vmem:[%s5 + $0x8] sm:$0xff]
          %v453 = vld [vmem:[%s5 + $0x10] sm:$0xff]
          %v454 = vld [vmem:[%s5 + $0x18] sm:$0xff]
          %v455 = vld [vmem:[%s446] sm:$0xff]
          %v456 = vld [vmem:[%s446 + $0x8] sm:$0xff]
          %v457 = vld [vmem:[%s6] sm:$0xff]
          %v458 = vld [vmem:[%s6 + $0x8] sm:$0xff]
          %v459 = vld [vmem:[%s6 + $0x10] sm:$0xff]
          %v460 = vld [vmem:[%s6 + $0x18] sm:$0xff]
          %462 = vset.pattern.permute.xlu0 0
          %463 = vperm.xlu0 %462, %v457
          %v464 = vpop.permute.xlu0 %463
          %467 = vset.pattern.permute.xlu0 0
          %468 = vperm.xlu0 %467, %v458
          %v469 = vpop.permute.xlu0 %468
          %472 = vset.pattern.permute.xlu0 0
          %473 = vperm.xlu0 %472, %v459
          %v474 = vpop.permute.xlu0 %473
          %477 = vset.pattern.permute.xlu0 0
          %478 = vperm.xlu0 %477, %v460
          %v479 = vpop.permute.xlu0 %478
          %vm481 = vcmask 130048
          %v483 = vsel %vm481, %v451, 0
          %v486 = vsel %vm481, %v452, 0
          %v489 = vsel %vm481, %v453, 0
          %v492 = vsel %vm481, %v454, 0
          %494 = vmatpush.msra.mxu0 0.0
          %495 = vmatpush.msra.mxu0 0.0
          %496 = vmatpush.msra.mxu0 0.0
          %497 = vmatpush.msra.mxu0 0.0
          %498 = vmatpush.msra.mxu0 0.0
          %499 = vmatpush.msra.mxu0 0.0
          %500 = vmatpush.msra.mxu0 0.0
          %501 = vmatpush.msra.mxu0 0.0
          %502 = vmatpush.msra.mxu0 0.0
          %503 = vmatpush.msra.mxu0 0.0
          %504 = vmatpush.msra.mxu0 0.0
          %505 = vmatpush.msra.mxu0 0.0
          %506 = vmatpush.msra.mxu0 0.0
          %507 = vmatpush.msra.mxu0 0.0
          %508 = vmatpush.msra.mxu0 %v456
          %509 = vmatpush.msra.mxu0 %v455
          %510 = vmatmul.f32.gmra.mxu0 %v483
          %v511 = vpop.f32.mrf.mxu0
          %v512 = vadd.f32 %v464, %v511
          %513 = vmatmul.f32.gmra.mxu0 %v486
          %v514 = vpop.f32.mrf.mxu0
          %v515 = vadd.f32 %v469, %v514
          %516 = vmatmul.f32.gmra.mxu0 %v489
          %v517 = vpop.f32.mrf.mxu0
          %v518 = vadd.f32 %v474, %v517
          %519 = vmatmul.f32.gmra.mxu0 %v492
          %v520 = vpop.f32.mrf.mxu0
          %v521 = vadd.f32 %v479, %v520
          %522 = vdwg.mxu0
          %523 = vst [vmem:[#allocation2] sm:$0xff] %v512
          %524 = vst [vmem:[#allocation2 + $0x8] sm:$0xff] %v515
          %525 = vst [vmem:[#allocation2 + $0x10] sm:$0xff] %v518
          %526 = vst [vmem:[#allocation2 + $0x18] sm:$0xff] %v521
          %v527 = vld [vmem:[%s441] sm:$0xff]
          %v528 = vld [vmem:[%s441 + $0x8] sm:$0xff]
          %v529 = vld [vmem:[%s441 + $0x10] sm:$0xff]
          %v530 = vld [vmem:[%s441 + $0x18] sm:$0xff]
          %v531 = vld [vmem:[%s441 + $0x20] sm:$0xff]
          %v532 = vld [vmem:[%s441 + $0x28] sm:$0xff]
          %v533 = vld [vmem:[%s441 + $0x30] sm:$0xff]
          %v534 = vld [vmem:[%s441 + $0x38] sm:$0xff]
          %v535 = vld [vmem:[%s441 + $0x40] sm:$0xff]
          %v536 = vld [vmem:[%s441 + $0x48] sm:$0xff]
          %v537 = vld [vmem:[%s441 + $0x50] sm:$0xff]
          %v538 = vld [vmem:[%s441 + $0x58] sm:$0xff]
          %v539 = vld [vmem:[%s441 + $0x60] sm:$0xff]
          %v540 = vld [vmem:[%s441 + $0x68] sm:$0xff]
          %v541 = vld [vmem:[%s441 + $0x70] sm:$0xff]
          %v542 = vld [vmem:[%s441 + $0x78] sm:$0xff]
          %v543 = vld [vmem:[%s7] sm:$0xff]
          %v544 = vld [vmem:[%s7 + $0x8] sm:$0xff]
          %v545 = vld [vmem:[%s8] sm:$0x1]
          %v547 = vperm.slane %v545, 0
          %v550 = vsel %vm481, %v527, 0
          %v553 = vsel %vm481, %v528, 0
          %v556 = vsel %vm481, %v529, 0
          %v559 = vsel %vm481, %v530, 0
          %v562 = vsel %vm481, %v531, 0
          %v565 = vsel %vm481, %v532, 0
          %v568 = vsel %vm481, %v533, 0
          %v571 = vsel %vm481, %v534, 0
          %v574 = vsel %vm481, %v535, 0
          %v577 = vsel %vm481, %v536, 0
          %v580 = vsel %vm481, %v537, 0
          %v583 = vsel %vm481, %v538, 0
          %v586 = vsel %vm481, %v539, 0
          %v589 = vsel %vm481, %v540, 0
          %v592 = vsel %vm481, %v541, 0
          %v595 = vsel %vm481, %v542, 0
          %597 = vmatpush.msra.mxu0 0.0
          %598 = vmatpush.msra.mxu0 0.0
          %599 = vmatpush.msra.mxu0 0.0
          %600 = vmatpush.msra.mxu0 0.0
          %601 = vmatpush.msra.mxu0 0.0
          %602 = vmatpush.msra.mxu0 0.0
          %603 = vmatpush.msra.mxu0 0.0
          %604 = vmatpush.msra.mxu0 0.0
          %605 = vmatpush.msra.mxu0 0.0
          %606 = vmatpush.msra.mxu0 0.0
          %607 = vmatpush.msra.mxu0 0.0
          %608 = vmatpush.msra.mxu0 0.0
          %609 = vmatpush.msra.mxu0 0.0
          %610 = vmatpush.msra.mxu0 0.0
          %611 = vmatpush.msra.mxu0 %v544
          %612 = vmatpush.msra.mxu0 %v543
          %613 = vmatmul.f32.gmra.mxu0 %v550
          %v614 = vpop.f32.mrf.mxu0
          %v615 = vadd.f32 %v547, %v614
          %616 = vmatmul.f32.gmra.mxu0 %v553
          %v617 = vpop.f32.mrf.mxu0
          %v618 = vadd.f32 %v547, %v617
          %619 = vmatmul.f32.gmra.mxu0 %v556
          %v620 = vpop.f32.mrf.mxu0
          %v621 = vadd.f32 %v547, %v620
          %622 = vmatmul.f32.gmra.mxu0 %v559
          %v623 = vpop.f32.mrf.mxu0
          %v624 = vadd.f32 %v547, %v623
          %625 = vmatmul.f32.gmra.mxu0 %v562
          %v626 = vpop.f32.mrf.mxu0
          %v627 = vadd.f32 %v547, %v626
          %628 = vmatmul.f32.gmra.mxu0 %v565
          %v629 = vpop.f32.mrf.mxu0
          %v630 = vadd.f32 %v547, %v629
          %631 = vmatmul.f32.gmra.mxu0 %v568
          %v632 = vpop.f32.mrf.mxu0
          %v633 = vadd.f32 %v547, %v632
          %634 = vmatmul.f32.gmra.mxu0 %v571
          %v635 = vpop.f32.mrf.mxu0
          %v636 = vadd.f32 %v547, %v635
          %637 = vmatmul.f32.gmra.mxu0 %v574
          %v638 = vpop.f32.mrf.mxu0
          %v639 = vadd.f32 %v547, %v638
          %640 = vmatmul.f32.gmra.mxu0 %v577
          %v641 = vpop.f32.mrf.mxu0
          %v642 = vadd.f32 %v547, %v641
          %643 = vmatmul.f32.gmra.mxu0 %v580
          %v644 = vpop.f32.mrf.mxu0
          %v645 = vadd.f32 %v547, %v644
          %646 = vmatmul.f32.gmra.mxu0 %v583
          %v647 = vpop.f32.mrf.mxu0
          %v648 = vadd.f32 %v547, %v647
          %649 = vmatmul.f32.gmra.mxu0 %v586
          %v650 = vpop.f32.mrf.mxu0
          %v651 = vadd.f32 %v547, %v650
          %652 = vmatmul.f32.gmra.mxu0 %v589
          %v653 = vpop.f32.mrf.mxu0
          %v654 = vadd.f32 %v547, %v653
          %655 = vmatmul.f32.gmra.mxu0 %v592
          %v656 = vpop.f32.mrf.mxu0
          %v657 = vadd.f32 %v547, %v656
          %658 = vmatmul.f32.gmra.mxu0 %v595
          %v659 = vpop.f32.mrf.mxu0
          %v660 = vadd.f32 %v547, %v659
          %661 = vdwg.mxu0
          %vm662 = vcmask 261120
          %663 = vst.msk [vmem:[#allocation3] sm:$0xff] %vm662, %v615
          %664 = vst.msk [vmem:[#allocation3 + $0x8] sm:$0xff] %vm662, %v618
          %665 = vst.msk [vmem:[#allocation3 + $0x10] sm:$0xff] %vm662, %v621
          %666 = vst.msk [vmem:[#allocation3 + $0x18] sm:$0xff] %vm662, %v624
          %667 = vst.msk [vmem:[#allocation3 + $0x20] sm:$0xff] %vm662, %v627
          %668 = vst.msk [vmem:[#allocation3 + $0x28] sm:$0xff] %vm662, %v630
          %669 = vst.msk [vmem:[#allocation3 + $0x30] sm:$0xff] %vm662, %v633
          %670 = vst.msk [vmem:[#allocation3 + $0x38] sm:$0xff] %vm662, %v636
          %671 = vst.msk [vmem:[#allocation3 + $0x40] sm:$0xff] %vm662, %v639
          %672 = vst.msk [vmem:[#allocation3 + $0x48] sm:$0xff] %vm662, %v642
          %673 = vst.msk [vmem:[#allocation3 + $0x50] sm:$0xff] %vm662, %v645
          %674 = vst.msk [vmem:[#allocation3 + $0x58] sm:$0xff] %vm662, %v648
          %675 = vst.msk [vmem:[#allocation3 + $0x60] sm:$0xff] %vm662, %v651
          %676 = vst.msk [vmem:[#allocation3 + $0x68] sm:$0xff] %vm662, %v654
          %677 = vst.msk [vmem:[#allocation3 + $0x70] sm:$0xff] %vm662, %v657
          %678 = vst.msk [vmem:[#allocation3 + $0x78] sm:$0xff] %vm662, %v660
        $region68: #{tpu_custom_call.1} parent=63 // pred_fallthru
          _
        %v679 = vld [vmem:[%s436] sm:$0xff]
        %v680 = vld [vmem:[%s3] sm:$0xff]
        %v681 = vld [vmem:[%s3 + $0x8] sm:$0xff]
        %v682 = vld [vmem:[%s3 + $0x10] sm:$0xff]
        %v683 = vld [vmem:[%s3 + $0x18] sm:$0xff]
        %v684 = vld [vmem:[%s4] sm:$0x1]
        %v686 = vperm.slane %v684, 0
        %vm688 = vcmask 261120
        %v690 = vsel %vm688, %v679, 0
        %692 = vmatpush.msra.mxu0 0.0
        %693 = vmatpush.msra.mxu0 0.0
        %694 = vmatpush.msra.mxu0 0.0
        %695 = vmatpush.msra.mxu0 0.0
        %696 = vmatpush.msra.mxu0 0.0
        %697 = vmatpush.msra.mxu0 0.0
        %698 = vmatpush.msra.mxu0 0.0
        %699 = vmatpush.msra.mxu0 0.0
        %700 = vmatpush.msra.mxu0 0.0
        %701 = vmatpush.msra.mxu0 0.0
        %702 = vmatpush.msra.mxu0 0.0
        %703 = vmatpush.msra.mxu0 0.0
        %704 = vmatpush.msra.mxu0 %v683
        %705 = vmatpush.msra.mxu0 %v682
        %706 = vmatpush.msra.mxu0 %v681
        %707 = vmatpush.msra.mxu0 %v680
        %708 = vmatmul.f32.gmra.mxu0 %v690
        %v709 = vpop.f32.mrf.mxu0
        %v710 = vadd.f32 %v686, %v709
        %711 = vdwg.mxu0
        %v712 = vmul.f32 %v710, 0.35355338
        %v713 = vlaneseq
        %v714 = vand.u32 %v713, 127
        %vm715 = vcmp.lt.s32.totalorder %v714, 8
        %v716 = vsel %vm715, 0.0, -1e+30
        %v717 = vld [vmem:[#allocation2] sm:$0xff]
        %v718 = vld [vmem:[#allocation3] sm:$0xff]
        %v719 = vld [vmem:[#allocation3 + $0x8] sm:$0xff]
        %v720 = vld [vmem:[#allocation3 + $0x10] sm:$0xff]
        %v721 = vld [vmem:[#allocation3 + $0x18] sm:$0xff]
        %v722 = vld [vmem:[#allocation3 + $0x20] sm:$0xff]
        %v723 = vld [vmem:[#allocation3 + $0x28] sm:$0xff]
        %v724 = vld [vmem:[#allocation3 + $0x30] sm:$0xff]
        %v725 = vld [vmem:[#allocation3 + $0x38] sm:$0xff]
        %v726 = vld [vmem:[#allocation3 + $0x40] sm:$0xff]
        %v727 = vld [vmem:[#allocation3 + $0x48] sm:$0xff]
        %v728 = vld [vmem:[#allocation3 + $0x50] sm:$0xff]
        %v729 = vld [vmem:[#allocation3 + $0x58] sm:$0xff]
        %v730 = vld [vmem:[#allocation3 + $0x60] sm:$0xff]
        %v731 = vld [vmem:[#allocation3 + $0x68] sm:$0xff]
        %v732 = vld [vmem:[#allocation3 + $0x70] sm:$0xff]
        %v733 = vld [vmem:[#allocation3 + $0x78] sm:$0xff]
        %vm734 = vcmask 64512
        %v736 = vsel %vm734, %v712, 0
        %738 = vmatpush.msra.mxu0 0.0
        %739 = vmatpush.msra.mxu0 0.0
        %740 = vmatpush.msra.mxu0 0.0
        %741 = vmatpush.msra.mxu0 0.0
        %742 = vmatpush.msra.mxu0 0.0
        %743 = vmatpush.msra.mxu0 0.0
        %744 = vmatpush.msra.mxu0 0.0
        %745 = vmatpush.msra.mxu0 0.0
        %746 = vmatpush.msra.mxu0 0.0
        %747 = vmatpush.msra.mxu0 0.0
        %748 = vmatpush.msra.mxu0 0.0
        %749 = vmatpush.msra.mxu0 0.0
        %750 = vmatpush.msra.mxu0 0.0
        %751 = vmatpush.msra.mxu0 0.0
        %752 = vmatpush.msra.mxu0 0.0
        %753 = vmatpush.msra.mxu0 %v717
        %754 = vmatmul.f32.gmra.mxu0 %v736
        %v755 = vpop.f32.mrf.mxu0
        %v756 = vadd.f32 %v716, %v755
        %757 = vdwg.mxu0
        %758 = vmax.xlane.f32.xlu0 %v756
        %v759 = vpop.xlane.xlu0 %758
        %v760 = vsub.f32 %v756, %v759
        %v761 = vmul.f32 %v760, 1.442695
        %v762 = vpow.pop %v761
        %763 = vadd.xlane.f32.xlu0 %v762
        %v764 = vpop.xlane.xlu0 %763
        %765 = vmatpush.msra.mxu0 %v733
        %766 = vmatpush.msra.mxu0 %v732
        %767 = vmatpush.msra.mxu0 %v731
        %768 = vmatpush.msra.mxu0 %v730
        %769 = vmatpush.msra.mxu0 %v729
        %770 = vmatpush.msra.mxu0 %v728
        %771 = vmatpush.msra.mxu0 %v727
        %772 = vmatpush.msra.mxu0 %v726
        %773 = vmatpush.msra.mxu0 %v725
        %774 = vmatpush.msra.mxu0 %v724
        %775 = vmatpush.msra.mxu0 %v723
        %776 = vmatpush.msra.mxu0 %v722
        %777 = vmatpush.msra.mxu0 %v721
        %778 = vmatpush.msra.mxu0 %v720
        %779 = vmatpush.msra.mxu0 %v719
        %780 = vmatpush.msra.mxu0 %v718
        %781 = vmatmul.f32.gmra.mxu0 %v762
        %v782 = vpop.f32.mrf.mxu0
        %v783 = vadd.f32 0.0, %v782
        %784 = vdwg.mxu0
        %v785 = vrcp.pop %v764
        %v786 = vmul.f32 %v783, %v785
        %787 = vst.msk [vmem:[#allocation4] sm:$0xff] %vm734, %v786
        %v788 = vld [vmem:[#allocation2 + $0x8] sm:$0xff]
        %v789 = vld [vmem:[#allocation3] sm:$0xff]
        %v790 = vld [vmem:[#allocation3 + $0x8] sm:$0xff]
        %v791 = vld [vmem:[#allocation3 + $0x10] sm:$0xff]
        %v792 = vld [vmem:[#allocation3 + $0x18] sm:$0xff]
        %v793 = vld [vmem:[#allocation3 + $0x20] sm:$0xff]
        %v794 = vld [vmem:[#allocation3 + $0x28] sm:$0xff]
        %v795 = vld [vmem:[#allocation3 + $0x30] sm:$0xff]
        %v796 = vld [vmem:[#allocation3 + $0x38] sm:$0xff]
        %v797 = vld [vmem:[#allocation3 + $0x40] sm:$0xff]
        %v798 = vld [vmem:[#allocation3 + $0x48] sm:$0xff]
        %v799 = vld [vmem:[#allocation3 + $0x50] sm:$0xff]
        %v800 = vld [vmem:[#allocation3 + $0x58] sm:$0xff]
        %v801 = vld [vmem:[#allocation3 + $0x60] sm:$0xff]
        %v802 = vld [vmem:[#allocation3 + $0x68] sm:$0xff]
        %v803 = vld [vmem:[#allocation3 + $0x70] sm:$0xff]
        %v804 = vld [vmem:[#allocation3 + $0x78] sm:$0xff]
        %805 = vrot.lane.b32.xlu0 %v712, 120
        %v806 = vpop.permute.xlu0 %805
        %v807 = vsel %vm734, %v806, 0
        %809 = vmatpush.msra.mxu0 0.0
        %810 = vmatpush.msra.mxu0 0.0
        %811 = vmatpush.msra.mxu0 0.0
        %812 = vmatpush.msra.mxu0 0.0
        %813 = vmatpush.msra.mxu0 0.0
        %814 = vmatpush.msra.mxu0 0.0
        %815 = vmatpush.msra.mxu0 0.0
        %816 = vmatpush.msra.mxu0 0.0
        %817 = vmatpush.msra.mxu0 0.0
        %818 = vmatpush.msra.mxu0 0.0
        %819 = vmatpush.msra.mxu0 0.0
        %820 = vmatpush.msra.mxu0 0.0
        %821 = vmatpush.msra.mxu0 0.0
        %822 = vmatpush.msra.mxu0 0.0
        %823 = vmatpush.msra.mxu0 0.0
        %824 = vmatpush.msra.mxu0 %v788
        %825 = vmatmul.f32.gmra.mxu0 %v807
        %v826 = vpop.f32.mrf.mxu0
        %v827 = vadd.f32 %v716, %v826
        %828 = vdwg.mxu0
        %829 = vmax.xlane.f32.xlu0 %v827
        %v830 = vpop.xlane.xlu0 %829
        %v831 = vsub.f32 %v827, %v830
        %v832 = vmul.f32 %v831, 1.442695
        %v833 = vpow.pop %v832
        %834 = vadd.xlane.f32.xlu0 %v833
        %v835 = vpop.xlane.xlu0 %834
        %852 = vrot.lane.b32.xlu0 %v789, 120
        %v853 = vpop.permute.xlu0 %852
        %854 = vrot.lane.b32.xlu0 %v790, 120
        %v855 = vpop.permute.xlu0 %854
        %856 = vrot.lane.b32.xlu0 %v791, 120
        %v857 = vpop.permute.xlu0 %856
        %858 = vrot.lane.b32.xlu0 %v792, 120
        %v859 = vpop.permute.xlu0 %858
        %860 = vrot.lane.b32.xlu0 %v793, 120
        %v861 = vpop.permute.xlu0 %860
        %862 = vrot.lane.b32.xlu0 %v794, 120
        %v863 = vpop.permute.xlu0 %862
        %864 = vrot.lane.b32.xlu0 %v795, 120
        %v865 = vpop.permute.xlu0 %864
        %866 = vrot.lane.b32.xlu0 %v796, 120
        %v867 = vpop.permute.xlu0 %866
        %868 = vrot.lane.b32.xlu0 %v797, 120
        %v869 = vpop.permute.xlu0 %868
        %870 = vrot.lane.b32.xlu0 %v798, 120
        %v871 = vpop.permute.xlu0 %870
        %872 = vrot.lane.b32.xlu0 %v799, 120
        %v873 = vpop.permute.xlu0 %872
        %874 = vrot.lane.b32.xlu0 %v800, 120
        %v875 = vpop.permute.xlu0 %874
        %876 = vrot.lane.b32.xlu0 %v801, 120
        %v877 = vpop.permute.xlu0 %876
        %878 = vrot.lane.b32.xlu0 %v802, 120
        %v879 = vpop.permute.xlu0 %878
        %880 = vrot.lane.b32.xlu0 %v803, 120
        %v881 = vpop.permute.xlu0 %880
        %882 = vrot.lane.b32.xlu0 %v804, 120
        %v883 = vpop.permute.xlu0 %882
        %900 = vmatpush.msra.mxu0 %v883
        %901 = vmatpush.msra.mxu0 %v881
        %902 = vmatpush.msra.mxu0 %v879
        %903 = vmatpush.msra.mxu0 %v877
        %904 = vmatpush.msra.mxu0 %v875
        %905 = vmatpush.msra.mxu0 %v873
        %906 = vmatpush.msra.mxu0 %v871
        %907 = vmatpush.msra.mxu0 %v869
        %908 = vmatpush.msra.mxu0 %v867
        %909 = vmatpush.msra.mxu0 %v865
        %910 = vmatpush.msra.mxu0 %v863
        %911 = vmatpush.msra.mxu0 %v861
        %912 = vmatpush.msra.mxu0 %v859
        %913 = vmatpush.msra.mxu0 %v857
        %914 = vmatpush.msra.mxu0 %v855
        %915 = vmatpush.msra.mxu0 %v853
        %916 = vmatmul.f32.gmra.mxu0 %v833
        %v917 = vpop.f32.mrf.mxu0
        %v918 = vadd.f32 0.0, %v917
        %919 = vdwg.mxu0
        %v920 = vrcp.pop %v835
        %v921 = vmul.f32 %v918, %v920
        %923 = vrot.lane.b32.xlu0 %v921, 8
        %v924 = vpop.permute.xlu0 %923
        %vm926 = vcmask 130112
        %927 = vst.msk [vmem:[#allocation4] sm:$0xff] %vm926, %v924
        %v928 = vld [vmem:[#allocation2 + $0x10] sm:$0xff]
        %v929 = vld [vmem:[#allocation3] sm:$0xff]
        %v930 = vld [vmem:[#allocation3 + $0x8] sm:$0xff]
        %v931 = vld [vmem:[#allocation3 + $0x10] sm:$0xff]
        %v932 = vld [vmem:[#allocation3 + $0x18] sm:$0xff]
        %v933 = vld [vmem:[#allocation3 + $0x20] sm:$0xff]
        %v934 = vld [vmem:[#allocation3 + $0x28] sm:$0xff]
        %v935 = vld [vmem:[#allocation3 + $0x30] sm:$0xff]
        %v936 = vld [vmem:[#allocation3 + $0x38] sm:$0xff]
        %v937 = vld [vmem:[#allocation3 + $0x40] sm:$0xff]
        %v938 = vld [vmem:[#allocation3 + $0x48] sm:$0xff]
        %v939 = vld [vmem:[#allocation3 + $0x50] sm:$0xff]
        %v940 = vld [vmem:[#allocation3 + $0x58] sm:$0xff]
        %v941 = vld [vmem:[#allocation3 + $0x60] sm:$0xff]
        %v942 = vld [vmem:[#allocation3 + $0x68] sm:$0xff]
        %v943 = vld [vmem:[#allocation3 + $0x70] sm:$0xff]
        %v944 = vld [vmem:[#allocation3 + $0x78] sm:$0xff]
        %945 = vrot.lane.b32.xlu0 %v712, 112
        %v946 = vpop.permute.xlu0 %945
        %v947 = vsel %vm734, %v946, 0
        %949 = vmatpush.msra.mxu0 0.0
        %950 = vmatpush.msra.mxu0 0.0
        %951 = vmatpush.msra.mxu0 0.0
        %952 = vmatpush.msra.mxu0 0.0
        %953 = vmatpush.msra.mxu0 0.0
        %954 = vmatpush.msra.mxu0 0.0
        %955 = vmatpush.msra.mxu0 0.0
        %956 = vmatpush.msra.mxu0 0.0
        %957 = vmatpush.msra.mxu0 0.0
        %958 = vmatpush.msra.mxu0 0.0
        %959 = vmatpush.msra.mxu0 0.0
        %960 = vmatpush.msra.mxu0 0.0
        %961 = vmatpush.msra.mxu0 0.0
        %962 = vmatpush.msra.mxu0 0.0
        %963 = vmatpush.msra.mxu0 0.0
        %964 = vmatpush.msra.mxu0 %v928
        %965 = vmatmul.f32.gmra.mxu0 %v947
        %v966 = vpop.f32.mrf.mxu0
        %v967 = vadd.f32 %v716, %v966
        %968 = vdwg.mxu0
        %969 = vmax.xlane.f32.xlu0 %v967
        %v970 = vpop.xlane.xlu0 %969
        %v971 = vsub.f32 %v967, %v970
        %v972 = vmul.f32 %v971, 1.442695
        %v973 = vpow.pop %v972
        %974 = vadd.xlane.f32.xlu0 %v973
        %v975 = vpop.xlane.xlu0 %974
        %992 = vrot.lane.b32.xlu0 %v929, 112
        %v993 = vpop.permute.xlu0 %992
        %994 = vrot.lane.b32.xlu0 %v930, 112
        %v995 = vpop.permute.xlu0 %994
        %996 = vrot.lane.b32.xlu0 %v931, 112
        %v997 = vpop.permute.xlu0 %996
        %998 = vrot.lane.b32.xlu0 %v932, 112
        %v999 = vpop.permute.xlu0 %998
        %1000 = vrot.lane.b32.xlu0 %v933, 112
        %v1001 = vpop.permute.xlu0 %1000
        %1002 = vrot.lane.b32.xlu0 %v934, 112
        %v1003 = vpop.permute.xlu0 %1002
        %1004 = vrot.lane.b32.xlu0 %v935, 112
        %v1005 = vpop.permute.xlu0 %1004
        %1006 = vrot.lane.b32.xlu0 %v936, 112
        %v1007 = vpop.permute.xlu0 %1006
        %1008 = vrot.lane.b32.xlu0 %v937, 112
        %v1009 = vpop.permute.xlu0 %1008
        %1010 = vrot.lane.b32.xlu0 %v938, 112
        %v1011 = vpop.permute.xlu0 %1010
        %1012 = vrot.lane.b32.xlu0 %v939, 112
        %v1013 = vpop.permute.xlu0 %1012
        %1014 = vrot.lane.b32.xlu0 %v940, 112
        %v1015 = vpop.permute.xlu0 %1014
        %1016 = vrot.lane.b32.xlu0 %v941, 112
        %v1017 = vpop.permute.xlu0 %1016
        %1018 = vrot.lane.b32.xlu0 %v942, 112
        %v1019 = vpop.permute.xlu0 %1018
        %1020 = vrot.lane.b32.xlu0 %v943, 112
        %v1021 = vpop.permute.xlu0 %1020
        %1022 = vrot.lane.b32.xlu0 %v944, 112
        %v1023 = vpop.permute.xlu0 %1022
        %1040 = vmatpush.msra.mxu0 %v1023
        %1041 = vmatpush.msra.mxu0 %v1021
        %1042 = vmatpush.msra.mxu0 %v1019
        %1043 = vmatpush.msra.mxu0 %v1017
        %1044 = vmatpush.msra.mxu0 %v1015
        %1045 = vmatpush.msra.mxu0 %v1013
        %1046 = vmatpush.msra.mxu0 %v1011
        %1047 = vmatpush.msra.mxu0 %v1009
        %1048 = vmatpush.msra.mxu0 %v1007
        %1049 = vmatpush.msra.mxu0 %v1005
        %1050 = vmatpush.msra.mxu0 %v1003
        %1051 = vmatpush.msra.mxu0 %v1001
        %1052 = vmatpush.msra.mxu0 %v999
        %1053 = vmatpush.msra.mxu0 %v997
        %1054 = vmatpush.msra.mxu0 %v995
        %1055 = vmatpush.msra.mxu0 %v993
        %1056 = vmatmul.f32.gmra.mxu0 %v973
        %v1057 = vpop.f32.mrf.mxu0
        %v1058 = vadd.f32 0.0, %v1057
        %1059 = vdwg.mxu0
        %v1060 = vrcp.pop %v975
        %v1061 = vmul.f32 %v1058, %v1060
        %1063 = vrot.lane.b32.xlu0 %v1061, 16
        %v1064 = vpop.permute.xlu0 %1063
        %vm1066 = vcmask 195712
        %1067 = vst.msk [vmem:[#allocation4] sm:$0xff] %vm1066, %v1064
        %v1068 = vld [vmem:[#allocation2 + $0x18] sm:$0xff]
        %v1069 = vld [vmem:[#allocation3] sm:$0xff]
        %v1070 = vld [vmem:[#allocation3 + $0x8] sm:$0xff]
        %v1071 = vld [vmem:[#allocation3 + $0x10] sm:$0xff]
        %v1072 = vld [vmem:[#allocation3 + $0x18] sm:$0xff]
        %v1073 = vld [vmem:[#allocation3 + $0x20] sm:$0xff]
        %v1074 = vld [vmem:[#allocation3 + $0x28] sm:$0xff]
        %v1075 = vld [vmem:[#allocation3 + $0x30] sm:$0xff]
        %v1076 = vld [vmem:[#allocation3 + $0x38] sm:$0xff]
        %v1077 = vld [vmem:[#allocation3 + $0x40] sm:$0xff]
        %v1078 = vld [vmem:[#allocation3 + $0x48] sm:$0xff]
        %v1079 = vld [vmem:[#allocation3 + $0x50] sm:$0xff]
        %v1080 = vld [vmem:[#allocation3 + $0x58] sm:$0xff]
        %v1081 = vld [vmem:[#allocation3 + $0x60] sm:$0xff]
        %v1082 = vld [vmem:[#allocation3 + $0x68] sm:$0xff]
        %v1083 = vld [vmem:[#allocation3 + $0x70] sm:$0xff]
        %v1084 = vld [vmem:[#allocation3 + $0x78] sm:$0xff]
        %1085 = vrot.lane.b32.xlu0 %v712, 104
        %v1086 = vpop.permute.xlu0 %1085
        %v1087 = vsel %vm734, %v1086, 0
        %1089 = vmatpush.msra.mxu0 0.0
        %1090 = vmatpush.msra.mxu0 0.0
        %1091 = vmatpush.msra.mxu0 0.0
        %1092 = vmatpush.msra.mxu0 0.0
        %1093 = vmatpush.msra.mxu0 0.0
        %1094 = vmatpush.msra.mxu0 0.0
        %1095 = vmatpush.msra.mxu0 0.0
        %1096 = vmatpush.msra.mxu0 0.0
        %1097 = vmatpush.msra.mxu0 0.0
        %1098 = vmatpush.msra.mxu0 0.0
        %1099 = vmatpush.msra.mxu0 0.0
        %1100 = vmatpush.msra.mxu0 0.0
        %1101 = vmatpush.msra.mxu0 0.0
        %1102 = vmatpush.msra.mxu0 0.0
        %1103 = vmatpush.msra.mxu0 0.0
        %1104 = vmatpush.msra.mxu0 %v1068
        %1105 = vmatmul.f32.gmra.mxu0 %v1087
        %v1106 = vpop.f32.mrf.mxu0
        %v1107 = vadd.f32 %v716, %v1106
        %1108 = vdwg.mxu0
        %1109 = vmax.xlane.f32.xlu0 %v1107
        %v1110 = vpop.xlane.xlu0 %1109
        %v1111 = vsub.f32 %v1107, %v1110
        %v1112 = vmul.f32 %v1111, 1.442695
        %v1113 = vpow.pop %v1112
        %1114 = vadd.xlane.f32.xlu0 %v1113
        %v1115 = vpop.xlane.xlu0 %1114
        %1132 = vrot.lane.b32.xlu0 %v1069, 104
        %v1133 = vpop.permute.xlu0 %1132
        %1134 = vrot.lane.b32.xlu0 %v1070, 104
        %v1135 = vpop.permute.xlu0 %1134
        %1136 = vrot.lane.b32.xlu0 %v1071, 104
        %v1137 = vpop.permute.xlu0 %1136
        %1138 = vrot.lane.b32.xlu0 %v1072, 104
        %v1139 = vpop.permute.xlu0 %1138
        %1140 = vrot.lane.b32.xlu0 %v1073, 104
        %v1141 = vpop.permute.xlu0 %1140
        %1142 = vrot.lane.b32.xlu0 %v1074, 104
        %v1143 = vpop.permute.xlu0 %1142
        %1144 = vrot.lane.b32.xlu0 %v1075, 104
        %v1145 = vpop.permute.xlu0 %1144
        %1146 = vrot.lane.b32.xlu0 %v1076, 104
        %v1147 = vpop.permute.xlu0 %1146
        %1148 = vrot.lane.b32.xlu0 %v1077, 104
        %v1149 = vpop.permute.xlu0 %1148
        %1150 = vrot.lane.b32.xlu0 %v1078, 104
        %v1151 = vpop.permute.xlu0 %1150
        %1152 = vrot.lane.b32.xlu0 %v1079, 104
        %v1153 = vpop.permute.xlu0 %1152
        %1154 = vrot.lane.b32.xlu0 %v1080, 104
        %v1155 = vpop.permute.xlu0 %1154
        %1156 = vrot.lane.b32.xlu0 %v1081, 104
        %v1157 = vpop.permute.xlu0 %1156
        %1158 = vrot.lane.b32.xlu0 %v1082, 104
        %v1159 = vpop.permute.xlu0 %1158
        %1160 = vrot.lane.b32.xlu0 %v1083, 104
        %v1161 = vpop.permute.xlu0 %1160
        %1162 = vrot.lane.b32.xlu0 %v1084, 104
        %v1163 = vpop.permute.xlu0 %1162
        %1180 = vmatpush.msra.mxu0 %v1163
        %1181 = vmatpush.msra.mxu0 %v1161
        %1182 = vmatpush.msra.mxu0 %v1159
        %1183 = vmatpush.msra.mxu0 %v1157
        %1184 = vmatpush.msra.mxu0 %v1155
        %1185 = vmatpush.msra.mxu0 %v1153
        %1186 = vmatpush.msra.mxu0 %v1151
        %1187 = vmatpush.msra.mxu0 %v1149
        %1188 = vmatpush.msra.mxu0 %v1147
        %1189 = vmatpush.msra.mxu0 %v1145
        %1190 = vmatpush.msra.mxu0 %v1143
        %1191 = vmatpush.msra.mxu0 %v1141
        %1192 = vmatpush.msra.mxu0 %v1139
        %1193 = vmatpush.msra.mxu0 %v1137
        %1194 = vmatpush.msra.mxu0 %v1135
        %1195 = vmatpush.msra.mxu0 %v1133
        %1196 = vmatmul.f32.gmra.mxu0 %v1113
        %v1197 = vpop.f32.mrf.mxu0
        %v1198 = vadd.f32 0.0, %v1197
        %1199 = vdwg.mxu0
        %v1200 = vrcp.pop %v1115
        %v1201 = vmul.f32 %v1198, %v1200
        %1203 = vrot.lane.b32.xlu0 %v1201, 24
        %v1204 = vpop.permute.xlu0 %1203
        %vm1206 = vcmask 261312
        %1207 = vst.msk [vmem:[#allocation4] sm:$0xff] %vm1206, %v1204
        %v1208 = vld [vmem:[#allocation4] sm:$0xff]
        %v1209 = vld [vmem:[%s9] sm:$0xff]
        %v1210 = vld [vmem:[%s9 + $0x8] sm:$0xff]
        %v1211 = vld [vmem:[%s9 + $0x10] sm:$0xff]
        %v1212 = vld [vmem:[%s9 + $0x18] sm:$0xff]
        %v1213 = vld [vmem:[%s10] sm:$0x1]
        %v1215 = vperm.slane %v1213, 0
        %v1218 = vsel %vm688, %v1208, 0
        %1220 = vmatpush.msra.mxu0 0.0
        %1221 = vmatpush.msra.mxu0 0.0
        %1222 = vmatpush.msra.mxu0 0.0
        %1223 = vmatpush.msra.mxu0 0.0
        %1224 = vmatpush.msra.mxu0 0.0
        %1225 = vmatpush.msra.mxu0 0.0
        %1226 = vmatpush.msra.mxu0 0.0
        %1227 = vmatpush.msra.mxu0 0.0
        %1228 = vmatpush.msra.mxu0 0.0
        %1229 = vmatpush.msra.mxu0 0.0
        %1230 = vmatpush.msra.mxu0 0.0
        %1231 = vmatpush.msra.mxu0 0.0
        %1232 = vmatpush.msra.mxu0 %v1212
        %1233 = vmatpush.msra.mxu0 %v1211
        %1234 = vmatpush.msra.mxu0 %v1210
        %1235 = vmatpush.msra.mxu0 %v1209
        %1236 = vmatmul.f32.gmra.mxu0 %v1218
        %v1237 = vpop.f32.mrf.mxu0
        %v1238 = vadd.f32 %v1215, %v1237
        %1239 = vdwg.mxu0
        %1240 = vst.msk [vmem:[%s429] sm:$0xff] %vm688, %v1238
        %s1241 = sand.u32 %s295, 1
        %s1242 = scalar_lea.sflag [#allocation6], %s1241
        %s1243 = sand.u32 %s295, 1
        %s1244 = smul.addr %s1243, 8
        %s1245 = scalar_lea.vmem [#allocation5], %s1244
        // Predicated region
        $region69: #{tpu_custom_call.1} parent=63 // pred_check
          %p1246 = pneg %p305
        $region70: #{tpu_custom_call.1} parent=63 // pred_check_branch
          %1248 = sbr.rel (%p1246) target = $region72
        $region71: #{tpu_custom_call.1} parent=63 // pred_region
          %1250 = vsyncadd %s1242, 0
          %s1251 = sadd.s32 %s30, %s29
          %s1252 = smul.addr %s1251, 8
          %s1253 = scalar_lea.hbm %s11, %s1252
          %s1255 = sshll.u32 %s1245, 4
          %s1256 = int_to_ptr.vmem [resolvable:$true] %s1255
          %s1257 = sshll.u32 %s1253, 4
          %s1258 = int_to_ptr.hbm [resolvable:$true] %s1257
          %1260 = dma.vmem_to_hbm [thread:$0]  %s1256, 128, %s1258, %s1242
        $region72: #{tpu_custom_call.1} parent=63 // pred_fallthru
          _
      $region64: #{tpu_custom_call.1} parent=5 // pred_fallthru
        _
      %p1261 = scmp.le.s32.totalorder 2, %s20
      // Predicated region
      $region73: #{tpu_custom_call.1} parent=5 // pred_check
        %p1262 = pneg %p1261
      $region74: #{tpu_custom_call.1} parent=5 // pred_check_branch
        %1264 = sbr.rel (%p1262) target = $region76
      $region75: #{tpu_custom_call.1} parent=5 // pred_region
        %s1265 = ssub.s32 %s20, 2
        // Predicated region
        $region77: #{tpu_custom_call.1} parent=75 // pred_check
          %p1266 = pneg %p311
        $region78: #{tpu_custom_call.1} parent=75 // pred_check_branch
          %1268 = sbr.rel (%p1266) target = $region80
        $region79: #{tpu_custom_call.1} parent=75 // pred_region
          %s1269 = sand.u32 %s296, 1
          %s1270 = scalar_lea.sflag [#allocation6], %s1269
          %s1271 = sand.u32 %s296, 1
          %s1272 = smul.addr %s1271, 8
          %s1273 = scalar_lea.vmem [#allocation5], %s1272
          %1275 = dma.done %s1270, 128
        $region80: #{tpu_custom_call.1} parent=75 // pred_fallthru
          _
      $region76: #{tpu_custom_call.1} parent=5 // pred_fallthru
        _
    $region6: #{tpu_custom_call.1} parent=1 // loop_footer
      %s24 = sadd.s32 1, %s20
    $region7: #{tpu_custom_call.1} parent=1 // loop_footer_branch
      %19 = sbr.rel target = $region3
    $region8: #{tpu_custom_call.1} parent=1 // loop_exit
      _
    %1276 = vsyncpa [#allocation6], 1
    %s1277 = scalar_lea.sflag [#allocation6], 1
    %1278 = vsyncpa %s1277, 1

</llo_original>
